<compile_context>
chip_gen: v5e
topology: v5e:2x2
jax: 0.10.0
libtpu: 0.0.40
codegen_flags: <defaults>
</compile_context>

<pallas_src>
import functools

import jax
import jax.numpy as jnp
from jax.experimental import pallas as pl
from jax.experimental.pallas import tpu as pltpu


# ------------------------- fused GRU + Linear kernel ------------------------
def gru_chunk_kernel(gx_ref, w_h_ref, b_h_ref, w_lin_ref, b_lin_ref, h0_ref,
                     out_ref, hT_ref, h_scratch, *, unroll):
    """One sequence chunk of the GRU recurrence + fused output projection.

    gx_ref : (T, Bb, 3H)  precomputed  W_i x_t + b_i  for this chunk / batch shard
    w_h_ref: (H, 3H)      fused [W_hr | W_hz | W_hn]
    b_h_ref: (1, 3H)      fused [b_hr | b_hz | b_hn]
    w_lin  : (H, V), b_lin: (1, V)
    h0_ref : (Bb, H)      initial hidden state for this batch shard
    out_ref: (T, Bb, V)   per-step linear output
    hT_ref : (Bb, H)      final hidden state (written on last chunk only)
    """
    c = pl.program_id(1)  # sequence-chunk index (recurrence axis, "arbitrary")

    @pl.when(c == 0)
    def _():
        h_scratch[...] = h0_ref[...]

    H = h_scratch.shape[-1]
    T = gx_ref.shape[0]

    # Hoist weight / bias loads out of the time loop.
    w_h = w_h_ref[...]
    b_h = b_h_ref[...]
    w_lin = w_lin_ref[...]
    b_lin = b_lin_ref[...]

    def step(t, h):
        gx = gx_ref[t]                                             # (Bb, 3H)
        gh = jnp.dot(h, w_h, preferred_element_type=jnp.float32) + b_h
        # PyTorch nn.GRU equations (r applied inside tanh to the hidden term):
        r = jax.nn.sigmoid(gx[:, :H] + gh[:, :H])
        z = jax.nn.sigmoid(gx[:, H:2 * H] + gh[:, H:2 * H])
        n = jnp.tanh(gx[:, 2 * H:] + r * gh[:, 2 * H:])
        h_new = n + z * (h - n)                                    # == (1-z)*n + z*h
        # Fused output projection: lane-dense (Bb, V) store per step.
        out_ref[t] = (jnp.dot(h_new, w_lin, preferred_element_type=jnp.float32)
                      + b_lin)
        return h_new

    h_final = jax.lax.fori_loop(0, T, step, h_scratch[...], unroll=unroll)
    h_scratch[...] = h_final

    @pl.when(c == pl.num_programs(1) - 1)
    def _():
        hT_ref[...] = h_final


def _largest_divisor_leq(n, cap):
    for d in range(min(n, cap), 0, -1):
        if n % d == 0:
            return d
    return 1


def gru_fused_forward(gates_x, w_h, b_h, w_lin, b_lin, h0,
                      *, block_b=None, chunk_s=None):
    """gates_x: (S, B, 3H), h0: (B, H) -> (out (S, B, V), hT (B, H))."""
    S, B, H3 = gates_x.shape
    H = h0.shape[-1]
    V = w_lin.shape[-1]

    if block_b is None:
        block_b = 8 if B % 8 == 0 else B          # sublane-aligned batch shard
    if chunk_s is None:
        chunk_s = _largest_divisor_leq(S, 64)     # bounded VMEM residency (v7x)
    assert B % block_b == 0 and S % chunk_s == 0

    nb = B // block_b
    nc = S // chunk_s
    unroll = chunk_s <= 16                        # short fixed loop -> unroll

    kernel = functools.partial(gru_chunk_kernel, unroll=unroll)

    in_specs = [
        pl.BlockSpec((chunk_s, block_b, H3), lambda b, c: (c, b, 0)),  # gates_x
        pl.BlockSpec((H, H3), lambda b, c: (0, 0)),                    # w_h
        pl.BlockSpec((1, H3), lambda b, c: (0, 0)),                    # b_h
        pl.BlockSpec((H, V), lambda b, c: (0, 0)),                     # w_lin
        pl.BlockSpec((1, V), lambda b, c: (0, 0)),                     # b_lin
        pl.BlockSpec((block_b, H), lambda b, c: (b, 0)),               # h0
    ]
    out_specs = (
        pl.BlockSpec((chunk_s, block_b, V), lambda b, c: (c, b, 0)),   # out
        pl.BlockSpec((block_b, H), lambda b, c: (b, 0)),               # hT
    )

    out, hT = pl.pallas_call(
        kernel,
        out_shape=(jax.ShapeDtypeStruct((S, B, V), jnp.float32),
                   jax.ShapeDtypeStruct((B, H), jnp.float32)),
        grid_spec=pltpu.PrefetchScalarGridSpec(
            num_scalar_prefetch=0,
            grid=(nb, nc),
            in_specs=in_specs,
            out_specs=out_specs,
            scratch_shapes=[pltpu.VMEM((block_b, H), jnp.float32)],
        ),
        compiler_params=pltpu.CompilerParams(
            # batch shards are independent (second TC on v7x);
            # sequence chunks carry the recurrence -> sequential.
            dimension_semantics=("parallel", "arbitrary"),
            vmem_limit_bytes=32 * 1024 * 1024,
        ),
    )(gates_x, w_h, b_h, w_lin, b_lin, h0)
    return out, hT


# ------------------------------ Model wrapper --------------------------------
def my_gru_forward(tokens, params, state):
    """tokens: (B, S) int32, state: (1, B, H) -> (out (S*B, V), new_state)."""
    B, S = tokens.shape
    V = params["w_lin"].shape[-1]

    # F.one_hot(X.T) @ W_i  ==  row gather of the fused input weights.
    # Input biases are folded in here, outside the serial recurrence.
    tok_T = tokens.T                                            # (S, B)
    gates_x = jnp.take(params["w_i"], tok_T, axis=0) + params["b_i"]   # (S,B,3H)

    out_sbv, hT = gru_fused_forward(
        gates_x, params["w_h"], params["b_h"],
        params["w_lin"], params["b_lin"], state[0])
    out = out_sbv.reshape(S * B, V)
    return out, hT[None]                                        # state: (1, B, H)


# ------------------------------- Param init -----------------------------------
def init_params(key, vocab, hidden):
    """Fused-layout params.  Gate order along the 3H axis is [r | z | n]."""
    k = 1.0 / jnp.sqrt(jnp.float32(hidden))
    names_shapes = [
        ("w_i", (vocab, 3 * hidden)),    # fused [W_ir | W_iz | W_in]
        ("w_h", (hidden, 3 * hidden)),   # fused [W_hr | W_hz | W_hn]
        ("b_i", (1, 3 * hidden)),        # fused [b_ir | b_iz | b_in]
        ("b_h", (1, 3 * hidden)),        # fused [b_hr | b_hz | b_hn]
        ("w_lin", (hidden, vocab)),
        ("b_lin", (1, vocab)),
    ]
    params = {}
    keys = jax.random.split(key, len(names_shapes))
    for kk, (name, shape) in zip(keys, names_shapes):
        params[name] = jax.random.uniform(kk, shape, jnp.float32, -k, k)
    return params
# TODO(synk): for large models, store w_h / w_lin / gates_x in bfloat16 with
# f32 accumulation (v6e/v7x MXU); kept f32 here to hold the 1e-4 tolerance.


# --------------------------- Pure-JAX reference -------------------------------
def reference_forward(tokens, params, state):
    vocab = params["w_i"].shape[0]
    H = params["w_h"].shape[0]
    x = jax.nn.one_hot(tokens.T, vocab, dtype=jnp.float32)      # (S, B, vocab)

    def step(h, xt):
        gx = xt @ params["w_i"] + params["b_i"]
        gh = h @ params["w_h"] + params["b_h"]
        r = jax.nn.sigmoid(gx[:, :H] + gh[:, :H])
        z = jax.nn.sigmoid(gx[:, H:2 * H] + gh[:, H:2 * H])
        n = jnp.tanh(gx[:, 2 * H:] + r * gh[:, 2 * H:])
        h_new = (1.0 - z) * n + z * h
        return h_new, h_new

    hT, ys = jax.lax.scan(step, state[0], x)
    out = ys.reshape(-1, H) @ params["w_lin"] + params["b_lin"]
    return out, hT[None]


if __name__ == "__main__":
    # Small but hardware-aligned shapes: B % 8 == 0, H and V % 128 == 0.
    vocab_size = 256
    num_hiddens = 128
    batch = 16
    seq = 16

    key = jax.random.PRNGKey(0)
    k_params, k_tokens = jax.random.split(key)
    params = init_params(k_params, vocab_size, num_hiddens)
    tokens = jax.random.randint(k_tokens, (batch, seq), 0, vocab_size, jnp.int32)
    state = jnp.zeros((1, batch, num_hiddens), jnp.float32)     # init_state

    fwd = jax.jit(lambda t, s: my_gru_forward(t, params, s))
    out, new_state = fwd(tokens, state)
    out = jax.block_until_ready(out)
    new_state = jax.block_until_ready(new_state)

    ref_out, ref_state = reference_forward(tokens, params, state)
    assert out.shape == (seq * batch, vocab_size)
    assert new_state.shape == (1, batch, num_hiddens)
    assert jnp.allclose(out, ref_out, atol=1e-4), "output mismatch vs reference"
    assert jnp.allclose(new_state, ref_state, atol=1e-4), "state mismatch vs reference"

    print("KERNEL_OK")
</pallas_src>

<mosaic_0001>
module attributes {stable_mosaic.version = 11 : i64} {
  func.func @gru_chunk_kernel(%arg0: i32, %arg1: i32, %arg2: memref<16x8x384xf32, #tpu.memory_space<vmem>>, %arg3: memref<128x384xf32, #tpu.memory_space<vmem>>, %arg4: memref<1x384xf32, #tpu.memory_space<vmem>>, %arg5: memref<128x256xf32, #tpu.memory_space<vmem>>, %arg6: memref<1x256xf32, #tpu.memory_space<vmem>>, %arg7: memref<8x128xf32, #tpu.memory_space<vmem>>, %arg8: memref<16x8x256xf32, #tpu.memory_space<vmem>>, %arg9: memref<8x128xf32, #tpu.memory_space<vmem>>, %arg10: memref<8x128xf32, #tpu.memory_space<vmem>>) attributes {dimension_semantics = [#tpu.dimension_semantics<parallel>, #tpu.dimension_semantics<arbitrary>], iteration_bounds = array<i64: 2, 1>, scalar_prefetch = 0 : i64, scratch_operands = 1 : i64, tpu.core_type = #tpu.core_type<tc>, window_params = [{transform_indices = @transform_0, window_bounds = array<i64: 16, 8, 384>}, {pipeline_mode = #tpu.pipeline_mode<synchronous>, transform_indices = @transform_1, window_bounds = array<i64: 128, 384>}, {pipeline_mode = #tpu.pipeline_mode<synchronous>, transform_indices = @transform_2, window_bounds = array<i64: 1, 384>}, {pipeline_mode = #tpu.pipeline_mode<synchronous>, transform_indices = @transform_3, window_bounds = array<i64: 128, 256>}, {pipeline_mode = #tpu.pipeline_mode<synchronous>, transform_indices = @transform_4, window_bounds = array<i64: 1, 256>}, {transform_indices = @transform_5, window_bounds = array<i64: 8, 128>}, {transform_indices = @transform_6, window_bounds = array<i64: 16, 8, 256>}, {transform_indices = @transform_7, window_bounds = array<i64: 8, 128>}]} {
    %c0_i32 = arith.constant 0 : i32
    %0 = arith.cmpi eq, %arg1, %c0_i32 : i32
    %1 = arith.extui %0 : i1 to i32
    %c0_i32_0 = arith.constant 0 : i32
    %2 = arith.cmpi ne, %1, %c0_i32_0 : i32
    scf.if %2 {
      %c0_142 = arith.constant 0 : index
      %c0_143 = arith.constant 0 : index
      %604 = vector.load %arg7[%c0_142, %c0_143] : memref<8x128xf32, #tpu.memory_space<vmem>>, vector<8x128xf32>
      %c0_144 = arith.constant 0 : index
      %c0_145 = arith.constant 0 : index
      %605 = vector.load %arg10[%c0_144, %c0_145] : memref<8x128xf32, #tpu.memory_space<vmem>>, vector<8x128xf32>
      tpu.vector_store %arg10[%c0_144, %c0_145], %604 {strides = array<i32>} : memref<8x128xf32, #tpu.memory_space<vmem>>, vector<8x128xf32>,
    } else {
    }
    %c0 = arith.constant 0 : index
    %c0_1 = arith.constant 0 : index
    %3 = vector.load %arg3[%c0, %c0_1] : memref<128x384xf32, #tpu.memory_space<vmem>>, vector<128x384xf32>
    %c0_2 = arith.constant 0 : index
    %c0_3 = arith.constant 0 : index
    %4 = vector.load %arg4[%c0_2, %c0_3] : memref<1x384xf32, #tpu.memory_space<vmem>>, vector<1x384xf32>
    %c0_4 = arith.constant 0 : index
    %c0_5 = arith.constant 0 : index
    %5 = vector.load %arg5[%c0_4, %c0_5] : memref<128x256xf32, #tpu.memory_space<vmem>>, vector<128x256xf32>
    %c0_6 = arith.constant 0 : index
    %c0_7 = arith.constant 0 : index
    %6 = vector.load %arg6[%c0_6, %c0_7] : memref<1x256xf32, #tpu.memory_space<vmem>>, vector<1x256xf32>
    %c0_8 = arith.constant 0 : index
    %c0_9 = arith.constant 0 : index
    %7 = vector.load %arg10[%c0_8, %c0_9] : memref<8x128xf32, #tpu.memory_space<vmem>>, vector<8x128xf32>
    %c0_i32_10 = arith.constant 0 : i32
    %8 = arith.index_cast %c0_i32_10 : i32 to index
    %c0_11 = arith.constant 0 : index
    %c0_12 = arith.constant 0 : index
    %9 = vector.load %arg2[%8, %c0_11, %c0_12] : memref<16x8x384xf32, #tpu.memory_space<vmem>>, vector<1x8x384xf32>
    %10 = vector.shape_cast %9 : vector<1x8x384xf32> to vector<8x384xf32>
    %cst = arith.constant dense<0.000000e+00> : vector<8x384xf32>
    %11 = tpu.matmul %7, %3, %cst {dimension_numbers = #tpu.dot_dimension_numbers<[1], [0], [0], [1], [0, 0, 1, 1], [], []>} : vector<8x128xf32>, vector<128x384xf32>, vector<8x384xf32> -> vector<8x384xf32>
    %12 = vector.broadcast %4 : vector<1x384xf32> to vector<8x384xf32>
    %13 = arith.addf %11, %12 : vector<8x384xf32>
    %14 = vector.extract_strided_slice %10 {offsets = [0, 0], sizes = [8, 128], strides = [1, 1]} : vector<8x384xf32> to vector<8x128xf32>
    %15 = vector.extract_strided_slice %13 {offsets = [0, 0], sizes = [8, 128], strides = [1, 1]} : vector<8x384xf32> to vector<8x128xf32>
    %16 = arith.addf %14, %15 : vector<8x128xf32>
    %17 = arith.negf %16 : vector<8x128xf32>
    %18 = math.exp %17 : vector<8x128xf32>
    %cst_13 = arith.constant 1.000000e+00 : f32
    %19 = vector.broadcast %cst_13 : f32 to vector<8x128xf32>
    %20 = arith.addf %19, %18 : vector<8x128xf32>
    %21 = arith.divf %19, %20 : vector<8x128xf32>
    %22 = vector.extract_strided_slice %10 {offsets = [0, 128], sizes = [8, 128], strides = [1, 1]} : vector<8x384xf32> to vector<8x128xf32>
    %23 = vector.extract_strided_slice %13 {offsets = [0, 128], sizes = [8, 128], strides = [1, 1]} : vector<8x384xf32> to vector<8x128xf32>
    %24 = arith.addf %22, %23 : vector<8x128xf32>
    %25 = arith.negf %24 : vector<8x128xf32>
    %26 = math.exp %25 : vector<8x128xf32>
    %cst_14 = arith.constant 1.000000e+00 : f32
    %27 = vector.broadcast %cst_14 : f32 to vector<8x128xf32>
    %28 = arith.addf %27, %26 : vector<8x128xf32>
    %29 = arith.divf %27, %28 : vector<8x128xf32>
    %30 = vector.extract_strided_slice %10 {offsets = [0, 256], sizes = [8, 128], strides = [1, 1]} : vector<8x384xf32> to vector<8x128xf32>
    %31 = vector.extract_strided_slice %13 {offsets = [0, 256], sizes = [8, 128], strides = [1, 1]} : vector<8x384xf32> to vector<8x128xf32>
    %32 = arith.mulf %21, %31 : vector<8x128xf32>
    %33 = arith.addf %30, %32 : vector<8x128xf32>
    %34 = math.tanh %33 : vector<8x128xf32>
    %35 = arith.subf %7, %34 : vector<8x128xf32>
    %36 = arith.mulf %29, %35 : vector<8x128xf32>
    %37 = arith.addf %34, %36 : vector<8x128xf32>
    %cst_15 = arith.constant dense<0.000000e+00> : vector<8x256xf32>
    %38 = tpu.matmul %37, %5, %cst_15 {dimension_numbers = #tpu.dot_dimension_numbers<[1], [0], [0], [1], [0, 0, 1, 1], [], []>} : vector<8x128xf32>, vector<128x256xf32>, vector<8x256xf32> -> vector<8x256xf32>
    %39 = vector.broadcast %6 : vector<1x256xf32> to vector<8x256xf32>
    %40 = arith.addf %38, %39 : vector<8x256xf32>
    %41 = arith.index_cast %c0_i32_10 : i32 to index
    %c0_16 = arith.constant 0 : index
    %c0_17 = arith.constant 0 : index
    %42 = vector.load %arg8[%41, %c0_16, %c0_17] : memref<16x8x256xf32, #tpu.memory_space<vmem>>, vector<1x8x256xf32>
    %43 = vector.shape_cast %42 : vector<1x8x256xf32> to vector<8x256xf32>
    %44 = vector.shape_cast %40 : vector<8x256xf32> to vector<1x8x256xf32>
    tpu.vector_store %arg8[%41, %c0_16, %c0_17], %44 {strides = array<i32>} : memref<16x8x256xf32, #tpu.memory_space<vmem>>, vector<1x8x256xf32>,
    %c1_i32 = arith.constant 1 : i32
    %45 = arith.index_cast %c1_i32 : i32 to index
    %c0_18 = arith.constant 0 : index
    %c0_19 = arith.constant 0 : index
    %46 = vector.load %arg2[%45, %c0_18, %c0_19] : memref<16x8x384xf32, #tpu.memory_space<vmem>>, vector<1x8x384xf32>
    %47 = vector.shape_cast %46 : vector<1x8x384xf32> to vector<8x384xf32>
    %cst_20 = arith.constant dense<0.000000e+00> : vector<8x384xf32>
    %48 = tpu.matmul %37, %3, %cst_20 {dimension_numbers = #tpu.dot_dimension_numbers<[1], [0], [0], [1], [0, 0, 1, 1], [], []>} : vector<8x128xf32>, vector<128x384xf32>, vector<8x384xf32> -> vector<8x384xf32>
    %49 = vector.broadcast %4 : vector<1x384xf32> to vector<8x384xf32>
    %50 = arith.addf %48, %49 : vector<8x384xf32>
    %51 = vector.extract_strided_slice %47 {offsets = [0, 0], sizes = [8, 128], strides = [1, 1]} : vector<8x384xf32> to vector<8x128xf32>
    %52 = vector.extract_strided_slice %50 {offsets = [0, 0], sizes = [8, 128], strides = [1, 1]} : vector<8x384xf32> to vector<8x128xf32>
    %53 = arith.addf %51, %52 : vector<8x128xf32>
    %54 = arith.negf %53 : vector<8x128xf32>
    %55 = math.exp %54 : vector<8x128xf32>
    %cst_21 = arith.constant 1.000000e+00 : f32
    %56 = vector.broadcast %cst_21 : f32 to vector<8x128xf32>
    %57 = arith.addf %56, %55 : vector<8x128xf32>
    %58 = arith.divf %56, %57 : vector<8x128xf32>
    %59 = vector.extract_strided_slice %47 {offsets = [0, 128], sizes = [8, 128], strides = [1, 1]} : vector<8x384xf32> to vector<8x128xf32>
    %60 = vector.extract_strided_slice %50 {offsets = [0, 128], sizes = [8, 128], strides = [1, 1]} : vector<8x384xf32> to vector<8x128xf32>
    %61 = arith.addf %59, %60 : vector<8x128xf32>
    %62 = arith.negf %61 : vector<8x128xf32>
    %63 = math.exp %62 : vector<8x128xf32>
    %cst_22 = arith.constant 1.000000e+00 : f32
    %64 = vector.broadcast %cst_22 : f32 to vector<8x128xf32>
    %65 = arith.addf %64, %63 : vector<8x128xf32>
    %66 = arith.divf %64, %65 : vector<8x128xf32>
    %67 = vector.extract_strided_slice %47 {offsets = [0, 256], sizes = [8, 128], strides = [1, 1]} : vector<8x384xf32> to vector<8x128xf32>
    %68 = vector.extract_strided_slice %50 {offsets = [0, 256], sizes = [8, 128], strides = [1, 1]} : vector<8x384xf32> to vector<8x128xf32>
    %69 = arith.mulf %58, %68 : vector<8x128xf32>
    %70 = arith.addf %67, %69 : vector<8x128xf32>
    %71 = math.tanh %70 : vector<8x128xf32>
    %72 = arith.subf %37, %71 : vector<8x128xf32>
    %73 = arith.mulf %66, %72 : vector<8x128xf32>
    %74 = arith.addf %71, %73 : vector<8x128xf32>
    %cst_23 = arith.constant dense<0.000000e+00> : vector<8x256xf32>
    %75 = tpu.matmul %74, %5, %cst_23 {dimension_numbers = #tpu.dot_dimension_numbers<[1], [0], [0], [1], [0, 0, 1, 1], [], []>} : vector<8x128xf32>, vector<128x256xf32>, vector<8x256xf32> -> vector<8x256xf32>
    %76 = vector.broadcast %6 : vector<1x256xf32> to vector<8x256xf32>
    %77 = arith.addf %75, %76 : vector<8x256xf32>
    %78 = arith.index_cast %c1_i32 : i32 to index
    %c0_24 = arith.constant 0 : index
    %c0_25 = arith.constant 0 : index
    %79 = vector.load %arg8[%78, %c0_24, %c0_25] : memref<16x8x256xf32, #tpu.memory_space<vmem>>, vector<1x8x256xf32>
    %80 = vector.shape_cast %79 : vector<1x8x256xf32> to vector<8x256xf32>
    %81 = vector.shape_cast %77 : vector<8x256xf32> to vector<1x8x256xf32>
    tpu.vector_store %arg8[%78, %c0_24, %c0_25], %81 {strides = array<i32>} : memref<16x8x256xf32, #tpu.memory_space<vmem>>, vector<1x8x256xf32>,
    %c2_i32 = arith.constant 2 : i32
    %82 = arith.index_cast %c2_i32 : i32 to index
    %c0_26 = arith.constant 0 : index
    %c0_27 = arith.constant 0 : index
    %83 = vector.load %arg2[%82, %c0_26, %c0_27] : memref<16x8x384xf32, #tpu.memory_space<vmem>>, vector<1x8x384xf32>
    %84 = vector.shape_cast %83 : vector<1x8x384xf32> to vector<8x384xf32>
    %cst_28 = arith.constant dense<0.000000e+00> : vector<8x384xf32>
    %85 = tpu.matmul %74, %3, %cst_28 {dimension_numbers = #tpu.dot_dimension_numbers<[1], [0], [0], [1], [0, 0, 1, 1], [], []>} : vector<8x128xf32>, vector<128x384xf32>, vector<8x384xf32> -> vector<8x384xf32>
    %86 = vector.broadcast %4 : vector<1x384xf32> to vector<8x384xf32>
    %87 = arith.addf %85, %86 : vector<8x384xf32>
    %88 = vector.extract_strided_slice %84 {offsets = [0, 0], sizes = [8, 128], strides = [1, 1]} : vector<8x384xf32> to vector<8x128xf32>
    %89 = vector.extract_strided_slice %87 {offsets = [0, 0], sizes = [8, 128], strides = [1, 1]} : vector<8x384xf32> to vector<8x128xf32>
    %90 = arith.addf %88, %89 : vector<8x128xf32>
    %91 = arith.negf %90 : vector<8x128xf32>
    %92 = math.exp %91 : vector<8x128xf32>
    %cst_29 = arith.constant 1.000000e+00 : f32
    %93 = vector.broadcast %cst_29 : f32 to vector<8x128xf32>
    %94 = arith.addf %93, %92 : vector<8x128xf32>
    %95 = arith.divf %93, %94 : vector<8x128xf32>
    %96 = vector.extract_strided_slice %84 {offsets = [0, 128], sizes = [8, 128], strides = [1, 1]} : vector<8x384xf32> to vector<8x128xf32>
    %97 = vector.extract_strided_slice %87 {offsets = [0, 128], sizes = [8, 128], strides = [1, 1]} : vector<8x384xf32> to vector<8x128xf32>
    %98 = arith.addf %96, %97 : vector<8x128xf32>
    %99 = arith.negf %98 : vector<8x128xf32>
    %100 = math.exp %99 : vector<8x128xf32>
    %cst_30 = arith.constant 1.000000e+00 : f32
    %101 = vector.broadcast %cst_30 : f32 to vector<8x128xf32>
    %102 = arith.addf %101, %100 : vector<8x128xf32>
    %103 = arith.divf %101, %102 : vector<8x128xf32>
    %104 = vector.extract_strided_slice %84 {offsets = [0, 256], sizes = [8, 128], strides = [1, 1]} : vector<8x384xf32> to vector<8x128xf32>
    %105 = vector.extract_strided_slice %87 {offsets = [0, 256], sizes = [8, 128], strides = [1, 1]} : vector<8x384xf32> to vector<8x128xf32>
    %106 = arith.mulf %95, %105 : vector<8x128xf32>
    %107 = arith.addf %104, %106 : vector<8x128xf32>
    %108 = math.tanh %107 : vector<8x128xf32>
    %109 = arith.subf %74, %108 : vector<8x128xf32>
    %110 = arith.mulf %103, %109 : vector<8x128xf32>
    %111 = arith.addf %108, %110 : vector<8x128xf32>
    %cst_31 = arith.constant dense<0.000000e+00> : vector<8x256xf32>
    %112 = tpu.matmul %111, %5, %cst_31 {dimension_numbers = #tpu.dot_dimension_numbers<[1], [0], [0], [1], [0, 0, 1, 1], [], []>} : vector<8x128xf32>, vector<128x256xf32>, vector<8x256xf32> -> vector<8x256xf32>
    %113 = vector.broadcast %6 : vector<1x256xf32> to vector<8x256xf32>
    %114 = arith.addf %112, %113 : vector<8x256xf32>
    %115 = arith.index_cast %c2_i32 : i32 to index
    %c0_32 = arith.constant 0 : index
    %c0_33 = arith.constant 0 : index
    %116 = vector.load %arg8[%115, %c0_32, %c0_33] : memref<16x8x256xf32, #tpu.memory_space<vmem>>, vector<1x8x256xf32>
    %117 = vector.shape_cast %116 : vector<1x8x256xf32> to vector<8x256xf32>
    %118 = vector.shape_cast %114 : vector<8x256xf32> to vector<1x8x256xf32>
    tpu.vector_store %arg8[%115, %c0_32, %c0_33], %118 {strides = array<i32>} : memref<16x8x256xf32, #tpu.memory_space<vmem>>, vector<1x8x256xf32>,
    %c3_i32 = arith.constant 3 : i32
    %119 = arith.index_cast %c3_i32 : i32 to index
    %c0_34 = arith.constant 0 : index
    %c0_35 = arith.constant 0 : index
    %120 = vector.load %arg2[%119, %c0_34, %c0_35] : memref<16x8x384xf32, #tpu.memory_space<vmem>>, vector<1x8x384xf32>
    %121 = vector.shape_cast %120 : vector<1x8x384xf32> to vector<8x384xf32>
    %cst_36 = arith.constant dense<0.000000e+00> : vector<8x384xf32>
    %122 = tpu.matmul %111, %3, %cst_36 {dimension_numbers = #tpu.dot_dimension_numbers<[1], [0], [0], [1], [0, 0, 1, 1], [], []>} : vector<8x128xf32>, vector<128x384xf32>, vector<8x384xf32> -> vector<8x384xf32>
    %123 = vector.broadcast %4 : vector<1x384xf32> to vector<8x384xf32>
    %124 = arith.addf %122, %123 : vector<8x384xf32>
    %125 = vector.extract_strided_slice %121 {offsets = [0, 0], sizes = [8, 128], strides = [1, 1]} : vector<8x384xf32> to vector<8x128xf32>
    %126 = vector.extract_strided_slice %124 {offsets = [0, 0], sizes = [8, 128], strides = [1, 1]} : vector<8x384xf32> to vector<8x128xf32>
    %127 = arith.addf %125, %126 : vector<8x128xf32>
    %128 = arith.negf %127 : vector<8x128xf32>
    %129 = math.exp %128 : vector<8x128xf32>
    %cst_37 = arith.constant 1.000000e+00 : f32
    %130 = vector.broadcast %cst_37 : f32 to vector<8x128xf32>
    %131 = arith.addf %130, %129 : vector<8x128xf32>
    %132 = arith.divf %130, %131 : vector<8x128xf32>
    %133 = vector.extract_strided_slice %121 {offsets = [0, 128], sizes = [8, 128], strides = [1, 1]} : vector<8x384xf32> to vector<8x128xf32>
    %134 = vector.extract_strided_slice %124 {offsets = [0, 128], sizes = [8, 128], strides = [1, 1]} : vector<8x384xf32> to vector<8x128xf32>
    %135 = arith.addf %133, %134 : vector<8x128xf32>
    %136 = arith.negf %135 : vector<8x128xf32>
    %137 = math.exp %136 : vector<8x128xf32>
    %cst_38 = arith.constant 1.000000e+00 : f32
    %138 = vector.broadcast %cst_38 : f32 to vector<8x128xf32>
    %139 = arith.addf %138, %137 : vector<8x128xf32>
    %140 = arith.divf %138, %139 : vector<8x128xf32>
    %141 = vector.extract_strided_slice %121 {offsets = [0, 256], sizes = [8, 128], strides = [1, 1]} : vector<8x384xf32> to vector<8x128xf32>
    %142 = vector.extract_strided_slice %124 {offsets = [0, 256], sizes = [8, 128], strides = [1, 1]} : vector<8x384xf32> to vector<8x128xf32>
    %143 = arith.mulf %132, %142 : vector<8x128xf32>
    %144 = arith.addf %141, %143 : vector<8x128xf32>
    %145 = math.tanh %144 : vector<8x128xf32>
    %146 = arith.subf %111, %145 : vector<8x128xf32>
    %147 = arith.mulf %140, %146 : vector<8x128xf32>
    %148 = arith.addf %145, %147 : vector<8x128xf32>
    %cst_39 = arith.constant dense<0.000000e+00> : vector<8x256xf32>
    %149 = tpu.matmul %148, %5, %cst_39 {dimension_numbers = #tpu.dot_dimension_numbers<[1], [0], [0], [1], [0, 0, 1, 1], [], []>} : vector<8x128xf32>, vector<128x256xf32>, vector<8x256xf32> -> vector<8x256xf32>
    %150 = vector.broadcast %6 : vector<1x256xf32> to vector<8x256xf32>
    %151 = arith.addf %149, %150 : vector<8x256xf32>
    %152 = arith.index_cast %c3_i32 : i32 to index
    %c0_40 = arith.constant 0 : index
    %c0_41 = arith.constant 0 : index
    %153 = vector.load %arg8[%152, %c0_40, %c0_41] : memref<16x8x256xf32, #tpu.memory_space<vmem>>, vector<1x8x256xf32>
    %154 = vector.shape_cast %153 : vector<1x8x256xf32> to vector<8x256xf32>
    %155 = vector.shape_cast %151 : vector<8x256xf32> to vector<1x8x256xf32>
    tpu.vector_store %arg8[%152, %c0_40, %c0_41], %155 {strides = array<i32>} : memref<16x8x256xf32, #tpu.memory_space<vmem>>, vector<1x8x256xf32>,
    %c4_i32 = arith.constant 4 : i32
    %156 = arith.index_cast %c4_i32 : i32 to index
    %c0_42 = arith.constant 0 : index
    %c0_43 = arith.constant 0 : index
    %157 = vector.load %arg2[%156, %c0_42, %c0_43] : memref<16x8x384xf32, #tpu.memory_space<vmem>>, vector<1x8x384xf32>
    %158 = vector.shape_cast %157 : vector<1x8x384xf32> to vector<8x384xf32>
    %cst_44 = arith.constant dense<0.000000e+00> : vector<8x384xf32>
    %159 = tpu.matmul %148, %3, %cst_44 {dimension_numbers = #tpu.dot_dimension_numbers<[1], [0], [0], [1], [0, 0, 1, 1], [], []>} : vector<8x128xf32>, vector<128x384xf32>, vector<8x384xf32> -> vector<8x384xf32>
    %160 = vector.broadcast %4 : vector<1x384xf32> to vector<8x384xf32>
    %161 = arith.addf %159, %160 : vector<8x384xf32>
    %162 = vector.extract_strided_slice %158 {offsets = [0, 0], sizes = [8, 128], strides = [1, 1]} : vector<8x384xf32> to vector<8x128xf32>
    %163 = vector.extract_strided_slice %161 {offsets = [0, 0], sizes = [8, 128], strides = [1, 1]} : vector<8x384xf32> to vector<8x128xf32>
    %164 = arith.addf %162, %163 : vector<8x128xf32>
    %165 = arith.negf %164 : vector<8x128xf32>
    %166 = math.exp %165 : vector<8x128xf32>
    %cst_45 = arith.constant 1.000000e+00 : f32
    %167 = vector.broadcast %cst_45 : f32 to vector<8x128xf32>
    %168 = arith.addf %167, %166 : vector<8x128xf32>
    %169 = arith.divf %167, %168 : vector<8x128xf32>
    %170 = vector.extract_strided_slice %158 {offsets = [0, 128], sizes = [8, 128], strides = [1, 1]} : vector<8x384xf32> to vector<8x128xf32>
    %171 = vector.extract_strided_slice %161 {offsets = [0, 128], sizes = [8, 128], strides = [1, 1]} : vector<8x384xf32> to vector<8x128xf32>
    %172 = arith.addf %170, %171 : vector<8x128xf32>
    %173 = arith.negf %172 : vector<8x128xf32>
    %174 = math.exp %173 : vector<8x128xf32>
    %cst_46 = arith.constant 1.000000e+00 : f32
    %175 = vector.broadcast %cst_46 : f32 to vector<8x128xf32>
    %176 = arith.addf %175, %174 : vector<8x128xf32>
    %177 = arith.divf %175, %176 : vector<8x128xf32>
    %178 = vector.extract_strided_slice %158 {offsets = [0, 256], sizes = [8, 128], strides = [1, 1]} : vector<8x384xf32> to vector<8x128xf32>
    %179 = vector.extract_strided_slice %161 {offsets = [0, 256], sizes = [8, 128], strides = [1, 1]} : vector<8x384xf32> to vector<8x128xf32>
    %180 = arith.mulf %169, %179 : vector<8x128xf32>
    %181 = arith.addf %178, %180 : vector<8x128xf32>
    %182 = math.tanh %181 : vector<8x128xf32>
    %183 = arith.subf %148, %182 : vector<8x128xf32>
    %184 = arith.mulf %177, %183 : vector<8x128xf32>
    %185 = arith.addf %182, %184 : vector<8x128xf32>
    %cst_47 = arith.constant dense<0.000000e+00> : vector<8x256xf32>
    %186 = tpu.matmul %185, %5, %cst_47 {dimension_numbers = #tpu.dot_dimension_numbers<[1], [0], [0], [1], [0, 0, 1, 1], [], []>} : vector<8x128xf32>, vector<128x256xf32>, vector<8x256xf32> -> vector<8x256xf32>
    %187 = vector.broadcast %6 : vector<1x256xf32> to vector<8x256xf32>
    %188 = arith.addf %186, %187 : vector<8x256xf32>
    %189 = arith.index_cast %c4_i32 : i32 to index
    %c0_48 = arith.constant 0 : index
    %c0_49 = arith.constant 0 : index
    %190 = vector.load %arg8[%189, %c0_48, %c0_49] : memref<16x8x256xf32, #tpu.memory_space<vmem>>, vector<1x8x256xf32>
    %191 = vector.shape_cast %190 : vector<1x8x256xf32> to vector<8x256xf32>
    %192 = vector.shape_cast %188 : vector<8x256xf32> to vector<1x8x256xf32>
    tpu.vector_store %arg8[%189, %c0_48, %c0_49], %192 {strides = array<i32>} : memref<16x8x256xf32, #tpu.memory_space<vmem>>, vector<1x8x256xf32>,
    %c5_i32 = arith.constant 5 : i32
    %193 = arith.index_cast %c5_i32 : i32 to index
    %c0_50 = arith.constant 0 : index
    %c0_51 = arith.constant 0 : index
    %194 = vector.load %arg2[%193, %c0_50, %c0_51] : memref<16x8x384xf32, #tpu.memory_space<vmem>>, vector<1x8x384xf32>
    %195 = vector.shape_cast %194 : vector<1x8x384xf32> to vector<8x384xf32>
    %cst_52 = arith.constant dense<0.000000e+00> : vector<8x384xf32>
    %196 = tpu.matmul %185, %3, %cst_52 {dimension_numbers = #tpu.dot_dimension_numbers<[1], [0], [0], [1], [0, 0, 1, 1], [], []>} : vector<8x128xf32>, vector<128x384xf32>, vector<8x384xf32> -> vector<8x384xf32>
    %197 = vector.broadcast %4 : vector<1x384xf32> to vector<8x384xf32>
    %198 = arith.addf %196, %197 : vector<8x384xf32>
    %199 = vector.extract_strided_slice %195 {offsets = [0, 0], sizes = [8, 128], strides = [1, 1]} : vector<8x384xf32> to vector<8x128xf32>
    %200 = vector.extract_strided_slice %198 {offsets = [0, 0], sizes = [8, 128], strides = [1, 1]} : vector<8x384xf32> to vector<8x128xf32>
    %201 = arith.addf %199, %200 : vector<8x128xf32>
    %202 = arith.negf %201 : vector<8x128xf32>
    %203 = math.exp %202 : vector<8x128xf32>
    %cst_53 = arith.constant 1.000000e+00 : f32
    %204 = vector.broadcast %cst_53 : f32 to vector<8x128xf32>
    %205 = arith.addf %204, %203 : vector<8x128xf32>
    %206 = arith.divf %204, %205 : vector<8x128xf32>
    %207 = vector.extract_strided_slice %195 {offsets = [0, 128], sizes = [8, 128], strides = [1, 1]} : vector<8x384xf32> to vector<8x128xf32>
    %208 = vector.extract_strided_slice %198 {offsets = [0, 128], sizes = [8, 128], strides = [1, 1]} : vector<8x384xf32> to vector<8x128xf32>
    %209 = arith.addf %207, %208 : vector<8x128xf32>
    %210 = arith.negf %209 : vector<8x128xf32>
    %211 = math.exp %210 : vector<8x128xf32>
    %cst_54 = arith.constant 1.000000e+00 : f32
    %212 = vector.broadcast %cst_54 : f32 to vector<8x128xf32>
    %213 = arith.addf %212, %211 : vector<8x128xf32>
    %214 = arith.divf %212, %213 : vector<8x128xf32>
    %215 = vector.extract_strided_slice %195 {offsets = [0, 256], sizes = [8, 128], strides = [1, 1]} : vector<8x384xf32> to vector<8x128xf32>
    %216 = vector.extract_strided_slice %198 {offsets = [0, 256], sizes = [8, 128], strides = [1, 1]} : vector<8x384xf32> to vector<8x128xf32>
    %217 = arith.mulf %206, %216 : vector<8x128xf32>
    %218 = arith.addf %215, %217 : vector<8x128xf32>
    %219 = math.tanh %218 : vector<8x128xf32>
    %220 = arith.subf %185, %219 : vector<8x128xf32>
    %221 = arith.mulf %214, %220 : vector<8x128xf32>
    %222 = arith.addf %219, %221 : vector<8x128xf32>
    %cst_55 = arith.constant dense<0.000000e+00> : vector<8x256xf32>
    %223 = tpu.matmul %222, %5, %cst_55 {dimension_numbers = #tpu.dot_dimension_numbers<[1], [0], [0], [1], [0, 0, 1, 1], [], []>} : vector<8x128xf32>, vector<128x256xf32>, vector<8x256xf32> -> vector<8x256xf32>
    %224 = vector.broadcast %6 : vector<1x256xf32> to vector<8x256xf32>
    %225 = arith.addf %223, %224 : vector<8x256xf32>
    %226 = arith.index_cast %c5_i32 : i32 to index
    %c0_56 = arith.constant 0 : index
    %c0_57 = arith.constant 0 : index
    %227 = vector.load %arg8[%226, %c0_56, %c0_57] : memref<16x8x256xf32, #tpu.memory_space<vmem>>, vector<1x8x256xf32>
    %228 = vector.shape_cast %227 : vector<1x8x256xf32> to vector<8x256xf32>
    %229 = vector.shape_cast %225 : vector<8x256xf32> to vector<1x8x256xf32>
    tpu.vector_store %arg8[%226, %c0_56, %c0_57], %229 {strides = array<i32>} : memref<16x8x256xf32, #tpu.memory_space<vmem>>, vector<1x8x256xf32>,
    %c6_i32 = arith.constant 6 : i32
    %230 = arith.index_cast %c6_i32 : i32 to index
    %c0_58 = arith.constant 0 : index
    %c0_59 = arith.constant 0 : index
    %231 = vector.load %arg2[%230, %c0_58, %c0_59] : memref<16x8x384xf32, #tpu.memory_space<vmem>>, vector<1x8x384xf32>
    %232 = vector.shape_cast %231 : vector<1x8x384xf32> to vector<8x384xf32>
    %cst_60 = arith.constant dense<0.000000e+00> : vector<8x384xf32>
    %233 = tpu.matmul %222, %3, %cst_60 {dimension_numbers = #tpu.dot_dimension_numbers<[1], [0], [0], [1], [0, 0, 1, 1], [], []>} : vector<8x128xf32>, vector<128x384xf32>, vector<8x384xf32> -> vector<8x384xf32>
    %234 = vector.broadcast %4 : vector<1x384xf32> to vector<8x384xf32>
    %235 = arith.addf %233, %234 : vector<8x384xf32>
    %236 = vector.extract_strided_slice %232 {offsets = [0, 0], sizes = [8, 128], strides = [1, 1]} : vector<8x384xf32> to vector<8x128xf32>
    %237 = vector.extract_strided_slice %235 {offsets = [0, 0], sizes = [8, 128], strides = [1, 1]} : vector<8x384xf32> to vector<8x128xf32>
    %238 = arith.addf %236, %237 : vector<8x128xf32>
    %239 = arith.negf %238 : vector<8x128xf32>
    %240 = math.exp %239 : vector<8x128xf32>
    %cst_61 = arith.constant 1.000000e+00 : f32
    %241 = vector.broadcast %cst_61 : f32 to vector<8x128xf32>
    %242 = arith.addf %241, %240 : vector<8x128xf32>
    %243 = arith.divf %241, %242 : vector<8x128xf32>
    %244 = vector.extract_strided_slice %232 {offsets = [0, 128], sizes = [8, 128], strides = [1, 1]} : vector<8x384xf32> to vector<8x128xf32>
    %245 = vector.extract_strided_slice %235 {offsets = [0, 128], sizes = [8, 128], strides = [1, 1]} : vector<8x384xf32> to vector<8x128xf32>
    %246 = arith.addf %244, %245 : vector<8x128xf32>
    %247 = arith.negf %246 : vector<8x128xf32>
    %248 = math.exp %247 : vector<8x128xf32>
    %cst_62 = arith.constant 1.000000e+00 : f32
    %249 = vector.broadcast %cst_62 : f32 to vector<8x128xf32>
    %250 = arith.addf %249, %248 : vector<8x128xf32>
    %251 = arith.divf %249, %250 : vector<8x128xf32>
    %252 = vector.extract_strided_slice %232 {offsets = [0, 256], sizes = [8, 128], strides = [1, 1]} : vector<8x384xf32> to vector<8x128xf32>
    %253 = vector.extract_strided_slice %235 {offsets = [0, 256], sizes = [8, 128], strides = [1, 1]} : vector<8x384xf32> to vector<8x128xf32>
    %254 = arith.mulf %243, %253 : vector<8x128xf32>
    %255 = arith.addf %252, %254 : vector<8x128xf32>
    %256 = math.tanh %255 : vector<8x128xf32>
    %257 = arith.subf %222, %256 : vector<8x128xf32>
    %258 = arith.mulf %251, %257 : vector<8x128xf32>
    %259 = arith.addf %256, %258 : vector<8x128xf32>
    %cst_63 = arith.constant dense<0.000000e+00> : vector<8x256xf32>
    %260 = tpu.matmul %259, %5, %cst_63 {dimension_numbers = #tpu.dot_dimension_numbers<[1], [0], [0], [1], [0, 0, 1, 1], [], []>} : vector<8x128xf32>, vector<128x256xf32>, vector<8x256xf32> -> vector<8x256xf32>
    %261 = vector.broadcast %6 : vector<1x256xf32> to vector<8x256xf32>
    %262 = arith.addf %260, %261 : vector<8x256xf32>
    %263 = arith.index_cast %c6_i32 : i32 to index
    %c0_64 = arith.constant 0 : index
    %c0_65 = arith.constant 0 : index
    %264 = vector.load %arg8[%263, %c0_64, %c0_65] : memref<16x8x256xf32, #tpu.memory_space<vmem>>, vector<1x8x256xf32>
    %265 = vector.shape_cast %264 : vector<1x8x256xf32> to vector<8x256xf32>
    %266 = vector.shape_cast %262 : vector<8x256xf32> to vector<1x8x256xf32>
    tpu.vector_store %arg8[%263, %c0_64, %c0_65], %266 {strides = array<i32>} : memref<16x8x256xf32, #tpu.memory_space<vmem>>, vector<1x8x256xf32>,
    %c7_i32 = arith.constant 7 : i32
    %267 = arith.index_cast %c7_i32 : i32 to index
    %c0_66 = arith.constant 0 : index
    %c0_67 = arith.constant 0 : index
    %268 = vector.load %arg2[%267, %c0_66, %c0_67] : memref<16x8x384xf32, #tpu.memory_space<vmem>>, vector<1x8x384xf32>
    %269 = vector.shape_cast %268 : vector<1x8x384xf32> to vector<8x384xf32>
    %cst_68 = arith.constant dense<0.000000e+00> : vector<8x384xf32>
    %270 = tpu.matmul %259, %3, %cst_68 {dimension_numbers = #tpu.dot_dimension_numbers<[1], [0], [0], [1], [0, 0, 1, 1], [], []>} : vector<8x128xf32>, vector<128x384xf32>, vector<8x384xf32> -> vector<8x384xf32>
    %271 = vector.broadcast %4 : vector<1x384xf32> to vector<8x384xf32>
    %272 = arith.addf %270, %271 : vector<8x384xf32>
    %273 = vector.extract_strided_slice %269 {offsets = [0, 0], sizes = [8, 128], strides = [1, 1]} : vector<8x384xf32> to vector<8x128xf32>
    %274 = vector.extract_strided_slice %272 {offsets = [0, 0], sizes = [8, 128], strides = [1, 1]} : vector<8x384xf32> to vector<8x128xf32>
    %275 = arith.addf %273, %274 : vector<8x128xf32>
    %276 = arith.negf %275 : vector<8x128xf32>
    %277 = math.exp %276 : vector<8x128xf32>
    %cst_69 = arith.constant 1.000000e+00 : f32
    %278 = vector.broadcast %cst_69 : f32 to vector<8x128xf32>
    %279 = arith.addf %278, %277 : vector<8x128xf32>
    %280 = arith.divf %278, %279 : vector<8x128xf32>
    %281 = vector.extract_strided_slice %269 {offsets = [0, 128], sizes = [8, 128], strides = [1, 1]} : vector<8x384xf32> to vector<8x128xf32>
    %282 = vector.extract_strided_slice %272 {offsets = [0, 128], sizes = [8, 128], strides = [1, 1]} : vector<8x384xf32> to vector<8x128xf32>
    %283 = arith.addf %281, %282 : vector<8x128xf32>
    %284 = arith.negf %283 : vector<8x128xf32>
    %285 = math.exp %284 : vector<8x128xf32>
    %cst_70 = arith.constant 1.000000e+00 : f32
    %286 = vector.broadcast %cst_70 : f32 to vector<8x128xf32>
    %287 = arith.addf %286, %285 : vector<8x128xf32>
    %288 = arith.divf %286, %287 : vector<8x128xf32>
    %289 = vector.extract_strided_slice %269 {offsets = [0, 256], sizes = [8, 128], strides = [1, 1]} : vector<8x384xf32> to vector<8x128xf32>
    %290 = vector.extract_strided_slice %272 {offsets = [0, 256], sizes = [8, 128], strides = [1, 1]} : vector<8x384xf32> to vector<8x128xf32>
    %291 = arith.mulf %280, %290 : vector<8x128xf32>
    %292 = arith.addf %289, %291 : vector<8x128xf32>
    %293 = math.tanh %292 : vector<8x128xf32>
    %294 = arith.subf %259, %293 : vector<8x128xf32>
    %295 = arith.mulf %288, %294 : vector<8x128xf32>
    %296 = arith.addf %293, %295 : vector<8x128xf32>
    %cst_71 = arith.constant dense<0.000000e+00> : vector<8x256xf32>
    %297 = tpu.matmul %296, %5, %cst_71 {dimension_numbers = #tpu.dot_dimension_numbers<[1], [0], [0], [1], [0, 0, 1, 1], [], []>} : vector<8x128xf32>, vector<128x256xf32>, vector<8x256xf32> -> vector<8x256xf32>
    %298 = vector.broadcast %6 : vector<1x256xf32> to vector<8x256xf32>
    %299 = arith.addf %297, %298 : vector<8x256xf32>
    %300 = arith.index_cast %c7_i32 : i32 to index
    %c0_72 = arith.constant 0 : index
    %c0_73 = arith.constant 0 : index
    %301 = vector.load %arg8[%300, %c0_72, %c0_73] : memref<16x8x256xf32, #tpu.memory_space<vmem>>, vector<1x8x256xf32>
    %302 = vector.shape_cast %301 : vector<1x8x256xf32> to vector<8x256xf32>
    %303 = vector.shape_cast %299 : vector<8x256xf32> to vector<1x8x256xf32>
    tpu.vector_store %arg8[%300, %c0_72, %c0_73], %303 {strides = array<i32>} : memref<16x8x256xf32, #tpu.memory_space<vmem>>, vector<1x8x256xf32>,
    %c8_i32 = arith.constant 8 : i32
    %304 = arith.index_cast %c8_i32 : i32 to index
    %c0_74 = arith.constant 0 : index
    %c0_75 = arith.constant 0 : index
    %305 = vector.load %arg2[%304, %c0_74, %c0_75] : memref<16x8x384xf32, #tpu.memory_space<vmem>>, vector<1x8x384xf32>
    %306 = vector.shape_cast %305 : vector<1x8x384xf32> to vector<8x384xf32>
    %cst_76 = arith.constant dense<0.000000e+00> : vector<8x384xf32>
    %307 = tpu.matmul %296, %3, %cst_76 {dimension_numbers = #tpu.dot_dimension_numbers<[1], [0], [0], [1], [0, 0, 1, 1], [], []>} : vector<8x128xf32>, vector<128x384xf32>, vector<8x384xf32> -> vector<8x384xf32>
    %308 = vector.broadcast %4 : vector<1x384xf32> to vector<8x384xf32>
    %309 = arith.addf %307, %308 : vector<8x384xf32>
    %310 = vector.extract_strided_slice %306 {offsets = [0, 0], sizes = [8, 128], strides = [1, 1]} : vector<8x384xf32> to vector<8x128xf32>
    %311 = vector.extract_strided_slice %309 {offsets = [0, 0], sizes = [8, 128], strides = [1, 1]} : vector<8x384xf32> to vector<8x128xf32>
    %312 = arith.addf %310, %311 : vector<8x128xf32>
    %313 = arith.negf %312 : vector<8x128xf32>
    %314 = math.exp %313 : vector<8x128xf32>
    %cst_77 = arith.constant 1.000000e+00 : f32
    %315 = vector.broadcast %cst_77 : f32 to vector<8x128xf32>
    %316 = arith.addf %315, %314 : vector<8x128xf32>
    %317 = arith.divf %315, %316 : vector<8x128xf32>
    %318 = vector.extract_strided_slice %306 {offsets = [0, 128], sizes = [8, 128], strides = [1, 1]} : vector<8x384xf32> to vector<8x128xf32>
    %319 = vector.extract_strided_slice %309 {offsets = [0, 128], sizes = [8, 128], strides = [1, 1]} : vector<8x384xf32> to vector<8x128xf32>
    %320 = arith.addf %318, %319 : vector<8x128xf32>
    %321 = arith.negf %320 : vector<8x128xf32>
    %322 = math.exp %321 : vector<8x128xf32>
    %cst_78 = arith.constant 1.000000e+00 : f32
    %323 = vector.broadcast %cst_78 : f32 to vector<8x128xf32>
    %324 = arith.addf %323, %322 : vector<8x128xf32>
    %325 = arith.divf %323, %324 : vector<8x128xf32>
    %326 = vector.extract_strided_slice %306 {offsets = [0, 256], sizes = [8, 128], strides = [1, 1]} : vector<8x384xf32> to vector<8x128xf32>
    %327 = vector.extract_strided_slice %309 {offsets = [0, 256], sizes = [8, 128], strides = [1, 1]} : vector<8x384xf32> to vector<8x128xf32>
    %328 = arith.mulf %317, %327 : vector<8x128xf32>
    %329 = arith.addf %326, %328 : vector<8x128xf32>
    %330 = math.tanh %329 : vector<8x128xf32>
    %331 = arith.subf %296, %330 : vector<8x128xf32>
    %332 = arith.mulf %325, %331 : vector<8x128xf32>
    %333 = arith.addf %330, %332 : vector<8x128xf32>
    %cst_79 = arith.constant dense<0.000000e+00> : vector<8x256xf32>
    %334 = tpu.matmul %333, %5, %cst_79 {dimension_numbers = #tpu.dot_dimension_numbers<[1], [0], [0], [1], [0, 0, 1, 1], [], []>} : vector<8x128xf32>, vector<128x256xf32>, vector<8x256xf32> -> vector<8x256xf32>
    %335 = vector.broadcast %6 : vector<1x256xf32> to vector<8x256xf32>
    %336 = arith.addf %334, %335 : vector<8x256xf32>
    %337 = arith.index_cast %c8_i32 : i32 to index
    %c0_80 = arith.constant 0 : index
    %c0_81 = arith.constant 0 : index
    %338 = vector.load %arg8[%337, %c0_80, %c0_81] : memref<16x8x256xf32, #tpu.memory_space<vmem>>, vector<1x8x256xf32>
    %339 = vector.shape_cast %338 : vector<1x8x256xf32> to vector<8x256xf32>
    %340 = vector.shape_cast %336 : vector<8x256xf32> to vector<1x8x256xf32>
    tpu.vector_store %arg8[%337, %c0_80, %c0_81], %340 {strides = array<i32>} : memref<16x8x256xf32, #tpu.memory_space<vmem>>, vector<1x8x256xf32>,
    %c9_i32 = arith.constant 9 : i32
    %341 = arith.index_cast %c9_i32 : i32 to index
    %c0_82 = arith.constant 0 : index
    %c0_83 = arith.constant 0 : index
    %342 = vector.load %arg2[%341, %c0_82, %c0_83] : memref<16x8x384xf32, #tpu.memory_space<vmem>>, vector<1x8x384xf32>
    %343 = vector.shape_cast %342 : vector<1x8x384xf32> to vector<8x384xf32>
    %cst_84 = arith.constant dense<0.000000e+00> : vector<8x384xf32>
    %344 = tpu.matmul %333, %3, %cst_84 {dimension_numbers = #tpu.dot_dimension_numbers<[1], [0], [0], [1], [0, 0, 1, 1], [], []>} : vector<8x128xf32>, vector<128x384xf32>, vector<8x384xf32> -> vector<8x384xf32>
    %345 = vector.broadcast %4 : vector<1x384xf32> to vector<8x384xf32>
    %346 = arith.addf %344, %345 : vector<8x384xf32>
    %347 = vector.extract_strided_slice %343 {offsets = [0, 0], sizes = [8, 128], strides = [1, 1]} : vector<8x384xf32> to vector<8x128xf32>
    %348 = vector.extract_strided_slice %346 {offsets = [0, 0], sizes = [8, 128], strides = [1, 1]} : vector<8x384xf32> to vector<8x128xf32>
    %349 = arith.addf %347, %348 : vector<8x128xf32>
    %350 = arith.negf %349 : vector<8x128xf32>
    %351 = math.exp %350 : vector<8x128xf32>
    %cst_85 = arith.constant 1.000000e+00 : f32
    %352 = vector.broadcast %cst_85 : f32 to vector<8x128xf32>
    %353 = arith.addf %352, %351 : vector<8x128xf32>
    %354 = arith.divf %352, %353 : vector<8x128xf32>
    %355 = vector.extract_strided_slice %343 {offsets = [0, 128], sizes = [8, 128], strides = [1, 1]} : vector<8x384xf32> to vector<8x128xf32>
    %356 = vector.extract_strided_slice %346 {offsets = [0, 128], sizes = [8, 128], strides = [1, 1]} : vector<8x384xf32> to vector<8x128xf32>
    %357 = arith.addf %355, %356 : vector<8x128xf32>
    %358 = arith.negf %357 : vector<8x128xf32>
    %359 = math.exp %358 : vector<8x128xf32>
    %cst_86 = arith.constant 1.000000e+00 : f32
    %360 = vector.broadcast %cst_86 : f32 to vector<8x128xf32>
    %361 = arith.addf %360, %359 : vector<8x128xf32>
    %362 = arith.divf %360, %361 : vector<8x128xf32>
    %363 = vector.extract_strided_slice %343 {offsets = [0, 256], sizes = [8, 128], strides = [1, 1]} : vector<8x384xf32> to vector<8x128xf32>
    %364 = vector.extract_strided_slice %346 {offsets = [0, 256], sizes = [8, 128], strides = [1, 1]} : vector<8x384xf32> to vector<8x128xf32>
    %365 = arith.mulf %354, %364 : vector<8x128xf32>
    %366 = arith.addf %363, %365 : vector<8x128xf32>
    %367 = math.tanh %366 : vector<8x128xf32>
    %368 = arith.subf %333, %367 : vector<8x128xf32>
    %369 = arith.mulf %362, %368 : vector<8x128xf32>
    %370 = arith.addf %367, %369 : vector<8x128xf32>
    %cst_87 = arith.constant dense<0.000000e+00> : vector<8x256xf32>
    %371 = tpu.matmul %370, %5, %cst_87 {dimension_numbers = #tpu.dot_dimension_numbers<[1], [0], [0], [1], [0, 0, 1, 1], [], []>} : vector<8x128xf32>, vector<128x256xf32>, vector<8x256xf32> -> vector<8x256xf32>
    %372 = vector.broadcast %6 : vector<1x256xf32> to vector<8x256xf32>
    %373 = arith.addf %371, %372 : vector<8x256xf32>
    %374 = arith.index_cast %c9_i32 : i32 to index
    %c0_88 = arith.constant 0 : index
    %c0_89 = arith.constant 0 : index
    %375 = vector.load %arg8[%374, %c0_88, %c0_89] : memref<16x8x256xf32, #tpu.memory_space<vmem>>, vector<1x8x256xf32>
    %376 = vector.shape_cast %375 : vector<1x8x256xf32> to vector<8x256xf32>
    %377 = vector.shape_cast %373 : vector<8x256xf32> to vector<1x8x256xf32>
    tpu.vector_store %arg8[%374, %c0_88, %c0_89], %377 {strides = array<i32>} : memref<16x8x256xf32, #tpu.memory_space<vmem>>, vector<1x8x256xf32>,
    %c10_i32 = arith.constant 10 : i32
    %378 = arith.index_cast %c10_i32 : i32 to index
    %c0_90 = arith.constant 0 : index
    %c0_91 = arith.constant 0 : index
    %379 = vector.load %arg2[%378, %c0_90, %c0_91] : memref<16x8x384xf32, #tpu.memory_space<vmem>>, vector<1x8x384xf32>
    %380 = vector.shape_cast %379 : vector<1x8x384xf32> to vector<8x384xf32>
    %cst_92 = arith.constant dense<0.000000e+00> : vector<8x384xf32>
    %381 = tpu.matmul %370, %3, %cst_92 {dimension_numbers = #tpu.dot_dimension_numbers<[1], [0], [0], [1], [0, 0, 1, 1], [], []>} : vector<8x128xf32>, vector<128x384xf32>, vector<8x384xf32> -> vector<8x384xf32>
    %382 = vector.broadcast %4 : vector<1x384xf32> to vector<8x384xf32>
    %383 = arith.addf %381, %382 : vector<8x384xf32>
    %384 = vector.extract_strided_slice %380 {offsets = [0, 0], sizes = [8, 128], strides = [1, 1]} : vector<8x384xf32> to vector<8x128xf32>
    %385 = vector.extract_strided_slice %383 {offsets = [0, 0], sizes = [8, 128], strides = [1, 1]} : vector<8x384xf32> to vector<8x128xf32>
    %386 = arith.addf %384, %385 : vector<8x128xf32>
    %387 = arith.negf %386 : vector<8x128xf32>
    %388 = math.exp %387 : vector<8x128xf32>
    %cst_93 = arith.constant 1.000000e+00 : f32
    %389 = vector.broadcast %cst_93 : f32 to vector<8x128xf32>
    %390 = arith.addf %389, %388 : vector<8x128xf32>
    %391 = arith.divf %389, %390 : vector<8x128xf32>
    %392 = vector.extract_strided_slice %380 {offsets = [0, 128], sizes = [8, 128], strides = [1, 1]} : vector<8x384xf32> to vector<8x128xf32>
    %393 = vector.extract_strided_slice %383 {offsets = [0, 128], sizes = [8, 128], strides = [1, 1]} : vector<8x384xf32> to vector<8x128xf32>
    %394 = arith.addf %392, %393 : vector<8x128xf32>
    %395 = arith.negf %394 : vector<8x128xf32>
    %396 = math.exp %395 : vector<8x128xf32>
    %cst_94 = arith.constant 1.000000e+00 : f32
    %397 = vector.broadcast %cst_94 : f32 to vector<8x128xf32>
    %398 = arith.addf %397, %396 : vector<8x128xf32>
    %399 = arith.divf %397, %398 : vector<8x128xf32>
    %400 = vector.extract_strided_slice %380 {offsets = [0, 256], sizes = [8, 128], strides = [1, 1]} : vector<8x384xf32> to vector<8x128xf32>
    %401 = vector.extract_strided_slice %383 {offsets = [0, 256], sizes = [8, 128], strides = [1, 1]} : vector<8x384xf32> to vector<8x128xf32>
    %402 = arith.mulf %391, %401 : vector<8x128xf32>
    %403 = arith.addf %400, %402 : vector<8x128xf32>
    %404 = math.tanh %403 : vector<8x128xf32>
    %405 = arith.subf %370, %404 : vector<8x128xf32>
    %406 = arith.mulf %399, %405 : vector<8x128xf32>
    %407 = arith.addf %404, %406 : vector<8x128xf32>
    %cst_95 = arith.constant dense<0.000000e+00> : vector<8x256xf32>
    %408 = tpu.matmul %407, %5, %cst_95 {dimension_numbers = #tpu.dot_dimension_numbers<[1], [0], [0], [1], [0, 0, 1, 1], [], []>} : vector<8x128xf32>, vector<128x256xf32>, vector<8x256xf32> -> vector<8x256xf32>
    %409 = vector.broadcast %6 : vector<1x256xf32> to vector<8x256xf32>
    %410 = arith.addf %408, %409 : vector<8x256xf32>
    %411 = arith.index_cast %c10_i32 : i32 to index
    %c0_96 = arith.constant 0 : index
    %c0_97 = arith.constant 0 : index
    %412 = vector.load %arg8[%411, %c0_96, %c0_97] : memref<16x8x256xf32, #tpu.memory_space<vmem>>, vector<1x8x256xf32>
    %413 = vector.shape_cast %412 : vector<1x8x256xf32> to vector<8x256xf32>
    %414 = vector.shape_cast %410 : vector<8x256xf32> to vector<1x8x256xf32>
    tpu.vector_store %arg8[%411, %c0_96, %c0_97], %414 {strides = array<i32>} : memref<16x8x256xf32, #tpu.memory_space<vmem>>, vector<1x8x256xf32>,
    %c11_i32 = arith.constant 11 : i32
    %415 = arith.index_cast %c11_i32 : i32 to index
    %c0_98 = arith.constant 0 : index
    %c0_99 = arith.constant 0 : index
    %416 = vector.load %arg2[%415, %c0_98, %c0_99] : memref<16x8x384xf32, #tpu.memory_space<vmem>>, vector<1x8x384xf32>
    %417 = vector.shape_cast %416 : vector<1x8x384xf32> to vector<8x384xf32>
    %cst_100 = arith.constant dense<0.000000e+00> : vector<8x384xf32>
    %418 = tpu.matmul %407, %3, %cst_100 {dimension_numbers = #tpu.dot_dimension_numbers<[1], [0], [0], [1], [0, 0, 1, 1], [], []>} : vector<8x128xf32>, vector<128x384xf32>, vector<8x384xf32> -> vector<8x384xf32>
    %419 = vector.broadcast %4 : vector<1x384xf32> to vector<8x384xf32>
    %420 = arith.addf %418, %419 : vector<8x384xf32>
    %421 = vector.extract_strided_slice %417 {offsets = [0, 0], sizes = [8, 128], strides = [1, 1]} : vector<8x384xf32> to vector<8x128xf32>
    %422 = vector.extract_strided_slice %420 {offsets = [0, 0], sizes = [8, 128], strides = [1, 1]} : vector<8x384xf32> to vector<8x128xf32>
    %423 = arith.addf %421, %422 : vector<8x128xf32>
    %424 = arith.negf %423 : vector<8x128xf32>
    %425 = math.exp %424 : vector<8x128xf32>
    %cst_101 = arith.constant 1.000000e+00 : f32
    %426 = vector.broadcast %cst_101 : f32 to vector<8x128xf32>
    %427 = arith.addf %426, %425 : vector<8x128xf32>
    %428 = arith.divf %426, %427 : vector<8x128xf32>
    %429 = vector.extract_strided_slice %417 {offsets = [0, 128], sizes = [8, 128], strides = [1, 1]} : vector<8x384xf32> to vector<8x128xf32>
    %430 = vector.extract_strided_slice %420 {offsets = [0, 128], sizes = [8, 128], strides = [1, 1]} : vector<8x384xf32> to vector<8x128xf32>
    %431 = arith.addf %429, %430 : vector<8x128xf32>
    %432 = arith.negf %431 : vector<8x128xf32>
    %433 = math.exp %432 : vector<8x128xf32>
    %cst_102 = arith.constant 1.000000e+00 : f32
    %434 = vector.broadcast %cst_102 : f32 to vector<8x128xf32>
    %435 = arith.addf %434, %433 : vector<8x128xf32>
    %436 = arith.divf %434, %435 : vector<8x128xf32>
    %437 = vector.extract_strided_slice %417 {offsets = [0, 256], sizes = [8, 128], strides = [1, 1]} : vector<8x384xf32> to vector<8x128xf32>
    %438 = vector.extract_strided_slice %420 {offsets = [0, 256], sizes = [8, 128], strides = [1, 1]} : vector<8x384xf32> to vector<8x128xf32>
    %439 = arith.mulf %428, %438 : vector<8x128xf32>
    %440 = arith.addf %437, %439 : vector<8x128xf32>
    %441 = math.tanh %440 : vector<8x128xf32>
    %442 = arith.subf %407, %441 : vector<8x128xf32>
    %443 = arith.mulf %436, %442 : vector<8x128xf32>
    %444 = arith.addf %441, %443 : vector<8x128xf32>
    %cst_103 = arith.constant dense<0.000000e+00> : vector<8x256xf32>
    %445 = tpu.matmul %444, %5, %cst_103 {dimension_numbers = #tpu.dot_dimension_numbers<[1], [0], [0], [1], [0, 0, 1, 1], [], []>} : vector<8x128xf32>, vector<128x256xf32>, vector<8x256xf32> -> vector<8x256xf32>
    %446 = vector.broadcast %6 : vector<1x256xf32> to vector<8x256xf32>
    %447 = arith.addf %445, %446 : vector<8x256xf32>
    %448 = arith.index_cast %c11_i32 : i32 to index
    %c0_104 = arith.constant 0 : index
    %c0_105 = arith.constant 0 : index
    %449 = vector.load %arg8[%448, %c0_104, %c0_105] : memref<16x8x256xf32, #tpu.memory_space<vmem>>, vector<1x8x256xf32>
    %450 = vector.shape_cast %449 : vector<1x8x256xf32> to vector<8x256xf32>
    %451 = vector.shape_cast %447 : vector<8x256xf32> to vector<1x8x256xf32>
    tpu.vector_store %arg8[%448, %c0_104, %c0_105], %451 {strides = array<i32>} : memref<16x8x256xf32, #tpu.memory_space<vmem>>, vector<1x8x256xf32>,
    %c12_i32 = arith.constant 12 : i32
    %452 = arith.index_cast %c12_i32 : i32 to index
    %c0_106 = arith.constant 0 : index
    %c0_107 = arith.constant 0 : index
    %453 = vector.load %arg2[%452, %c0_106, %c0_107] : memref<16x8x384xf32, #tpu.memory_space<vmem>>, vector<1x8x384xf32>
    %454 = vector.shape_cast %453 : vector<1x8x384xf32> to vector<8x384xf32>
    %cst_108 = arith.constant dense<0.000000e+00> : vector<8x384xf32>
    %455 = tpu.matmul %444, %3, %cst_108 {dimension_numbers = #tpu.dot_dimension_numbers<[1], [0], [0], [1], [0, 0, 1, 1], [], []>} : vector<8x128xf32>, vector<128x384xf32>, vector<8x384xf32> -> vector<8x384xf32>
    %456 = vector.broadcast %4 : vector<1x384xf32> to vector<8x384xf32>
    %457 = arith.addf %455, %456 : vector<8x384xf32>
    %458 = vector.extract_strided_slice %454 {offsets = [0, 0], sizes = [8, 128], strides = [1, 1]} : vector<8x384xf32> to vector<8x128xf32>
    %459 = vector.extract_strided_slice %457 {offsets = [0, 0], sizes = [8, 128], strides = [1, 1]} : vector<8x384xf32> to vector<8x128xf32>
    %460 = arith.addf %458, %459 : vector<8x128xf32>
    %461 = arith.negf %460 : vector<8x128xf32>
    %462 = math.exp %461 : vector<8x128xf32>
    %cst_109 = arith.constant 1.000000e+00 : f32
    %463 = vector.broadcast %cst_109 : f32 to vector<8x128xf32>
    %464 = arith.addf %463, %462 : vector<8x128xf32>
    %465 = arith.divf %463, %464 : vector<8x128xf32>
    %466 = vector.extract_strided_slice %454 {offsets = [0, 128], sizes = [8, 128], strides = [1, 1]} : vector<8x384xf32> to vector<8x128xf32>
    %467 = vector.extract_strided_slice %457 {offsets = [0, 128], sizes = [8, 128], strides = [1, 1]} : vector<8x384xf32> to vector<8x128xf32>
    %468 = arith.addf %466, %467 : vector<8x128xf32>
    %469 = arith.negf %468 : vector<8x128xf32>
    %470 = math.exp %469 : vector<8x128xf32>
    %cst_110 = arith.constant 1.000000e+00 : f32
    %471 = vector.broadcast %cst_110 : f32 to vector<8x128xf32>
    %472 = arith.addf %471, %470 : vector<8x128xf32>
    %473 = arith.divf %471, %472 : vector<8x128xf32>
    %474 = vector.extract_strided_slice %454 {offsets = [0, 256], sizes = [8, 128], strides = [1, 1]} : vector<8x384xf32> to vector<8x128xf32>
    %475 = vector.extract_strided_slice %457 {offsets = [0, 256], sizes = [8, 128], strides = [1, 1]} : vector<8x384xf32> to vector<8x128xf32>
    %476 = arith.mulf %465, %475 : vector<8x128xf32>
    %477 = arith.addf %474, %476 : vector<8x128xf32>
    %478 = math.tanh %477 : vector<8x128xf32>
    %479 = arith.subf %444, %478 : vector<8x128xf32>
    %480 = arith.mulf %473, %479 : vector<8x128xf32>
    %481 = arith.addf %478, %480 : vector<8x128xf32>
    %cst_111 = arith.constant dense<0.000000e+00> : vector<8x256xf32>
    %482 = tpu.matmul %481, %5, %cst_111 {dimension_numbers = #tpu.dot_dimension_numbers<[1], [0], [0], [1], [0, 0, 1, 1], [], []>} : vector<8x128xf32>, vector<128x256xf32>, vector<8x256xf32> -> vector<8x256xf32>
    %483 = vector.broadcast %6 : vector<1x256xf32> to vector<8x256xf32>
    %484 = arith.addf %482, %483 : vector<8x256xf32>
    %485 = arith.index_cast %c12_i32 : i32 to index
    %c0_112 = arith.constant 0 : index
    %c0_113 = arith.constant 0 : index
    %486 = vector.load %arg8[%485, %c0_112, %c0_113] : memref<16x8x256xf32, #tpu.memory_space<vmem>>, vector<1x8x256xf32>
    %487 = vector.shape_cast %486 : vector<1x8x256xf32> to vector<8x256xf32>
    %488 = vector.shape_cast %484 : vector<8x256xf32> to vector<1x8x256xf32>
    tpu.vector_store %arg8[%485, %c0_112, %c0_113], %488 {strides = array<i32>} : memref<16x8x256xf32, #tpu.memory_space<vmem>>, vector<1x8x256xf32>,
    %c13_i32 = arith.constant 13 : i32
    %489 = arith.index_cast %c13_i32 : i32 to index
    %c0_114 = arith.constant 0 : index
    %c0_115 = arith.constant 0 : index
    %490 = vector.load %arg2[%489, %c0_114, %c0_115] : memref<16x8x384xf32, #tpu.memory_space<vmem>>, vector<1x8x384xf32>
    %491 = vector.shape_cast %490 : vector<1x8x384xf32> to vector<8x384xf32>
    %cst_116 = arith.constant dense<0.000000e+00> : vector<8x384xf32>
    %492 = tpu.matmul %481, %3, %cst_116 {dimension_numbers = #tpu.dot_dimension_numbers<[1], [0], [0], [1], [0, 0, 1, 1], [], []>} : vector<8x128xf32>, vector<128x384xf32>, vector<8x384xf32> -> vector<8x384xf32>
    %493 = vector.broadcast %4 : vector<1x384xf32> to vector<8x384xf32>
    %494 = arith.addf %492, %493 : vector<8x384xf32>
    %495 = vector.extract_strided_slice %491 {offsets = [0, 0], sizes = [8, 128], strides = [1, 1]} : vector<8x384xf32> to vector<8x128xf32>
    %496 = vector.extract_strided_slice %494 {offsets = [0, 0], sizes = [8, 128], strides = [1, 1]} : vector<8x384xf32> to vector<8x128xf32>
    %497 = arith.addf %495, %496 : vector<8x128xf32>
    %498 = arith.negf %497 : vector<8x128xf32>
    %499 = math.exp %498 : vector<8x128xf32>
    %cst_117 = arith.constant 1.000000e+00 : f32
    %500 = vector.broadcast %cst_117 : f32 to vector<8x128xf32>
    %501 = arith.addf %500, %499 : vector<8x128xf32>
    %502 = arith.divf %500, %501 : vector<8x128xf32>
    %503 = vector.extract_strided_slice %491 {offsets = [0, 128], sizes = [8, 128], strides = [1, 1]} : vector<8x384xf32> to vector<8x128xf32>
    %504 = vector.extract_strided_slice %494 {offsets = [0, 128], sizes = [8, 128], strides = [1, 1]} : vector<8x384xf32> to vector<8x128xf32>
    %505 = arith.addf %503, %504 : vector<8x128xf32>
    %506 = arith.negf %505 : vector<8x128xf32>
    %507 = math.exp %506 : vector<8x128xf32>
    %cst_118 = arith.constant 1.000000e+00 : f32
    %508 = vector.broadcast %cst_118 : f32 to vector<8x128xf32>
    %509 = arith.addf %508, %507 : vector<8x128xf32>
    %510 = arith.divf %508, %509 : vector<8x128xf32>
    %511 = vector.extract_strided_slice %491 {offsets = [0, 256], sizes = [8, 128], strides = [1, 1]} : vector<8x384xf32> to vector<8x128xf32>
    %512 = vector.extract_strided_slice %494 {offsets = [0, 256], sizes = [8, 128], strides = [1, 1]} : vector<8x384xf32> to vector<8x128xf32>
    %513 = arith.mulf %502, %512 : vector<8x128xf32>
    %514 = arith.addf %511, %513 : vector<8x128xf32>
    %515 = math.tanh %514 : vector<8x128xf32>
    %516 = arith.subf %481, %515 : vector<8x128xf32>
    %517 = arith.mulf %510, %516 : vector<8x128xf32>
    %518 = arith.addf %515, %517 : vector<8x128xf32>
    %cst_119 = arith.constant dense<0.000000e+00> : vector<8x256xf32>
    %519 = tpu.matmul %518, %5, %cst_119 {dimension_numbers = #tpu.dot_dimension_numbers<[1], [0], [0], [1], [0, 0, 1, 1], [], []>} : vector<8x128xf32>, vector<128x256xf32>, vector<8x256xf32> -> vector<8x256xf32>
    %520 = vector.broadcast %6 : vector<1x256xf32> to vector<8x256xf32>
    %521 = arith.addf %519, %520 : vector<8x256xf32>
    %522 = arith.index_cast %c13_i32 : i32 to index
    %c0_120 = arith.constant 0 : index
    %c0_121 = arith.constant 0 : index
    %523 = vector.load %arg8[%522, %c0_120, %c0_121] : memref<16x8x256xf32, #tpu.memory_space<vmem>>, vector<1x8x256xf32>
    %524 = vector.shape_cast %523 : vector<1x8x256xf32> to vector<8x256xf32>
    %525 = vector.shape_cast %521 : vector<8x256xf32> to vector<1x8x256xf32>
    tpu.vector_store %arg8[%522, %c0_120, %c0_121], %525 {strides = array<i32>} : memref<16x8x256xf32, #tpu.memory_space<vmem>>, vector<1x8x256xf32>,
    %c14_i32 = arith.constant 14 : i32
    %526 = arith.index_cast %c14_i32 : i32 to index
    %c0_122 = arith.constant 0 : index
    %c0_123 = arith.constant 0 : index
    %527 = vector.load %arg2[%526, %c0_122, %c0_123] : memref<16x8x384xf32, #tpu.memory_space<vmem>>, vector<1x8x384xf32>
    %528 = vector.shape_cast %527 : vector<1x8x384xf32> to vector<8x384xf32>
    %cst_124 = arith.constant dense<0.000000e+00> : vector<8x384xf32>
    %529 = tpu.matmul %518, %3, %cst_124 {dimension_numbers = #tpu.dot_dimension_numbers<[1], [0], [0], [1], [0, 0, 1, 1], [], []>} : vector<8x128xf32>, vector<128x384xf32>, vector<8x384xf32> -> vector<8x384xf32>
    %530 = vector.broadcast %4 : vector<1x384xf32> to vector<8x384xf32>
    %531 = arith.addf %529, %530 : vector<8x384xf32>
    %532 = vector.extract_strided_slice %528 {offsets = [0, 0], sizes = [8, 128], strides = [1, 1]} : vector<8x384xf32> to vector<8x128xf32>
    %533 = vector.extract_strided_slice %531 {offsets = [0, 0], sizes = [8, 128], strides = [1, 1]} : vector<8x384xf32> to vector<8x128xf32>
    %534 = arith.addf %532, %533 : vector<8x128xf32>
    %535 = arith.negf %534 : vector<8x128xf32>
    %536 = math.exp %535 : vector<8x128xf32>
    %cst_125 = arith.constant 1.000000e+00 : f32
    %537 = vector.broadcast %cst_125 : f32 to vector<8x128xf32>
    %538 = arith.addf %537, %536 : vector<8x128xf32>
    %539 = arith.divf %537, %538 : vector<8x128xf32>
    %540 = vector.extract_strided_slice %528 {offsets = [0, 128], sizes = [8, 128], strides = [1, 1]} : vector<8x384xf32> to vector<8x128xf32>
    %541 = vector.extract_strided_slice %531 {offsets = [0, 128], sizes = [8, 128], strides = [1, 1]} : vector<8x384xf32> to vector<8x128xf32>
    %542 = arith.addf %540, %541 : vector<8x128xf32>
    %543 = arith.negf %542 : vector<8x128xf32>
    %544 = math.exp %543 : vector<8x128xf32>
    %cst_126 = arith.constant 1.000000e+00 : f32
    %545 = vector.broadcast %cst_126 : f32 to vector<8x128xf32>
    %546 = arith.addf %545, %544 : vector<8x128xf32>
    %547 = arith.divf %545, %546 : vector<8x128xf32>
    %548 = vector.extract_strided_slice %528 {offsets = [0, 256], sizes = [8, 128], strides = [1, 1]} : vector<8x384xf32> to vector<8x128xf32>
    %549 = vector.extract_strided_slice %531 {offsets = [0, 256], sizes = [8, 128], strides = [1, 1]} : vector<8x384xf32> to vector<8x128xf32>
    %550 = arith.mulf %539, %549 : vector<8x128xf32>
    %551 = arith.addf %548, %550 : vector<8x128xf32>
    %552 = math.tanh %551 : vector<8x128xf32>
    %553 = arith.subf %518, %552 : vector<8x128xf32>
    %554 = arith.mulf %547, %553 : vector<8x128xf32>
    %555 = arith.addf %552, %554 : vector<8x128xf32>
    %cst_127 = arith.constant dense<0.000000e+00> : vector<8x256xf32>
    %556 = tpu.matmul %555, %5, %cst_127 {dimension_numbers = #tpu.dot_dimension_numbers<[1], [0], [0], [1], [0, 0, 1, 1], [], []>} : vector<8x128xf32>, vector<128x256xf32>, vector<8x256xf32> -> vector<8x256xf32>
    %557 = vector.broadcast %6 : vector<1x256xf32> to vector<8x256xf32>
    %558 = arith.addf %556, %557 : vector<8x256xf32>
    %559 = arith.index_cast %c14_i32 : i32 to index
    %c0_128 = arith.constant 0 : index
    %c0_129 = arith.constant 0 : index
    %560 = vector.load %arg8[%559, %c0_128, %c0_129] : memref<16x8x256xf32, #tpu.memory_space<vmem>>, vector<1x8x256xf32>
    %561 = vector.shape_cast %560 : vector<1x8x256xf32> to vector<8x256xf32>
    %562 = vector.shape_cast %558 : vector<8x256xf32> to vector<1x8x256xf32>
    tpu.vector_store %arg8[%559, %c0_128, %c0_129], %562 {strides = array<i32>} : memref<16x8x256xf32, #tpu.memory_space<vmem>>, vector<1x8x256xf32>,
    %c15_i32 = arith.constant 15 : i32
    %563 = arith.index_cast %c15_i32 : i32 to index
    %c0_130 = arith.constant 0 : index
    %c0_131 = arith.constant 0 : index
    %564 = vector.load %arg2[%563, %c0_130, %c0_131] : memref<16x8x384xf32, #tpu.memory_space<vmem>>, vector<1x8x384xf32>
    %565 = vector.shape_cast %564 : vector<1x8x384xf32> to vector<8x384xf32>
    %cst_132 = arith.constant dense<0.000000e+00> : vector<8x384xf32>
    %566 = tpu.matmul %555, %3, %cst_132 {dimension_numbers = #tpu.dot_dimension_numbers<[1], [0], [0], [1], [0, 0, 1, 1], [], []>} : vector<8x128xf32>, vector<128x384xf32>, vector<8x384xf32> -> vector<8x384xf32>
    %567 = vector.broadcast %4 : vector<1x384xf32> to vector<8x384xf32>
    %568 = arith.addf %566, %567 : vector<8x384xf32>
    %569 = vector.extract_strided_slice %565 {offsets = [0, 0], sizes = [8, 128], strides = [1, 1]} : vector<8x384xf32> to vector<8x128xf32>
    %570 = vector.extract_strided_slice %568 {offsets = [0, 0], sizes = [8, 128], strides = [1, 1]} : vector<8x384xf32> to vector<8x128xf32>
    %571 = arith.addf %569, %570 : vector<8x128xf32>
    %572 = arith.negf %571 : vector<8x128xf32>
    %573 = math.exp %572 : vector<8x128xf32>
    %cst_133 = arith.constant 1.000000e+00 : f32
    %574 = vector.broadcast %cst_133 : f32 to vector<8x128xf32>
    %575 = arith.addf %574, %573 : vector<8x128xf32>
    %576 = arith.divf %574, %575 : vector<8x128xf32>
    %577 = vector.extract_strided_slice %565 {offsets = [0, 128], sizes = [8, 128], strides = [1, 1]} : vector<8x384xf32> to vector<8x128xf32>
    %578 = vector.extract_strided_slice %568 {offsets = [0, 128], sizes = [8, 128], strides = [1, 1]} : vector<8x384xf32> to vector<8x128xf32>
    %579 = arith.addf %577, %578 : vector<8x128xf32>
    %580 = arith.negf %579 : vector<8x128xf32>
    %581 = math.exp %580 : vector<8x128xf32>
    %cst_134 = arith.constant 1.000000e+00 : f32
    %582 = vector.broadcast %cst_134 : f32 to vector<8x128xf32>
    %583 = arith.addf %582, %581 : vector<8x128xf32>
    %584 = arith.divf %582, %583 : vector<8x128xf32>
    %585 = vector.extract_strided_slice %565 {offsets = [0, 256], sizes = [8, 128], strides = [1, 1]} : vector<8x384xf32> to vector<8x128xf32>
    %586 = vector.extract_strided_slice %568 {offsets = [0, 256], sizes = [8, 128], strides = [1, 1]} : vector<8x384xf32> to vector<8x128xf32>
    %587 = arith.mulf %576, %586 : vector<8x128xf32>
    %588 = arith.addf %585, %587 : vector<8x128xf32>
    %589 = math.tanh %588 : vector<8x128xf32>
    %590 = arith.subf %555, %589 : vector<8x128xf32>
    %591 = arith.mulf %584, %590 : vector<8x128xf32>
    %592 = arith.addf %589, %591 : vector<8x128xf32>
    %cst_135 = arith.constant dense<0.000000e+00> : vector<8x256xf32>
    %593 = tpu.matmul %592, %5, %cst_135 {dimension_numbers = #tpu.dot_dimension_numbers<[1], [0], [0], [1], [0, 0, 1, 1], [], []>} : vector<8x128xf32>, vector<128x256xf32>, vector<8x256xf32> -> vector<8x256xf32>
    %594 = vector.broadcast %6 : vector<1x256xf32> to vector<8x256xf32>
    %595 = arith.addf %593, %594 : vector<8x256xf32>
    %596 = arith.index_cast %c15_i32 : i32 to index
    %c0_136 = arith.constant 0 : index
    %c0_137 = arith.constant 0 : index
    %597 = vector.load %arg8[%596, %c0_136, %c0_137] : memref<16x8x256xf32, #tpu.memory_space<vmem>>, vector<1x8x256xf32>
    %598 = vector.shape_cast %597 : vector<1x8x256xf32> to vector<8x256xf32>
    %599 = vector.shape_cast %595 : vector<8x256xf32> to vector<1x8x256xf32>
    tpu.vector_store %arg8[%596, %c0_136, %c0_137], %599 {strides = array<i32>} : memref<16x8x256xf32, #tpu.memory_space<vmem>>, vector<1x8x256xf32>,
    %c16_i32 = arith.constant 16 : i32
    %c0_138 = arith.constant 0 : index
    %c0_139 = arith.constant 0 : index
    %600 = vector.load %arg10[%c0_138, %c0_139] : memref<8x128xf32, #tpu.memory_space<vmem>>, vector<8x128xf32>
    tpu.vector_store %arg10[%c0_138, %c0_139], %592 {strides = array<i32>} : memref<8x128xf32, #tpu.memory_space<vmem>>, vector<8x128xf32>,
    %c0_i32_140 = arith.constant 0 : i32
    %601 = arith.cmpi eq, %arg1, %c0_i32_140 : i32
    %602 = arith.extui %601 : i1 to i32
    %c0_i32_141 = arith.constant 0 : i32
    %603 = arith.cmpi ne, %602, %c0_i32_141 : i32
    scf.if %603 {
      %c0_142 = arith.constant 0 : index
      %c0_143 = arith.constant 0 : index
      %604 = vector.load %arg9[%c0_142, %c0_143] : memref<8x128xf32, #tpu.memory_space<vmem>>, vector<8x128xf32>
      tpu.vector_store %arg9[%c0_142, %c0_143], %592 {strides = array<i32>} : memref<8x128xf32, #tpu.memory_space<vmem>>, vector<8x128xf32>,
    } else {
    }
    return
  }
  func.func @transform_0(%arg0: i32, %arg1: i32) -> (i32, i32, i32) {
    %c0_i32 = arith.constant 0 : i32
    %c0_i32_0 = arith.constant 0 : i32
    return %arg1, %arg0, %c0_i32 : i32, i32, i32
  }
  func.func @transform_1(%arg0: i32, %arg1: i32) -> (i32, i32) {
    %c0_i32 = arith.constant 0 : i32
    %c0_i32_0 = arith.constant 0 : i32
    %c0_i32_1 = arith.constant 0 : i32
    return %c0_i32, %c0_i32_0 : i32, i32
  }
  func.func @transform_2(%arg0: i32, %arg1: i32) -> (i32, i32) {
    %c0_i32 = arith.constant 0 : i32
    %c0_i32_0 = arith.constant 0 : i32
    %c0_i32_1 = arith.constant 0 : i32
    return %c0_i32, %c0_i32_0 : i32, i32
  }
  func.func @transform_3(%arg0: i32, %arg1: i32) -> (i32, i32) {
    %c0_i32 = arith.constant 0 : i32
    %c0_i32_0 = arith.constant 0 : i32
    %c0_i32_1 = arith.constant 0 : i32
    return %c0_i32, %c0_i32_0 : i32, i32
  }
  func.func @transform_4(%arg0: i32, %arg1: i32) -> (i32, i32) {
    %c0_i32 = arith.constant 0 : i32
    %c0_i32_0 = arith.constant 0 : i32
    %c0_i32_1 = arith.constant 0 : i32
    return %c0_i32, %c0_i32_0 : i32, i32
  }
  func.func @transform_5(%arg0: i32, %arg1: i32) -> (i32, i32) {
    %c0_i32 = arith.constant 0 : i32
    %c0_i32_0 = arith.constant 0 : i32
    return %arg0, %c0_i32 : i32, i32
  }
  func.func @transform_6(%arg0: i32, %arg1: i32) -> (i32, i32, i32) {
    %c0_i32 = arith.constant 0 : i32
    %c0_i32_0 = arith.constant 0 : i32
    return %arg1, %arg0, %c0_i32 : i32, i32, i32
  }
  func.func @transform_7(%arg0: i32, %arg1: i32) -> (i32, i32) {
    %c0_i32 = arith.constant 0 : i32
    %c0_i32_0 = arith.constant 0 : i32
    return %arg0, %c0_i32 : i32, i32
  }
}

</mosaic_0001>

<llo_original>
// kernel: _lambda_.1
$region0: #{_lambda_.1}
  #allocation0 [shape = 'u32[]', space=smem, size = 0x4, offset = 0x4, fixed_abs, tag = 'smem constant byte address 0x4 - core index']
  #allocation1 [shape = 'u32[72,128]{1,0:T(1,128)}', space=vmem, size = 0x9000, scoped, tag = 'internal scratch']
  #allocation2 [shape = 'f32[8,128]{1,0:T(8,128)}', space=vmem, size = 0x1000, scoped, tag = 'scratch operand']
  %s0 = inlined_call_operand.vmem [shape: f32[16,16,384], index: 0, kind: input, shape index: {}]
  %s1 = inlined_call_operand.vmem [shape: f32[128,384], index: 1, kind: input, shape index: {}]
  %s2 = inlined_call_operand.vmem [shape: f32[1,384], index: 2, kind: input, shape index: {}]
  %s3 = inlined_call_operand.vmem [shape: f32[128,256], index: 3, kind: input, shape index: {}]
  %s4 = inlined_call_operand.vmem [shape: f32[1,256], index: 4, kind: input, shape index: {}]
  %s5 = inlined_call_operand.vmem [shape: f32[16,128], index: 5, kind: input, shape index: {}]
  %s6 = inlined_call_operand.hbm [shape: f32[16,16,256], index: 6, kind: output, shape index: {0}]
  %s7 = inlined_call_operand.hbm [shape: f32[16,128], index: 7, kind: output, shape index: {1}]
  %8 = xla_tuple %s6, %s7
  %s9 = sld [smem:[#allocation0]]
  $region96: #{_lambda_.1} parent=0
    _
  %s11 = ssub.s32 1, %s9
  %s12 = scalar_select 0, %s11, %s9
  $region1: #{_lambda_.1} parent=0
    #allocation3 [shape = 'u8[393216]{0}', space=vmem, size = 0x60000, scoped, tag = 'input window, operand 0']
    #allocation4 [shape = 'u8[262144]{0}', space=vmem, size = 0x40000, scoped, tag = 'output window, operand 0']
    #allocation5 [shape = 's32[2]{0}', space=sflag, size = 0x8, scoped, tag = 'scoped memory for _lambda_.1']
    #allocation6 [shape = 'u8[8192]{0}', space=vmem, size = 0x2000, scoped, tag = 'output window, operand 1']
    #allocation7 [shape = 's32[2]{0}', space=sflag, size = 0x8, scoped, tag = 'scoped memory for _lambda_.1']
    %13 = vsyncpa [#allocation5], 0
    %s14 = scalar_lea.sflag [#allocation5], 1
    %15 = vsyncpa %s14, 0
    %16 = vsyncpa [#allocation7], 0
    %s17 = scalar_lea.sflag [#allocation7], 1
    %18 = vsyncpa %s17, 0
    loop: start=0, step=1, limit=4
    $region2: #{_lambda_.1} parent=1 // loop_pre_header
      _
    $region3: #{_lambda_.1} parent=1 // loop_header
      %s20 = sphi 0, %s24
      %p21 = scmp.ge.s32.totalorder %s20, 4
      %s27 = sphi 0, %s39
      %s28 = sphi 0, %s35
      %s29 = sphi 0, %s27
      %s30 = sphi 0, %s28
      %s31 = sphi 0, %s29
      %s32 = sphi 0, %s30
      %s44 = sphi 0, %s46
      %s47 = sphi 0, %s44
      %s48 = sphi 0, %s47
      %s64 = sphi 0, %s48
      %s68 = sphi 0, %s68
      %s70 = sphi 0, %s68
      %s71 = sphi 0, %s70
      %s85 = sphi 0, %s71
      %s89 = sphi 0, %s89
      %s91 = sphi 0, %s89
      %s92 = sphi 0, %s91
      %s106 = sphi 0, %s92
      %s110 = sphi 0, %s110
      %s112 = sphi 0, %s110
      %s113 = sphi 0, %s112
      %s127 = sphi 0, %s113
      %s131 = sphi 0, %s131
      %s133 = sphi 0, %s131
      %s134 = sphi 0, %s133
      %s148 = sphi 0, %s134
      %s154 = sphi 0, %s156
      %s157 = sphi 0, %s154
      %s158 = sphi 0, %s157
      %s174 = sphi 0, %s158
      %s182 = sphi 0, %s184
      %s185 = sphi 0, %s182
      %s186 = sphi 0, %s185
      %s202 = sphi 0, %s186
      %s208 = sphi 0, %s210
      %s211 = sphi 0, %s208
      %s212 = sphi 0, %s211
      %s228 = sphi 0, %s212
    $region4: #{_lambda_.1} parent=1 // loop_header_branch
      %23 = sbr.rel (%p21) target = $region8
    $region5: #{_lambda_.1} parent=1 // loop_body
      %s25 = ssub.s32 %s20, 1
      %s26 = ssub.s32 %s20, 2
      %s33 = sadd.s32 1, %s28
      %p34 = scmp.ge.s32.totalorder %s33, 1
      %s35 = scalar_select %p34, 0, %s33
      %s36 = sadd.s32 1, %s27
      %s37 = scalar_select %p34, %s36, %s27
      %p38 = scmp.ge.s32.totalorder %s37, 2
      %s39 = scalar_select %p38, 0, %s37
      %s40 = ssub.s32 %s28, %s35
      %s41 = ssub.s32 %s27, %s39
      %s42 = sor.u32 %s40, %s41
      %p43 = scmp.eq.s32.totalorder %s42, 0
      %s45 = sadd.s32 %s44, 1
      %s46 = scalar_select %p43, %s44, %s45
      %p49 = pneg %p43
      %p50 = scmp.eq.s32.totalorder %s20, 1
      %p51 = por %p49, %p50
      %p52 = scmp.ne.s32.totalorder %s44, %s47
      %p53 = scmp.eq.s32.totalorder %s20, 0
      %p54 = por %p52, %p53
      %p55 = scmp.ne.s32.totalorder %s44, %s47
      %p56 = scmp.eq.s32.totalorder %s25, 1
      %p57 = por %p55, %p56
      %p58 = scmp.ne.s32.totalorder %s47, %s48
      %p59 = scmp.eq.s32.totalorder %s25, 0
      %p60 = por %p58, %p59
      %p61 = scmp.ne.s32.totalorder %s47, %s48
      %p62 = scmp.eq.s32.totalorder %s26, 1
      %p63 = por %p61, %p62
      %p65 = scmp.ne.s32.totalorder %s48, %s64
      %p66 = scmp.eq.s32.totalorder %s26, 0
      %p67 = por %p65, %p66
      %s69 = sadd.s32 %s68, 1
      %p72 = scmp.eq.s32.totalorder %s20, 1
      %p73 = scmp.ne.s32.totalorder %s68, %s70
      %p74 = scmp.eq.s32.totalorder %s20, 0
      %p75 = por %p73, %p74
      %p76 = scmp.ne.s32.totalorder %s68, %s70
      %p77 = scmp.eq.s32.totalorder %s25, 1
      %p78 = por %p76, %p77
      %p79 = scmp.ne.s32.totalorder %s70, %s71
      %p80 = scmp.eq.s32.totalorder %s25, 0
      %p81 = por %p79, %p80
      %p82 = scmp.ne.s32.totalorder %s70, %s71
      %p83 = scmp.eq.s32.totalorder %s26, 1
      %p84 = por %p82, %p83
      %p86 = scmp.ne.s32.totalorder %s71, %s85
      %p87 = scmp.eq.s32.totalorder %s26, 0
      %p88 = por %p86, %p87
      %s90 = sadd.s32 %s89, 1
      %p93 = scmp.eq.s32.totalorder %s20, 1
      %p94 = scmp.ne.s32.totalorder %s89, %s91
      %p95 = scmp.eq.s32.totalorder %s20, 0
      %p96 = por %p94, %p95
      %p97 = scmp.ne.s32.totalorder %s89, %s91
      %p98 = scmp.eq.s32.totalorder %s25, 1
      %p99 = por %p97, %p98
      %p100 = scmp.ne.s32.totalorder %s91, %s92
      %p101 = scmp.eq.s32.totalorder %s25, 0
      %p102 = por %p100, %p101
      %p103 = scmp.ne.s32.totalorder %s91, %s92
      %p104 = scmp.eq.s32.totalorder %s26, 1
      %p105 = por %p103, %p104
      %p107 = scmp.ne.s32.totalorder %s92, %s106
      %p108 = scmp.eq.s32.totalorder %s26, 0
      %p109 = por %p107, %p108
      %s111 = sadd.s32 %s110, 1
      %p114 = scmp.eq.s32.totalorder %s20, 1
      %p115 = scmp.ne.s32.totalorder %s110, %s112
      %p116 = scmp.eq.s32.totalorder %s20, 0
      %p117 = por %p115, %p116
      %p118 = scmp.ne.s32.totalorder %s110, %s112
      %p119 = scmp.eq.s32.totalorder %s25, 1
      %p120 = por %p118, %p119
      %p121 = scmp.ne.s32.totalorder %s112, %s113
      %p122 = scmp.eq.s32.totalorder %s25, 0
      %p123 = por %p121, %p122
      %p124 = scmp.ne.s32.totalorder %s112, %s113
      %p125 = scmp.eq.s32.totalorder %s26, 1
      %p126 = por %p124, %p125
      %p128 = scmp.ne.s32.totalorder %s113, %s127
      %p129 = scmp.eq.s32.totalorder %s26, 0
      %p130 = por %p128, %p129
      %s132 = sadd.s32 %s131, 1
      %p135 = scmp.eq.s32.totalorder %s20, 1
      %p136 = scmp.ne.s32.totalorder %s131, %s133
      %p137 = scmp.eq.s32.totalorder %s20, 0
      %p138 = por %p136, %p137
      %p139 = scmp.ne.s32.totalorder %s131, %s133
      %p140 = scmp.eq.s32.totalorder %s25, 1
      %p141 = por %p139, %p140
      %p142 = scmp.ne.s32.totalorder %s133, %s134
      %p143 = scmp.eq.s32.totalorder %s25, 0
      %p144 = por %p142, %p143
      %p145 = scmp.ne.s32.totalorder %s133, %s134
      %p146 = scmp.eq.s32.totalorder %s26, 1
      %p147 = por %p145, %p146
      %p149 = scmp.ne.s32.totalorder %s134, %s148
      %p150 = scmp.eq.s32.totalorder %s26, 0
      %p151 = por %p149, %p150
      %s152 = ssub.s32 %s27, %s39
      %p153 = scmp.eq.s32.totalorder %s152, 0
      %s155 = sadd.s32 %s154, 1
      %s156 = scalar_select %p153, %s154, %s155
      %p159 = pneg %p153
      %p160 = scmp.eq.s32.totalorder %s20, 1
      %p161 = por %p159, %p160
      %p162 = scmp.ne.s32.totalorder %s154, %s157
      %p163 = scmp.eq.s32.totalorder %s20, 0
      %p164 = por %p162, %p163
      %p165 = scmp.ne.s32.totalorder %s154, %s157
      %p166 = scmp.eq.s32.totalorder %s25, 1
      %p167 = por %p165, %p166
      %p168 = scmp.ne.s32.totalorder %s157, %s158
      %p169 = scmp.eq.s32.totalorder %s25, 0
      %p170 = por %p168, %p169
      %p171 = scmp.ne.s32.totalorder %s157, %s158
      %p172 = scmp.eq.s32.totalorder %s26, 1
      %p173 = por %p171, %p172
      %p175 = scmp.ne.s32.totalorder %s158, %s174
      %p176 = scmp.eq.s32.totalorder %s26, 0
      %p177 = por %p175, %p176
      %s178 = ssub.s32 %s28, %s35
      %s179 = ssub.s32 %s27, %s39
      %s180 = sor.u32 %s178, %s179
      %p181 = scmp.eq.s32.totalorder %s180, 0
      %s183 = sadd.s32 %s182, 1
      %s184 = scalar_select %p181, %s182, %s183
      %p187 = pneg %p181
      %p188 = scmp.eq.s32.totalorder %s20, 1
      %p189 = por %p187, %p188
      %p190 = scmp.ne.s32.totalorder %s182, %s185
      %p191 = scmp.eq.s32.totalorder %s20, 0
      %p192 = por %p190, %p191
      %p193 = scmp.ne.s32.totalorder %s182, %s185
      %p194 = scmp.eq.s32.totalorder %s25, 1
      %p195 = por %p193, %p194
      %p196 = scmp.ne.s32.totalorder %s185, %s186
      %p197 = scmp.eq.s32.totalorder %s25, 0
      %p198 = por %p196, %p197
      %p199 = scmp.ne.s32.totalorder %s185, %s186
      %p200 = scmp.eq.s32.totalorder %s26, 1
      %p201 = por %p199, %p200
      %p203 = scmp.ne.s32.totalorder %s186, %s202
      %p204 = scmp.eq.s32.totalorder %s26, 0
      %p205 = por %p203, %p204
      %s206 = ssub.s32 %s27, %s39
      %p207 = scmp.eq.s32.totalorder %s206, 0
      %s209 = sadd.s32 %s208, 1
      %s210 = scalar_select %p207, %s208, %s209
      %p213 = pneg %p207
      %p214 = scmp.eq.s32.totalorder %s20, 1
      %p215 = por %p213, %p214
      %p216 = scmp.ne.s32.totalorder %s208, %s211
      %p217 = scmp.eq.s32.totalorder %s20, 0
      %p218 = por %p216, %p217
      %p219 = scmp.ne.s32.totalorder %s208, %s211
      %p220 = scmp.eq.s32.totalorder %s25, 1
      %p221 = por %p219, %p220
      %p222 = scmp.ne.s32.totalorder %s211, %s212
      %p223 = scmp.eq.s32.totalorder %s25, 0
      %p224 = por %p222, %p223
      %p225 = scmp.ne.s32.totalorder %s211, %s212
      %p226 = scmp.eq.s32.totalorder %s26, 1
      %p227 = por %p225, %p226
      %p229 = scmp.ne.s32.totalorder %s212, %s228
      %p230 = scmp.eq.s32.totalorder %s26, 0
      %p231 = por %p229, %p230
      %p232 = scmp.le.s32.totalorder 1, %s20
      %p233 = scmp.lt.s32.totalorder %s20, 3
      %p234 = pnand %p232, %p233
      %p235 = pneg %p234
      // Predicated region
      $region9: #{_lambda_.1} parent=5 // pred_check
        _
      $region10: #{_lambda_.1} parent=5 // pred_check_branch
        %237 = sbr.rel (%p234) target = $region12
      $region11: #{_lambda_.1} parent=5 // pred_region
        %s238 = ssub.s32 %s20, 1
        // Predicated region
        $region13: #{_lambda_.1} parent=11 // pred_check
          %p239 = pneg %p81
        $region14: #{_lambda_.1} parent=11 // pred_check_branch
          %241 = sbr.rel (%p239) target = $region16
        $region15: #{_lambda_.1} parent=11 // pred_region
          _
        $region16: #{_lambda_.1} parent=11 // pred_fallthru
          _
        // Predicated region
        $region17: #{_lambda_.1} parent=11 // pred_check
          %p242 = pneg %p102
        $region18: #{_lambda_.1} parent=11 // pred_check_branch
          %244 = sbr.rel (%p242) target = $region20
        $region19: #{_lambda_.1} parent=11 // pred_region
          _
        $region20: #{_lambda_.1} parent=11 // pred_fallthru
          _
        // Predicated region
        $region21: #{_lambda_.1} parent=11 // pred_check
          %p245 = pneg %p123
        $region22: #{_lambda_.1} parent=11 // pred_check_branch
          %247 = sbr.rel (%p245) target = $region24
        $region23: #{_lambda_.1} parent=11 // pred_region
          _
        $region24: #{_lambda_.1} parent=11 // pred_fallthru
          _
        // Predicated region
        $region25: #{_lambda_.1} parent=11 // pred_check
          %p248 = pneg %p144
        $region26: #{_lambda_.1} parent=11 // pred_check_branch
          %250 = sbr.rel (%p248) target = $region28
        $region27: #{_lambda_.1} parent=11 // pred_region
          _
        $region28: #{_lambda_.1} parent=11 // pred_fallthru
          _
      $region12: #{_lambda_.1} parent=5 // pred_fallthru
        _
      %p251 = scmp.lt.s32.totalorder %s20, 2
      // Predicated region
      $region29: #{_lambda_.1} parent=5 // pred_check
        %p252 = pneg %p251
      $region30: #{_lambda_.1} parent=5 // pred_check_branch
        %254 = sbr.rel (%p252) target = $region32
      $region31: #{_lambda_.1} parent=5 // pred_region
        // Predicated region
        $region33: #{_lambda_.1} parent=31 // pred_check
          %p255 = pneg %p54
        $region34: #{_lambda_.1} parent=31 // pred_check_branch
          %257 = sbr.rel (%p255) target = $region36
        $region35: #{_lambda_.1} parent=31 // pred_region
          %s258 = sand.u32 %s44, 1
          %s259 = sand.u32 %s44, 1
          %s260 = smul.addr %s259, 384
          %s261 = scalar_lea.vmem [#allocation3], %s260
          %s262 = smul.u32 16, %s28
          %s263 = smul.addr %s27, 3
          %s264 = smul.addr %s262, 6
          %s265 = sadd.s32 %s263, %s264
          %s266 = smul.addr %s265, 8
          %s267 = scalar_lea.vmem %s0, %s266
          // Predicated region
          $region37: #{_lambda_.1} parent=35 // pred_check
            _
          $region38: #{_lambda_.1} parent=35 // pred_check_branch
            %269 = sbr.rel (0) target = $region40
          $region39: #{_lambda_.1} parent=35 // pred_region
            // Predicated region
            $region41: #{_lambda_.1} parent=39 // pred_check
              _
            $region42: #{_lambda_.1} parent=39 // pred_check_branch
              %271 = sbr.rel (0) target = $region44
            $region43: #{_lambda_.1} parent=39 // pred_region
              loop: start=0, step=1, limit=1
              $region45: #{_lambda_.1} parent=43 // loop_pre_header
                _
              $region46: #{_lambda_.1} parent=43 // loop_header
                %s273 = sphi 0, %s277
                %p274 = scmp.ge.s32.totalorder %s273, 1
                %s278 = sphi %s267, %s267
                %s279 = sphi %s261, %s261
              $region47: #{_lambda_.1} parent=43 // loop_header_branch
                %276 = sbr.rel (%p274) target = $region51
              $region48: #{_lambda_.1} parent=43 // loop_body
                %v280 = vld [vmem:[%s278] sm:$0xff]
                %281 = vst [vmem:[%s279] sm:$0xff] %v280
                %v282 = vld [vmem:[%s278 + $0x8] sm:$0xff]
                %283 = vst [vmem:[%s279 + $0x8] sm:$0xff] %v282
                %v284 = vld [vmem:[%s278 + $0x10] sm:$0xff]
                %285 = vst [vmem:[%s279 + $0x10] sm:$0xff] %v284
                %v286 = vld [vmem:[%s278 + $0x30] sm:$0xff]
                %287 = vst [vmem:[%s279 + $0x18] sm:$0xff] %v286
                %v288 = vld [vmem:[%s278 + $0x38] sm:$0xff]
                %289 = vst [vmem:[%s279 + $0x20] sm:$0xff] %v288
                %v290 = vld [vmem:[%s278 + $0x40] sm:$0xff]
                %291 = vst [vmem:[%s279 + $0x28] sm:$0xff] %v290
                %v292 = vld [vmem:[%s278 + $0x60] sm:$0xff]
                %293 = vst [vmem:[%s279 + $0x30] sm:$0xff] %v292
                %v294 = vld [vmem:[%s278 + $0x68] sm:$0xff]
                %295 = vst [vmem:[%s279 + $0x38] sm:$0xff] %v294
                %v296 = vld [vmem:[%s278 + $0x70] sm:$0xff]
                %297 = vst [vmem:[%s279 + $0x40] sm:$0xff] %v296
                %v298 = vld [vmem:[%s278 + $0x90] sm:$0xff]
                %299 = vst [vmem:[%s279 + $0x48] sm:$0xff] %v298
                %v300 = vld [vmem:[%s278 + $0x98] sm:$0xff]
                %301 = vst [vmem:[%s279 + $0x50] sm:$0xff] %v300
                %v302 = vld [vmem:[%s278 + $0xa0] sm:$0xff]
                %303 = vst [vmem:[%s279 + $0x58] sm:$0xff] %v302
                %v304 = vld [vmem:[%s278 + $0xc0] sm:$0xff]
                %305 = vst [vmem:[%s279 + $0x60] sm:$0xff] %v304
                %v306 = vld [vmem:[%s278 + $0xc8] sm:$0xff]
                %307 = vst [vmem:[%s279 + $0x68] sm:$0xff] %v306
                %v308 = vld [vmem:[%s278 + $0xd0] sm:$0xff]
                %309 = vst [vmem:[%s279 + $0x70] sm:$0xff] %v308
                %v310 = vld [vmem:[%s278 + $0xf0] sm:$0xff]
                %311 = vst [vmem:[%s279 + $0x78] sm:$0xff] %v310
                %v312 = vld [vmem:[%s278 + $0xf8] sm:$0xff]
                %313 = vst [vmem:[%s279 + $0x80] sm:$0xff] %v312
                %v314 = vld [vmem:[%s278 + $0x100] sm:$0xff]
                %315 = vst [vmem:[%s279 + $0x88] sm:$0xff] %v314
                %v316 = vld [vmem:[%s278 + $0x120] sm:$0xff]
                %317 = vst [vmem:[%s279 + $0x90] sm:$0xff] %v316
                %v318 = vld [vmem:[%s278 + $0x128] sm:$0xff]
                %319 = vst [vmem:[%s279 + $0x98] sm:$0xff] %v318
                %v320 = vld [vmem:[%s278 + $0x130] sm:$0xff]
                %321 = vst [vmem:[%s279 + $0xa0] sm:$0xff] %v320
                %v322 = vld [vmem:[%s278 + $0x150] sm:$0xff]
                %323 = vst [vmem:[%s279 + $0xa8] sm:$0xff] %v322
                %v324 = vld [vmem:[%s278 + $0x158] sm:$0xff]
                %325 = vst [vmem:[%s279 + $0xb0] sm:$0xff] %v324
                %v326 = vld [vmem:[%s278 + $0x160] sm:$0xff]
                %327 = vst [vmem:[%s279 + $0xb8] sm:$0xff] %v326
                %v328 = vld [vmem:[%s278 + $0x180] sm:$0xff]
                %329 = vst [vmem:[%s279 + $0xc0] sm:$0xff] %v328
                %v330 = vld [vmem:[%s278 + $0x188] sm:$0xff]
                %331 = vst [vmem:[%s279 + $0xc8] sm:$0xff] %v330
                %v332 = vld [vmem:[%s278 + $0x190] sm:$0xff]
                %333 = vst [vmem:[%s279 + $0xd0] sm:$0xff] %v332
                %v334 = vld [vmem:[%s278 + $0x1b0] sm:$0xff]
                %335 = vst [vmem:[%s279 + $0xd8] sm:$0xff] %v334
                %v336 = vld [vmem:[%s278 + $0x1b8] sm:$0xff]
                %337 = vst [vmem:[%s279 + $0xe0] sm:$0xff] %v336
                %v338 = vld [vmem:[%s278 + $0x1c0] sm:$0xff]
                %339 = vst [vmem:[%s279 + $0xe8] sm:$0xff] %v338
                %v340 = vld [vmem:[%s278 + $0x1e0] sm:$0xff]
                %341 = vst [vmem:[%s279 + $0xf0] sm:$0xff] %v340
                %v342 = vld [vmem:[%s278 + $0x1e8] sm:$0xff]
                %343 = vst [vmem:[%s279 + $0xf8] sm:$0xff] %v342
                %v344 = vld [vmem:[%s278 + $0x1f0] sm:$0xff]
                %345 = vst [vmem:[%s279 + $0x100] sm:$0xff] %v344
                %v346 = vld [vmem:[%s278 + $0x210] sm:$0xff]
                %347 = vst [vmem:[%s279 + $0x108] sm:$0xff] %v346
                %v348 = vld [vmem:[%s278 + $0x218] sm:$0xff]
                %349 = vst [vmem:[%s279 + $0x110] sm:$0xff] %v348
                %v350 = vld [vmem:[%s278 + $0x220] sm:$0xff]
                %351 = vst [vmem:[%s279 + $0x118] sm:$0xff] %v350
                %v352 = vld [vmem:[%s278 + $0x240] sm:$0xff]
                %353 = vst [vmem:[%s279 + $0x120] sm:$0xff] %v352
                %v354 = vld [vmem:[%s278 + $0x248] sm:$0xff]
                %355 = vst [vmem:[%s279 + $0x128] sm:$0xff] %v354
                %v356 = vld [vmem:[%s278 + $0x250] sm:$0xff]
                %357 = vst [vmem:[%s279 + $0x130] sm:$0xff] %v356
                %v358 = vld [vmem:[%s278 + $0x270] sm:$0xff]
                %359 = vst [vmem:[%s279 + $0x138] sm:$0xff] %v358
                %v360 = vld [vmem:[%s278 + $0x278] sm:$0xff]
                %361 = vst [vmem:[%s279 + $0x140] sm:$0xff] %v360
                %v362 = vld [vmem:[%s278 + $0x280] sm:$0xff]
                %363 = vst [vmem:[%s279 + $0x148] sm:$0xff] %v362
                %v364 = vld [vmem:[%s278 + $0x2a0] sm:$0xff]
                %365 = vst [vmem:[%s279 + $0x150] sm:$0xff] %v364
                %v366 = vld [vmem:[%s278 + $0x2a8] sm:$0xff]
                %367 = vst [vmem:[%s279 + $0x158] sm:$0xff] %v366
                %v368 = vld [vmem:[%s278 + $0x2b0] sm:$0xff]
                %369 = vst [vmem:[%s279 + $0x160] sm:$0xff] %v368
                %v370 = vld [vmem:[%s278 + $0x2d0] sm:$0xff]
                %371 = vst [vmem:[%s279 + $0x168] sm:$0xff] %v370
                %v372 = vld [vmem:[%s278 + $0x2d8] sm:$0xff]
                %373 = vst [vmem:[%s279 + $0x170] sm:$0xff] %v372
                %v374 = vld [vmem:[%s278 + $0x2e0] sm:$0xff]
                %375 = vst [vmem:[%s279 + $0x178] sm:$0xff] %v374
              $region49: #{_lambda_.1} parent=43 // loop_footer
                %s277 = sadd.s32 1, %s273
              $region50: #{_lambda_.1} parent=43 // loop_footer_branch
                %272 = sbr.rel target = $region46
              $region51: #{_lambda_.1} parent=43 // loop_exit
                _
            $region44: #{_lambda_.1} parent=39 // pred_fallthru
              _
            // Predicated region
            $region52: #{_lambda_.1} parent=39 // pred_check
              _
            $region53: #{_lambda_.1} parent=39 // pred_check_branch
              %377 = sbr.rel target = $region55
            $region54: #{_lambda_.1} parent=39 // pred_region
              _
            $region55: #{_lambda_.1} parent=39 // pred_fallthru
              _
          $region40: #{_lambda_.1} parent=35 // pred_fallthru
            _
          %378 = vnop
        $region36: #{_lambda_.1} parent=31 // pred_fallthru
          _
        // Predicated region
        $region56: #{_lambda_.1} parent=31 // pred_check
          %p379 = pneg %p164
        $region57: #{_lambda_.1} parent=31 // pred_check_branch
          %381 = sbr.rel (%p379) target = $region59
        $region58: #{_lambda_.1} parent=31 // pred_region
          %p382 = scmp.lt.s32.totalorder %s27, 1
          %s383 = scalar_select %p382, %s27, 1
          %s384 = smul.addr %s383, 8
          %s385 = scalar_lea.vmem %s5, %s384
        $region59: #{_lambda_.1} parent=31 // pred_fallthru
          _
      $region32: #{_lambda_.1} parent=5 // pred_fallthru
        _
      %p386 = scmp.le.s32.totalorder 1, %s20
      %p387 = scmp.lt.s32.totalorder %s20, 3
      %p388 = pnand %p386, %p387
      %p389 = pneg %p388
      // Predicated region
      $region60: #{_lambda_.1} parent=5 // pred_check
        _
      $region61: #{_lambda_.1} parent=5 // pred_check_branch
        %391 = sbr.rel (%p388) target = $region63
      $region62: #{_lambda_.1} parent=5 // pred_region
        %s392 = ssub.s32 %s20, 1
        %s393 = sand.u32 %s47, 1
        %s394 = sand.u32 %s47, 1
        %s395 = smul.addr %s394, 384
        %s396 = scalar_lea.vmem [#allocation3], %s395
        // Predicated region
        $region64: #{_lambda_.1} parent=62 // pred_check
          %p397 = pneg %p60
        $region65: #{_lambda_.1} parent=62 // pred_check_branch
          %399 = sbr.rel (%p397) target = $region67
        $region66: #{_lambda_.1} parent=62 // pred_region
          _
        $region67: #{_lambda_.1} parent=62 // pred_fallthru
          _
        %s400 = sand.u32 %s47, 1
        %s401 = sand.u32 %s47, 1
        %s402 = smul.addr %s401, 384
        %s403 = scalar_lea.vmem [#allocation3], %s402
        %p404 = pneg %p60
        %p405 = pneg %p57
        %p406 = pneg %p81
        %p407 = pneg %p78
        %p408 = pneg %p102
        %p409 = pneg %p99
        %p410 = pneg %p123
        %p411 = pneg %p120
        %p412 = pneg %p144
        %p413 = pneg %p141
        %p414 = scmp.lt.s32.totalorder %s29, 1
        %s415 = scalar_select %p414, %s29, 1
        %s416 = smul.addr %s415, 8
        %s417 = scalar_lea.vmem %s5, %s416
        %p418 = pneg %p170
        %p419 = pneg %p167
        %p420 = pneg %p198
        %p421 = pneg %p195
        %s422 = sand.u32 %s185, 1
        %s423 = scalar_lea.sflag [#allocation5], %s422
        %s424 = sand.u32 %s185, 1
        %s425 = smul.addr %s424, 256
        %s426 = scalar_lea.vmem [#allocation4], %s425
        %p427 = pneg %p224
        %p428 = pneg %p221
        %s429 = sand.u32 %s211, 1
        %s430 = scalar_lea.sflag [#allocation7], %s429
        %s431 = sand.u32 %s211, 1
        %s432 = smul.addr %s431, 8
        %s433 = scalar_lea.vmem [#allocation6], %s432
        %s434 = smul.u32 16, %s30
        %p435 = scmp.lt.s32.totalorder %s29, 1
        %s436 = scalar_select %p435, %s29, 1
        %s437 = smul.addr %s436, 8
        %s438 = scalar_lea.vmem %s5, %s437
        %s439 = smul.u32 16, %s30
        %p440 = scmp.eq.s32.totalorder %s30, 0
        // Predicated region
        $region68: #{_lambda_.1} parent=62 // pred_check
          %p441 = pneg %p440
        $region69: #{_lambda_.1} parent=62 // pred_check_branch
          %443 = sbr.rel (%p441) target = $region71
        $region70: #{_lambda_.1} parent=62 // pred_region
          %v444 = vld [vmem:[%s438] sm:$0xff]
          %445 = vst [vmem:[#allocation2] sm:$0xff] %v444
        $region71: #{_lambda_.1} parent=62 // pred_fallthru
          _
        %v446 = vld [vmem:[%s1] sm:$0xff]
        %v447 = vld [vmem:[%s1 + $0x8] sm:$0xff]
        %v448 = vld [vmem:[%s1 + $0x10] sm:$0xff]
        %v449 = vld [vmem:[%s1 + $0x18] sm:$0xff]
        %v450 = vld [vmem:[%s1 + $0x20] sm:$0xff]
        %v451 = vld [vmem:[%s1 + $0x28] sm:$0xff]
        %v452 = vld [vmem:[%s1 + $0x30] sm:$0xff]
        %v453 = vld [vmem:[%s1 + $0x38] sm:$0xff]
        %v454 = vld [vmem:[%s1 + $0x40] sm:$0xff]
        %v455 = vld [vmem:[%s1 + $0x48] sm:$0xff]
        %v456 = vld [vmem:[%s1 + $0x50] sm:$0xff]
        %v457 = vld [vmem:[%s1 + $0x58] sm:$0xff]
        %v458 = vld [vmem:[%s1 + $0x60] sm:$0xff]
        %v459 = vld [vmem:[%s1 + $0x68] sm:$0xff]
        %v460 = vld [vmem:[%s1 + $0x70] sm:$0xff]
        %v461 = vld [vmem:[%s1 + $0x78] sm:$0xff]
        %v462 = vld [vmem:[%s1 + $0x80] sm:$0xff]
        %v463 = vld [vmem:[%s1 + $0x88] sm:$0xff]
        %v464 = vld [vmem:[%s1 + $0x90] sm:$0xff]
        %v465 = vld [vmem:[%s1 + $0x98] sm:$0xff]
        %v466 = vld [vmem:[%s1 + $0xa0] sm:$0xff]
        %v467 = vld [vmem:[%s1 + $0xa8] sm:$0xff]
        %v468 = vld [vmem:[%s1 + $0xb0] sm:$0xff]
        %v469 = vld [vmem:[%s1 + $0xb8] sm:$0xff]
        %v470 = vld [vmem:[%s1 + $0xc0] sm:$0xff]
        %v471 = vld [vmem:[%s1 + $0xc8] sm:$0xff]
        %v472 = vld [vmem:[%s1 + $0xd0] sm:$0xff]
        %v473 = vld [vmem:[%s1 + $0xd8] sm:$0xff]
        %v474 = vld [vmem:[%s1 + $0xe0] sm:$0xff]
        %v475 = vld [vmem:[%s1 + $0xe8] sm:$0xff]
        %v476 = vld [vmem:[%s1 + $0xf0] sm:$0xff]
        %v477 = vld [vmem:[%s1 + $0xf8] sm:$0xff]
        %v478 = vld [vmem:[%s1 + $0x100] sm:$0xff]
        %v479 = vld [vmem:[%s1 + $0x108] sm:$0xff]
        %v480 = vld [vmem:[%s1 + $0x110] sm:$0xff]
        %v481 = vld [vmem:[%s1 + $0x118] sm:$0xff]
        %v482 = vld [vmem:[%s1 + $0x120] sm:$0xff]
        %v483 = vld [vmem:[%s1 + $0x128] sm:$0xff]
        %v484 = vld [vmem:[%s1 + $0x130] sm:$0xff]
        %v485 = vld [vmem:[%s1 + $0x138] sm:$0xff]
        %v486 = vld [vmem:[%s1 + $0x140] sm:$0xff]
        %v487 = vld [vmem:[%s1 + $0x148] sm:$0xff]
        %v488 = vld [vmem:[%s1 + $0x150] sm:$0xff]
        %v489 = vld [vmem:[%s1 + $0x158] sm:$0xff]
        %v490 = vld [vmem:[%s1 + $0x160] sm:$0xff]
        %v491 = vld [vmem:[%s1 + $0x168] sm:$0xff]
        %v492 = vld [vmem:[%s1 + $0x170] sm:$0xff]
        %v493 = vld [vmem:[%s1 + $0x178] sm:$0xff]
        %v494 = vld [vmem:[%s2] sm:$0x7]
        %v495 = vld [vmem:[%s3] sm:$0xff]
        %v496 = vld [vmem:[%s3 + $0x8] sm:$0xff]
        %v497 = vld [vmem:[%s3 + $0x10] sm:$0xff]
        %v498 = vld [vmem:[%s3 + $0x18] sm:$0xff]
        %v499 = vld [vmem:[%s3 + $0x20] sm:$0xff]
        %v500 = vld [vmem:[%s3 + $0x28] sm:$0xff]
        %v501 = vld [vmem:[%s3 + $0x30] sm:$0xff]
        %v502 = vld [vmem:[%s3 + $0x38] sm:$0xff]
        %v503 = vld [vmem:[%s3 + $0x40] sm:$0xff]
        %v504 = vld [vmem:[%s3 + $0x48] sm:$0xff]
        %v505 = vld [vmem:[%s3 + $0x50] sm:$0xff]
        %v506 = vld [vmem:[%s3 + $0x58] sm:$0xff]
        %v507 = vld [vmem:[%s3 + $0x60] sm:$0xff]
        %v508 = vld [vmem:[%s3 + $0x68] sm:$0xff]
        %v509 = vld [vmem:[%s3 + $0x70] sm:$0xff]
        %v510 = vld [vmem:[%s3 + $0x78] sm:$0xff]
        %v511 = vld [vmem:[%s3 + $0x80] sm:$0xff]
        %v512 = vld [vmem:[%s3 + $0x88] sm:$0xff]
        %v513 = vld [vmem:[%s3 + $0x90] sm:$0xff]
        %v514 = vld [vmem:[%s3 + $0x98] sm:$0xff]
        %v515 = vld [vmem:[%s3 + $0xa0] sm:$0xff]
        %v516 = vld [vmem:[%s3 + $0xa8] sm:$0xff]
        %v517 = vld [vmem:[%s3 + $0xb0] sm:$0xff]
        %v518 = vld [vmem:[%s3 + $0xb8] sm:$0xff]
        %v519 = vld [vmem:[%s3 + $0xc0] sm:$0xff]
        %v520 = vld [vmem:[%s3 + $0xc8] sm:$0xff]
        %v521 = vld [vmem:[%s3 + $0xd0] sm:$0xff]
        %v522 = vld [vmem:[%s3 + $0xd8] sm:$0xff]
        %v523 = vld [vmem:[%s3 + $0xe0] sm:$0xff]
        %v524 = vld [vmem:[%s3 + $0xe8] sm:$0xff]
        %v525 = vld [vmem:[%s3 + $0xf0] sm:$0xff]
        %v526 = vld [vmem:[%s3 + $0xf8] sm:$0xff]
        %v527 = vld [vmem:[%s4] sm:$0x3]
        %v528 = vld [vmem:[#allocation2] sm:$0xff]
        %v529 = vld [vmem:[%s396] sm:$0xff]
        %v530 = vld [vmem:[%s396 + $0x8] sm:$0xff]
        %v531 = vld [vmem:[%s396 + $0x10] sm:$0xff]
        %v533 = vperm.slane %v494, 0
        %v534 = vperm.slane %v494, 1
        %v535 = vperm.slane %v494, 2
        %539 = vmatpush.msra.mxu0 %v491
        %540 = vmatpush.msra.mxu0 %v488
        %541 = vmatpush.msra.mxu0 %v485
        %542 = vmatpush.msra.mxu0 %v482
        %543 = vmatpush.msra.mxu0 %v479
        %544 = vmatpush.msra.mxu0 %v476
        %545 = vmatpush.msra.mxu0 %v473
        %546 = vmatpush.msra.mxu0 %v470
        %547 = vmatpush.msra.mxu0 %v467
        %548 = vmatpush.msra.mxu0 %v464
        %549 = vmatpush.msra.mxu0 %v461
        %550 = vmatpush.msra.mxu0 %v458
        %551 = vmatpush.msra.mxu0 %v455
        %552 = vmatpush.msra.mxu0 %v452
        %553 = vmatpush.msra.mxu0 %v449
        %554 = vmatpush.msra.mxu0 %v446
        %555 = vmatmul.f32.gmra.mxu0 %v528
        %v556 = vpop.f32.mrf.mxu0
        %v557 = vadd.f32 %v533, %v556
        %558 = vdwg.mxu0
        %559 = vmatpush.msra.mxu0 %v492
        %560 = vmatpush.msra.mxu0 %v489
        %561 = vmatpush.msra.mxu0 %v486
        %562 = vmatpush.msra.mxu0 %v483
        %563 = vmatpush.msra.mxu0 %v480
        %564 = vmatpush.msra.mxu0 %v477
        %565 = vmatpush.msra.mxu0 %v474
        %566 = vmatpush.msra.mxu0 %v471
        %567 = vmatpush.msra.mxu0 %v468
        %568 = vmatpush.msra.mxu0 %v465
        %569 = vmatpush.msra.mxu0 %v462
        %570 = vmatpush.msra.mxu0 %v459
        %571 = vmatpush.msra.mxu0 %v456
        %572 = vmatpush.msra.mxu0 %v453
        %573 = vmatpush.msra.mxu0 %v450
        %574 = vmatpush.msra.mxu0 %v447
        %575 = vmatmul.f32.gmra.mxu0 %v528
        %v576 = vpop.f32.mrf.mxu0
        %v577 = vadd.f32 %v534, %v576
        %578 = vdwg.mxu0
        %579 = vmatpush.msra.mxu0 %v493
        %580 = vmatpush.msra.mxu0 %v490
        %581 = vmatpush.msra.mxu0 %v487
        %582 = vmatpush.msra.mxu0 %v484
        %583 = vmatpush.msra.mxu0 %v481
        %584 = vmatpush.msra.mxu0 %v478
        %585 = vmatpush.msra.mxu0 %v475
        %586 = vmatpush.msra.mxu0 %v472
        %587 = vmatpush.msra.mxu0 %v469
        %588 = vmatpush.msra.mxu0 %v466
        %589 = vmatpush.msra.mxu0 %v463
        %590 = vmatpush.msra.mxu0 %v460
        %591 = vmatpush.msra.mxu0 %v457
        %592 = vmatpush.msra.mxu0 %v454
        %593 = vmatpush.msra.mxu0 %v451
        %594 = vmatpush.msra.mxu0 %v448
        %595 = vmatmul.f32.gmra.mxu0 %v528
        %v596 = vpop.f32.mrf.mxu0
        %v597 = vadd.f32 %v535, %v596
        %598 = vdwg.mxu0
        %v599 = vadd.f32 %v529, %v557
        %v600 = vxor.u32 %v599, 2147483648
        %v601 = vmul.f32 %v600, 1.442695
        %v602 = vpow.pop %v601
        %v603 = vadd.f32 %v602, 1.0
        %v604 = vrcp.pop %v603
        %v605 = vmul.f32 %v603, %v604
        %v606 = vsub.f32 1.0, %v605
        %v607 = vmul.f32 %v604, %v606
        %v608 = vadd.f32 %v604, %v607
        %vm609 = vweird.f32 %v603
        %vm610 = vweird.f32 %v604
        %vm611 = vmor %vm609, %vm610
        %v612 = vsel %vm611, %v604, %v608
        %v613 = vand.u32 2147483647, %v603
        %vm614 = vcmp.eq.f32.partialorder %v613, 8.507059e+37
        %v615 = vand.u32 %v603, 2147483648
        %v616 = vor.u32 1.1754944e-38, %v615
        %v617 = vsel %vm614, %v616, %v612
        %v618 = vmul.f32 1.0, %v617
        %v619 = vadd.f32 %v530, %v577
        %v620 = vxor.u32 %v619, 2147483648
        %v621 = vmul.f32 %v620, 1.442695
        %v622 = vpow.pop %v621
        %v623 = vadd.f32 %v622, 1.0
        %v624 = vrcp.pop %v623
        %v625 = vmul.f32 %v623, %v624
        %v626 = vsub.f32 1.0, %v625
        %v627 = vmul.f32 %v624, %v626
        %v628 = vadd.f32 %v624, %v627
        %vm629 = vweird.f32 %v623
        %vm630 = vweird.f32 %v624
        %vm631 = vmor %vm629, %vm630
        %v632 = vsel %vm631, %v624, %v628
        %v633 = vand.u32 2147483647, %v623
        %vm634 = vcmp.eq.f32.partialorder %v633, 8.507059e+37
        %v635 = vand.u32 %v623, 2147483648
        %v636 = vor.u32 1.1754944e-38, %v635
        %v637 = vsel %vm634, %v636, %v632
        %v638 = vmul.f32 1.0, %v637
        %v639 = vmul.f32 %v618, %v597
        %v640 = vadd.f32 %v531, %v639
        %v641 = vtanh.pop %v640
        %v642 = vsub.f32 %v528, %v641
        %v643 = vmul.f32 %v638, %v642
        %v644 = vadd.f32 %v641, %v643
        %v646 = vperm.slane %v527, 0
        %v647 = vperm.slane %v527, 1
        %650 = vmatpush.msra.mxu0 %v525
        %651 = vmatpush.msra.mxu0 %v523
        %652 = vmatpush.msra.mxu0 %v521
        %653 = vmatpush.msra.mxu0 %v519
        %654 = vmatpush.msra.mxu0 %v517
        %655 = vmatpush.msra.mxu0 %v515
        %656 = vmatpush.msra.mxu0 %v513
        %657 = vmatpush.msra.mxu0 %v511
        %658 = vmatpush.msra.mxu0 %v509
        %659 = vmatpush.msra.mxu0 %v507
        %660 = vmatpush.msra.mxu0 %v505
        %661 = vmatpush.msra.mxu0 %v503
        %662 = vmatpush.msra.mxu0 %v501
        %663 = vmatpush.msra.mxu0 %v499
        %664 = vmatpush.msra.mxu0 %v497
        %665 = vmatpush.msra.mxu0 %v495
        %666 = vmatmul.f32.gmra.mxu0 %v644
        %v667 = vpop.f32.mrf.mxu0
        %v668 = vadd.f32 %v646, %v667
        %669 = vdwg.mxu0
        %670 = vmatpush.msra.mxu0 %v526
        %671 = vmatpush.msra.mxu0 %v524
        %672 = vmatpush.msra.mxu0 %v522
        %673 = vmatpush.msra.mxu0 %v520
        %674 = vmatpush.msra.mxu0 %v518
        %675 = vmatpush.msra.mxu0 %v516
        %676 = vmatpush.msra.mxu0 %v514
        %677 = vmatpush.msra.mxu0 %v512
        %678 = vmatpush.msra.mxu0 %v510
        %679 = vmatpush.msra.mxu0 %v508
        %680 = vmatpush.msra.mxu0 %v506
        %681 = vmatpush.msra.mxu0 %v504
        %682 = vmatpush.msra.mxu0 %v502
        %683 = vmatpush.msra.mxu0 %v500
        %684 = vmatpush.msra.mxu0 %v498
        %685 = vmatpush.msra.mxu0 %v496
        %686 = vmatmul.f32.gmra.mxu0 %v644
        %v687 = vpop.f32.mrf.mxu0
        %v688 = vadd.f32 %v647, %v687
        %689 = vdwg.mxu0
        %690 = vst [vmem:[%s426] sm:$0xff] %v668
        %691 = vst [vmem:[%s426 + $0x8] sm:$0xff] %v688
        %s692 = scalar_lea.vmem %s396, 24 [#allocation3]
        %v693 = vld [vmem:[%s692] sm:$0xff]
        %v694 = vld [vmem:[%s692 + $0x8] sm:$0xff]
        %v695 = vld [vmem:[%s692 + $0x10] sm:$0xff]
        %696 = vmatpush.msra.mxu0 %v491
        %697 = vmatpush.msra.mxu0 %v488
        %698 = vmatpush.msra.mxu0 %v485
        %699 = vmatpush.msra.mxu0 %v482
        %700 = vmatpush.msra.mxu0 %v479
        %701 = vmatpush.msra.mxu0 %v476
        %702 = vmatpush.msra.mxu0 %v473
        %703 = vmatpush.msra.mxu0 %v470
        %704 = vmatpush.msra.mxu0 %v467
        %705 = vmatpush.msra.mxu0 %v464
        %706 = vmatpush.msra.mxu0 %v461
        %707 = vmatpush.msra.mxu0 %v458
        %708 = vmatpush.msra.mxu0 %v455
        %709 = vmatpush.msra.mxu0 %v452
        %710 = vmatpush.msra.mxu0 %v449
        %711 = vmatpush.msra.mxu0 %v446
        %712 = vmatmul.f32.gmra.mxu0 %v644
        %v713 = vpop.f32.mrf.mxu0
        %v714 = vadd.f32 %v533, %v713
        %715 = vdwg.mxu0
        %716 = vmatpush.msra.mxu0 %v492
        %717 = vmatpush.msra.mxu0 %v489
        %718 = vmatpush.msra.mxu0 %v486
        %719 = vmatpush.msra.mxu0 %v483
        %720 = vmatpush.msra.mxu0 %v480
        %721 = vmatpush.msra.mxu0 %v477
        %722 = vmatpush.msra.mxu0 %v474
        %723 = vmatpush.msra.mxu0 %v471
        %724 = vmatpush.msra.mxu0 %v468
        %725 = vmatpush.msra.mxu0 %v465
        %726 = vmatpush.msra.mxu0 %v462
        %727 = vmatpush.msra.mxu0 %v459
        %728 = vmatpush.msra.mxu0 %v456
        %729 = vmatpush.msra.mxu0 %v453
        %730 = vmatpush.msra.mxu0 %v450
        %731 = vmatpush.msra.mxu0 %v447
        %732 = vmatmul.f32.gmra.mxu0 %v644
        %v733 = vpop.f32.mrf.mxu0
        %v734 = vadd.f32 %v534, %v733
        %735 = vdwg.mxu0
        %736 = vmatpush.msra.mxu0 %v493
        %737 = vmatpush.msra.mxu0 %v490
        %738 = vmatpush.msra.mxu0 %v487
        %739 = vmatpush.msra.mxu0 %v484
        %740 = vmatpush.msra.mxu0 %v481
        %741 = vmatpush.msra.mxu0 %v478
        %742 = vmatpush.msra.mxu0 %v475
        %743 = vmatpush.msra.mxu0 %v472
        %744 = vmatpush.msra.mxu0 %v469
        %745 = vmatpush.msra.mxu0 %v466
        %746 = vmatpush.msra.mxu0 %v463
        %747 = vmatpush.msra.mxu0 %v460
        %748 = vmatpush.msra.mxu0 %v457
        %749 = vmatpush.msra.mxu0 %v454
        %750 = vmatpush.msra.mxu0 %v451
        %751 = vmatpush.msra.mxu0 %v448
        %752 = vmatmul.f32.gmra.mxu0 %v644
        %v753 = vpop.f32.mrf.mxu0
        %v754 = vadd.f32 %v535, %v753
        %755 = vdwg.mxu0
        %v756 = vadd.f32 %v693, %v714
        %v757 = vxor.u32 %v756, 2147483648
        %v758 = vmul.f32 %v757, 1.442695
        %v759 = vpow.pop %v758
        %v760 = vadd.f32 %v759, 1.0
        %v761 = vrcp.pop %v760
        %v762 = vmul.f32 %v760, %v761
        %v763 = vsub.f32 1.0, %v762
        %v764 = vmul.f32 %v761, %v763
        %v765 = vadd.f32 %v761, %v764
        %vm766 = vweird.f32 %v760
        %vm767 = vweird.f32 %v761
        %vm768 = vmor %vm766, %vm767
        %v769 = vsel %vm768, %v761, %v765
        %v770 = vand.u32 2147483647, %v760
        %vm771 = vcmp.eq.f32.partialorder %v770, 8.507059e+37
        %v772 = vand.u32 %v760, 2147483648
        %v773 = vor.u32 1.1754944e-38, %v772
        %v774 = vsel %vm771, %v773, %v769
        %v775 = vmul.f32 1.0, %v774
        %v776 = vadd.f32 %v694, %v734
        %v777 = vxor.u32 %v776, 2147483648
        %v778 = vmul.f32 %v777, 1.442695
        %v779 = vpow.pop %v778
        %v780 = vadd.f32 %v779, 1.0
        %v781 = vrcp.pop %v780
        %v782 = vmul.f32 %v780, %v781
        %v783 = vsub.f32 1.0, %v782
        %v784 = vmul.f32 %v781, %v783
        %v785 = vadd.f32 %v781, %v784
        %vm786 = vweird.f32 %v780
        %vm787 = vweird.f32 %v781
        %vm788 = vmor %vm786, %vm787
        %v789 = vsel %vm788, %v781, %v785
        %v790 = vand.u32 2147483647, %v780
        %vm791 = vcmp.eq.f32.partialorder %v790, 8.507059e+37
        %v792 = vand.u32 %v780, 2147483648
        %v793 = vor.u32 1.1754944e-38, %v792
        %v794 = vsel %vm791, %v793, %v789
        %v795 = vmul.f32 1.0, %v794
        %v796 = vmul.f32 %v775, %v754
        %v797 = vadd.f32 %v695, %v796
        %v798 = vtanh.pop %v797
        %v799 = vsub.f32 %v644, %v798
        %v800 = vmul.f32 %v795, %v799
        %v801 = vadd.f32 %v798, %v800
        %802 = vmatpush.msra.mxu0 %v525
        %803 = vmatpush.msra.mxu0 %v523
        %804 = vmatpush.msra.mxu0 %v521
        %805 = vmatpush.msra.mxu0 %v519
        %806 = vmatpush.msra.mxu0 %v517
        %807 = vmatpush.msra.mxu0 %v515
        %808 = vmatpush.msra.mxu0 %v513
        %809 = vmatpush.msra.mxu0 %v511
        %810 = vmatpush.msra.mxu0 %v509
        %811 = vmatpush.msra.mxu0 %v507
        %812 = vmatpush.msra.mxu0 %v505
        %813 = vmatpush.msra.mxu0 %v503
        %814 = vmatpush.msra.mxu0 %v501
        %815 = vmatpush.msra.mxu0 %v499
        %816 = vmatpush.msra.mxu0 %v497
        %817 = vmatpush.msra.mxu0 %v495
        %818 = vmatmul.f32.gmra.mxu0 %v801
        %v819 = vpop.f32.mrf.mxu0
        %v820 = vadd.f32 %v646, %v819
        %821 = vdwg.mxu0
        %822 = vmatpush.msra.mxu0 %v526
        %823 = vmatpush.msra.mxu0 %v524
        %824 = vmatpush.msra.mxu0 %v522
        %825 = vmatpush.msra.mxu0 %v520
        %826 = vmatpush.msra.mxu0 %v518
        %827 = vmatpush.msra.mxu0 %v516
        %828 = vmatpush.msra.mxu0 %v514
        %829 = vmatpush.msra.mxu0 %v512
        %830 = vmatpush.msra.mxu0 %v510
        %831 = vmatpush.msra.mxu0 %v508
        %832 = vmatpush.msra.mxu0 %v506
        %833 = vmatpush.msra.mxu0 %v504
        %834 = vmatpush.msra.mxu0 %v502
        %835 = vmatpush.msra.mxu0 %v500
        %836 = vmatpush.msra.mxu0 %v498
        %837 = vmatpush.msra.mxu0 %v496
        %838 = vmatmul.f32.gmra.mxu0 %v801
        %v839 = vpop.f32.mrf.mxu0
        %v840 = vadd.f32 %v647, %v839
        %841 = vdwg.mxu0
        %s842 = scalar_lea.vmem %s426, 16 [#allocation4]
        %843 = vst [vmem:[%s842] sm:$0xff] %v820
        %844 = vst [vmem:[%s842 + $0x8] sm:$0xff] %v840
        %s845 = scalar_lea.vmem %s396, 48 [#allocation3]
        %v846 = vld [vmem:[%s845] sm:$0xff]
        %v847 = vld [vmem:[%s845 + $0x8] sm:$0xff]
        %v848 = vld [vmem:[%s845 + $0x10] sm:$0xff]
        %849 = vmatpush.msra.mxu0 %v491
        %850 = vmatpush.msra.mxu0 %v488
        %851 = vmatpush.msra.mxu0 %v485
        %852 = vmatpush.msra.mxu0 %v482
        %853 = vmatpush.msra.mxu0 %v479
        %854 = vmatpush.msra.mxu0 %v476
        %855 = vmatpush.msra.mxu0 %v473
        %856 = vmatpush.msra.mxu0 %v470
        %857 = vmatpush.msra.mxu0 %v467
        %858 = vmatpush.msra.mxu0 %v464
        %859 = vmatpush.msra.mxu0 %v461
        %860 = vmatpush.msra.mxu0 %v458
        %861 = vmatpush.msra.mxu0 %v455
        %862 = vmatpush.msra.mxu0 %v452
        %863 = vmatpush.msra.mxu0 %v449
        %864 = vmatpush.msra.mxu0 %v446
        %865 = vmatmul.f32.gmra.mxu0 %v801
        %v866 = vpop.f32.mrf.mxu0
        %v867 = vadd.f32 %v533, %v866
        %868 = vdwg.mxu0
        %869 = vmatpush.msra.mxu0 %v492
        %870 = vmatpush.msra.mxu0 %v489
        %871 = vmatpush.msra.mxu0 %v486
        %872 = vmatpush.msra.mxu0 %v483
        %873 = vmatpush.msra.mxu0 %v480
        %874 = vmatpush.msra.mxu0 %v477
        %875 = vmatpush.msra.mxu0 %v474
        %876 = vmatpush.msra.mxu0 %v471
        %877 = vmatpush.msra.mxu0 %v468
        %878 = vmatpush.msra.mxu0 %v465
        %879 = vmatpush.msra.mxu0 %v462
        %880 = vmatpush.msra.mxu0 %v459
        %881 = vmatpush.msra.mxu0 %v456
        %882 = vmatpush.msra.mxu0 %v453
        %883 = vmatpush.msra.mxu0 %v450
        %884 = vmatpush.msra.mxu0 %v447
        %885 = vmatmul.f32.gmra.mxu0 %v801
        %v886 = vpop.f32.mrf.mxu0
        %v887 = vadd.f32 %v534, %v886
        %888 = vdwg.mxu0
        %889 = vmatpush.msra.mxu0 %v493
        %890 = vmatpush.msra.mxu0 %v490
        %891 = vmatpush.msra.mxu0 %v487
        %892 = vmatpush.msra.mxu0 %v484
        %893 = vmatpush.msra.mxu0 %v481
        %894 = vmatpush.msra.mxu0 %v478
        %895 = vmatpush.msra.mxu0 %v475
        %896 = vmatpush.msra.mxu0 %v472
        %897 = vmatpush.msra.mxu0 %v469
        %898 = vmatpush.msra.mxu0 %v466
        %899 = vmatpush.msra.mxu0 %v463
        %900 = vmatpush.msra.mxu0 %v460
        %901 = vmatpush.msra.mxu0 %v457
        %902 = vmatpush.msra.mxu0 %v454
        %903 = vmatpush.msra.mxu0 %v451
        %904 = vmatpush.msra.mxu0 %v448
        %905 = vmatmul.f32.gmra.mxu0 %v801
        %v906 = vpop.f32.mrf.mxu0
        %v907 = vadd.f32 %v535, %v906
        %908 = vdwg.mxu0
        %v909 = vadd.f32 %v846, %v867
        %v910 = vxor.u32 %v909, 2147483648
        %v911 = vmul.f32 %v910, 1.442695
        %v912 = vpow.pop %v911
        %v913 = vadd.f32 %v912, 1.0
        %v914 = vrcp.pop %v913
        %v915 = vmul.f32 %v913, %v914
        %v916 = vsub.f32 1.0, %v915
        %v917 = vmul.f32 %v914, %v916
        %v918 = vadd.f32 %v914, %v917
        %vm919 = vweird.f32 %v913
        %vm920 = vweird.f32 %v914
        %vm921 = vmor %vm919, %vm920
        %v922 = vsel %vm921, %v914, %v918
        %v923 = vand.u32 2147483647, %v913
        %vm924 = vcmp.eq.f32.partialorder %v923, 8.507059e+37
        %v925 = vand.u32 %v913, 2147483648
        %v926 = vor.u32 1.1754944e-38, %v925
        %v927 = vsel %vm924, %v926, %v922
        %v928 = vmul.f32 1.0, %v927
        %v929 = vadd.f32 %v847, %v887
        %v930 = vxor.u32 %v929, 2147483648
        %v931 = vmul.f32 %v930, 1.442695
        %v932 = vpow.pop %v931
        %v933 = vadd.f32 %v932, 1.0
        %v934 = vrcp.pop %v933
        %v935 = vmul.f32 %v933, %v934
        %v936 = vsub.f32 1.0, %v935
        %v937 = vmul.f32 %v934, %v936
        %v938 = vadd.f32 %v934, %v937
        %vm939 = vweird.f32 %v933
        %vm940 = vweird.f32 %v934
        %vm941 = vmor %vm939, %vm940
        %v942 = vsel %vm941, %v934, %v938
        %v943 = vand.u32 2147483647, %v933
        %vm944 = vcmp.eq.f32.partialorder %v943, 8.507059e+37
        %v945 = vand.u32 %v933, 2147483648
        %v946 = vor.u32 1.1754944e-38, %v945
        %v947 = vsel %vm944, %v946, %v942
        %v948 = vmul.f32 1.0, %v947
        %v949 = vmul.f32 %v928, %v907
        %v950 = vadd.f32 %v848, %v949
        %v951 = vtanh.pop %v950
        %v952 = vsub.f32 %v801, %v951
        %v953 = vmul.f32 %v948, %v952
        %v954 = vadd.f32 %v951, %v953
        %955 = vmatpush.msra.mxu0 %v525
        %956 = vmatpush.msra.mxu0 %v523
        %957 = vmatpush.msra.mxu0 %v521
        %958 = vmatpush.msra.mxu0 %v519
        %959 = vmatpush.msra.mxu0 %v517
        %960 = vmatpush.msra.mxu0 %v515
        %961 = vmatpush.msra.mxu0 %v513
        %962 = vmatpush.msra.mxu0 %v511
        %963 = vmatpush.msra.mxu0 %v509
        %964 = vmatpush.msra.mxu0 %v507
        %965 = vmatpush.msra.mxu0 %v505
        %966 = vmatpush.msra.mxu0 %v503
        %967 = vmatpush.msra.mxu0 %v501
        %968 = vmatpush.msra.mxu0 %v499
        %969 = vmatpush.msra.mxu0 %v497
        %970 = vmatpush.msra.mxu0 %v495
        %971 = vmatmul.f32.gmra.mxu0 %v954
        %v972 = vpop.f32.mrf.mxu0
        %v973 = vadd.f32 %v646, %v972
        %974 = vdwg.mxu0
        %975 = vmatpush.msra.mxu0 %v526
        %976 = vmatpush.msra.mxu0 %v524
        %977 = vmatpush.msra.mxu0 %v522
        %978 = vmatpush.msra.mxu0 %v520
        %979 = vmatpush.msra.mxu0 %v518
        %980 = vmatpush.msra.mxu0 %v516
        %981 = vmatpush.msra.mxu0 %v514
        %982 = vmatpush.msra.mxu0 %v512
        %983 = vmatpush.msra.mxu0 %v510
        %984 = vmatpush.msra.mxu0 %v508
        %985 = vmatpush.msra.mxu0 %v506
        %986 = vmatpush.msra.mxu0 %v504
        %987 = vmatpush.msra.mxu0 %v502
        %988 = vmatpush.msra.mxu0 %v500
        %989 = vmatpush.msra.mxu0 %v498
        %990 = vmatpush.msra.mxu0 %v496
        %991 = vmatmul.f32.gmra.mxu0 %v954
        %v992 = vpop.f32.mrf.mxu0
        %v993 = vadd.f32 %v647, %v992
        %994 = vdwg.mxu0
        %s995 = scalar_lea.vmem %s426, 32 [#allocation4]
        %996 = vst [vmem:[%s995] sm:$0xff] %v973
        %997 = vst [vmem:[%s995 + $0x8] sm:$0xff] %v993
        %s998 = scalar_lea.vmem %s396, 72 [#allocation3]
        %v999 = vld [vmem:[%s998] sm:$0xff]
        %v1000 = vld [vmem:[%s998 + $0x8] sm:$0xff]
        %v1001 = vld [vmem:[%s998 + $0x10] sm:$0xff]
        %1002 = vmatpush.msra.mxu0 %v491
        %1003 = vmatpush.msra.mxu0 %v488
        %1004 = vmatpush.msra.mxu0 %v485
        %1005 = vmatpush.msra.mxu0 %v482
        %1006 = vmatpush.msra.mxu0 %v479
        %1007 = vmatpush.msra.mxu0 %v476
        %1008 = vmatpush.msra.mxu0 %v473
        %1009 = vmatpush.msra.mxu0 %v470
        %1010 = vmatpush.msra.mxu0 %v467
        %1011 = vmatpush.msra.mxu0 %v464
        %1012 = vmatpush.msra.mxu0 %v461
        %1013 = vmatpush.msra.mxu0 %v458
        %1014 = vmatpush.msra.mxu0 %v455
        %1015 = vmatpush.msra.mxu0 %v452
        %1016 = vmatpush.msra.mxu0 %v449
        %1017 = vmatpush.msra.mxu0 %v446
        %1018 = vmatmul.f32.gmra.mxu0 %v954
        %v1019 = vpop.f32.mrf.mxu0
        %v1020 = vadd.f32 %v533, %v1019
        %1021 = vdwg.mxu0
        %1022 = vmatpush.msra.mxu0 %v492
        %1023 = vmatpush.msra.mxu0 %v489
        %1024 = vmatpush.msra.mxu0 %v486
        %1025 = vmatpush.msra.mxu0 %v483
        %1026 = vmatpush.msra.mxu0 %v480
        %1027 = vmatpush.msra.mxu0 %v477
        %1028 = vmatpush.msra.mxu0 %v474
        %1029 = vmatpush.msra.mxu0 %v471
        %1030 = vmatpush.msra.mxu0 %v468
        %1031 = vmatpush.msra.mxu0 %v465
        %1032 = vmatpush.msra.mxu0 %v462
        %1033 = vmatpush.msra.mxu0 %v459
        %1034 = vmatpush.msra.mxu0 %v456
        %1035 = vmatpush.msra.mxu0 %v453
        %1036 = vmatpush.msra.mxu0 %v450
        %1037 = vmatpush.msra.mxu0 %v447
        %1038 = vmatmul.f32.gmra.mxu0 %v954
        %v1039 = vpop.f32.mrf.mxu0
        %v1040 = vadd.f32 %v534, %v1039
        %1041 = vdwg.mxu0
        %1042 = vmatpush.msra.mxu0 %v493
        %1043 = vmatpush.msra.mxu0 %v490
        %1044 = vmatpush.msra.mxu0 %v487
        %1045 = vmatpush.msra.mxu0 %v484
        %1046 = vmatpush.msra.mxu0 %v481
        %1047 = vmatpush.msra.mxu0 %v478
        %1048 = vmatpush.msra.mxu0 %v475
        %1049 = vmatpush.msra.mxu0 %v472
        %1050 = vmatpush.msra.mxu0 %v469
        %1051 = vmatpush.msra.mxu0 %v466
        %1052 = vmatpush.msra.mxu0 %v463
        %1053 = vmatpush.msra.mxu0 %v460
        %1054 = vmatpush.msra.mxu0 %v457
        %1055 = vmatpush.msra.mxu0 %v454
        %1056 = vmatpush.msra.mxu0 %v451
        %1057 = vmatpush.msra.mxu0 %v448
        %1058 = vmatmul.f32.gmra.mxu0 %v954
        %v1059 = vpop.f32.mrf.mxu0
        %v1060 = vadd.f32 %v535, %v1059
        %1061 = vdwg.mxu0
        %v1062 = vadd.f32 %v999, %v1020
        %v1063 = vxor.u32 %v1062, 2147483648
        %v1064 = vmul.f32 %v1063, 1.442695
        %v1065 = vpow.pop %v1064
        %v1066 = vadd.f32 %v1065, 1.0
        %v1067 = vrcp.pop %v1066
        %v1068 = vmul.f32 %v1066, %v1067
        %v1069 = vsub.f32 1.0, %v1068
        %v1070 = vmul.f32 %v1067, %v1069
        %v1071 = vadd.f32 %v1067, %v1070
        %vm1072 = vweird.f32 %v1066
        %vm1073 = vweird.f32 %v1067
        %vm1074 = vmor %vm1072, %vm1073
        %v1075 = vsel %vm1074, %v1067, %v1071
        %v1076 = vand.u32 2147483647, %v1066
        %vm1077 = vcmp.eq.f32.partialorder %v1076, 8.507059e+37
        %v1078 = vand.u32 %v1066, 2147483648
        %v1079 = vor.u32 1.1754944e-38, %v1078
        %v1080 = vsel %vm1077, %v1079, %v1075
        %v1081 = vmul.f32 1.0, %v1080
        %v1082 = vadd.f32 %v1000, %v1040
        %v1083 = vxor.u32 %v1082, 2147483648
        %v1084 = vmul.f32 %v1083, 1.442695
        %v1085 = vpow.pop %v1084
        %v1086 = vadd.f32 %v1085, 1.0
        %v1087 = vrcp.pop %v1086
        %v1088 = vmul.f32 %v1086, %v1087
        %v1089 = vsub.f32 1.0, %v1088
        %v1090 = vmul.f32 %v1087, %v1089
        %v1091 = vadd.f32 %v1087, %v1090
        %vm1092 = vweird.f32 %v1086
        %vm1093 = vweird.f32 %v1087
        %vm1094 = vmor %vm1092, %vm1093
        %v1095 = vsel %vm1094, %v1087, %v1091
        %v1096 = vand.u32 2147483647, %v1086
        %vm1097 = vcmp.eq.f32.partialorder %v1096, 8.507059e+37
        %v1098 = vand.u32 %v1086, 2147483648
        %v1099 = vor.u32 1.1754944e-38, %v1098
        %v1100 = vsel %vm1097, %v1099, %v1095
        %v1101 = vmul.f32 1.0, %v1100
        %v1102 = vmul.f32 %v1081, %v1060
        %v1103 = vadd.f32 %v1001, %v1102
        %v1104 = vtanh.pop %v1103
        %v1105 = vsub.f32 %v954, %v1104
        %v1106 = vmul.f32 %v1101, %v1105
        %v1107 = vadd.f32 %v1104, %v1106
        %1108 = vmatpush.msra.mxu0 %v525
        %1109 = vmatpush.msra.mxu0 %v523
        %1110 = vmatpush.msra.mxu0 %v521
        %1111 = vmatpush.msra.mxu0 %v519
        %1112 = vmatpush.msra.mxu0 %v517
        %1113 = vmatpush.msra.mxu0 %v515
        %1114 = vmatpush.msra.mxu0 %v513
        %1115 = vmatpush.msra.mxu0 %v511
        %1116 = vmatpush.msra.mxu0 %v509
        %1117 = vmatpush.msra.mxu0 %v507
        %1118 = vmatpush.msra.mxu0 %v505
        %1119 = vmatpush.msra.mxu0 %v503
        %1120 = vmatpush.msra.mxu0 %v501
        %1121 = vmatpush.msra.mxu0 %v499
        %1122 = vmatpush.msra.mxu0 %v497
        %1123 = vmatpush.msra.mxu0 %v495
        %1124 = vmatmul.f32.gmra.mxu0 %v1107
        %v1125 = vpop.f32.mrf.mxu0
        %v1126 = vadd.f32 %v646, %v1125
        %1127 = vdwg.mxu0
        %1128 = vmatpush.msra.mxu0 %v526
        %1129 = vmatpush.msra.mxu0 %v524
        %1130 = vmatpush.msra.mxu0 %v522
        %1131 = vmatpush.msra.mxu0 %v520
        %1132 = vmatpush.msra.mxu0 %v518
        %1133 = vmatpush.msra.mxu0 %v516
        %1134 = vmatpush.msra.mxu0 %v514
        %1135 = vmatpush.msra.mxu0 %v512
        %1136 = vmatpush.msra.mxu0 %v510
        %1137 = vmatpush.msra.mxu0 %v508
        %1138 = vmatpush.msra.mxu0 %v506
        %1139 = vmatpush.msra.mxu0 %v504
        %1140 = vmatpush.msra.mxu0 %v502
        %1141 = vmatpush.msra.mxu0 %v500
        %1142 = vmatpush.msra.mxu0 %v498
        %1143 = vmatpush.msra.mxu0 %v496
        %1144 = vmatmul.f32.gmra.mxu0 %v1107
        %v1145 = vpop.f32.mrf.mxu0
        %v1146 = vadd.f32 %v647, %v1145
        %1147 = vdwg.mxu0
        %s1148 = scalar_lea.vmem %s426, 48 [#allocation4]
        %1149 = vst [vmem:[%s1148] sm:$0xff] %v1126
        %1150 = vst [vmem:[%s1148 + $0x8] sm:$0xff] %v1146
        %s1151 = scalar_lea.vmem %s396, 96 [#allocation3]
        %v1152 = vld [vmem:[%s1151] sm:$0xff]
        %v1153 = vld [vmem:[%s1151 + $0x8] sm:$0xff]
        %v1154 = vld [vmem:[%s1151 + $0x10] sm:$0xff]
        %1155 = vmatpush.msra.mxu0 %v491
        %1156 = vmatpush.msra.mxu0 %v488
        %1157 = vmatpush.msra.mxu0 %v485
        %1158 = vmatpush.msra.mxu0 %v482
        %1159 = vmatpush.msra.mxu0 %v479
        %1160 = vmatpush.msra.mxu0 %v476
        %1161 = vmatpush.msra.mxu0 %v473
        %1162 = vmatpush.msra.mxu0 %v470
        %1163 = vmatpush.msra.mxu0 %v467
        %1164 = vmatpush.msra.mxu0 %v464
        %1165 = vmatpush.msra.mxu0 %v461
        %1166 = vmatpush.msra.mxu0 %v458
        %1167 = vmatpush.msra.mxu0 %v455
        %1168 = vmatpush.msra.mxu0 %v452
        %1169 = vmatpush.msra.mxu0 %v449
        %1170 = vmatpush.msra.mxu0 %v446
        %1171 = vmatmul.f32.gmra.mxu0 %v1107
        %v1172 = vpop.f32.mrf.mxu0
        %v1173 = vadd.f32 %v533, %v1172
        %1174 = vdwg.mxu0
        %1175 = vmatpush.msra.mxu0 %v492
        %1176 = vmatpush.msra.mxu0 %v489
        %1177 = vmatpush.msra.mxu0 %v486
        %1178 = vmatpush.msra.mxu0 %v483
        %1179 = vmatpush.msra.mxu0 %v480
        %1180 = vmatpush.msra.mxu0 %v477
        %1181 = vmatpush.msra.mxu0 %v474
        %1182 = vmatpush.msra.mxu0 %v471
        %1183 = vmatpush.msra.mxu0 %v468
        %1184 = vmatpush.msra.mxu0 %v465
        %1185 = vmatpush.msra.mxu0 %v462
        %1186 = vmatpush.msra.mxu0 %v459
        %1187 = vmatpush.msra.mxu0 %v456
        %1188 = vmatpush.msra.mxu0 %v453
        %1189 = vmatpush.msra.mxu0 %v450
        %1190 = vmatpush.msra.mxu0 %v447
        %1191 = vmatmul.f32.gmra.mxu0 %v1107
        %v1192 = vpop.f32.mrf.mxu0
        %v1193 = vadd.f32 %v534, %v1192
        %1194 = vdwg.mxu0
        %1195 = vmatpush.msra.mxu0 %v493
        %1196 = vmatpush.msra.mxu0 %v490
        %1197 = vmatpush.msra.mxu0 %v487
        %1198 = vmatpush.msra.mxu0 %v484
        %1199 = vmatpush.msra.mxu0 %v481
        %1200 = vmatpush.msra.mxu0 %v478
        %1201 = vmatpush.msra.mxu0 %v475
        %1202 = vmatpush.msra.mxu0 %v472
        %1203 = vmatpush.msra.mxu0 %v469
        %1204 = vmatpush.msra.mxu0 %v466
        %1205 = vmatpush.msra.mxu0 %v463
        %1206 = vmatpush.msra.mxu0 %v460
        %1207 = vmatpush.msra.mxu0 %v457
        %1208 = vmatpush.msra.mxu0 %v454
        %1209 = vmatpush.msra.mxu0 %v451
        %1210 = vmatpush.msra.mxu0 %v448
        %1211 = vmatmul.f32.gmra.mxu0 %v1107
        %v1212 = vpop.f32.mrf.mxu0
        %v1213 = vadd.f32 %v535, %v1212
        %1214 = vdwg.mxu0
        %v1215 = vadd.f32 %v1152, %v1173
        %v1216 = vxor.u32 %v1215, 2147483648
        %v1217 = vmul.f32 %v1216, 1.442695
        %v1218 = vpow.pop %v1217
        %v1219 = vadd.f32 %v1218, 1.0
        %v1220 = vrcp.pop %v1219
        %v1221 = vmul.f32 %v1219, %v1220
        %v1222 = vsub.f32 1.0, %v1221
        %v1223 = vmul.f32 %v1220, %v1222
        %v1224 = vadd.f32 %v1220, %v1223
        %vm1225 = vweird.f32 %v1219
        %vm1226 = vweird.f32 %v1220
        %vm1227 = vmor %vm1225, %vm1226
        %v1228 = vsel %vm1227, %v1220, %v1224
        %v1229 = vand.u32 2147483647, %v1219
        %vm1230 = vcmp.eq.f32.partialorder %v1229, 8.507059e+37
        %v1231 = vand.u32 %v1219, 2147483648
        %v1232 = vor.u32 1.1754944e-38, %v1231
        %v1233 = vsel %vm1230, %v1232, %v1228
        %v1234 = vmul.f32 1.0, %v1233
        %v1235 = vadd.f32 %v1153, %v1193
        %v1236 = vxor.u32 %v1235, 2147483648
        %v1237 = vmul.f32 %v1236, 1.442695
        %v1238 = vpow.pop %v1237
        %v1239 = vadd.f32 %v1238, 1.0
        %v1240 = vrcp.pop %v1239
        %v1241 = vmul.f32 %v1239, %v1240
        %v1242 = vsub.f32 1.0, %v1241
        %v1243 = vmul.f32 %v1240, %v1242
        %v1244 = vadd.f32 %v1240, %v1243
        %vm1245 = vweird.f32 %v1239
        %vm1246 = vweird.f32 %v1240
        %vm1247 = vmor %vm1245, %vm1246
        %v1248 = vsel %vm1247, %v1240, %v1244
        %v1249 = vand.u32 2147483647, %v1239
        %vm1250 = vcmp.eq.f32.partialorder %v1249, 8.507059e+37
        %v1251 = vand.u32 %v1239, 2147483648
        %v1252 = vor.u32 1.1754944e-38, %v1251
        %v1253 = vsel %vm1250, %v1252, %v1248
        %v1254 = vmul.f32 1.0, %v1253
        %v1255 = vmul.f32 %v1234, %v1213
        %v1256 = vadd.f32 %v1154, %v1255
        %v1257 = vtanh.pop %v1256
        %v1258 = vsub.f32 %v1107, %v1257
        %v1259 = vmul.f32 %v1254, %v1258
        %v1260 = vadd.f32 %v1257, %v1259
        %1261 = vmatpush.msra.mxu0 %v525
        %1262 = vmatpush.msra.mxu0 %v523
        %1263 = vmatpush.msra.mxu0 %v521
        %1264 = vmatpush.msra.mxu0 %v519
        %1265 = vmatpush.msra.mxu0 %v517
        %1266 = vmatpush.msra.mxu0 %v515
        %1267 = vmatpush.msra.mxu0 %v513
        %1268 = vmatpush.msra.mxu0 %v511
        %1269 = vmatpush.msra.mxu0 %v509
        %1270 = vmatpush.msra.mxu0 %v507
        %1271 = vmatpush.msra.mxu0 %v505
        %1272 = vmatpush.msra.mxu0 %v503
        %1273 = vmatpush.msra.mxu0 %v501
        %1274 = vmatpush.msra.mxu0 %v499
        %1275 = vmatpush.msra.mxu0 %v497
        %1276 = vmatpush.msra.mxu0 %v495
        %1277 = vmatmul.f32.gmra.mxu0 %v1260
        %v1278 = vpop.f32.mrf.mxu0
        %v1279 = vadd.f32 %v646, %v1278
        %1280 = vdwg.mxu0
        %1281 = vmatpush.msra.mxu0 %v526
        %1282 = vmatpush.msra.mxu0 %v524
        %1283 = vmatpush.msra.mxu0 %v522
        %1284 = vmatpush.msra.mxu0 %v520
        %1285 = vmatpush.msra.mxu0 %v518
        %1286 = vmatpush.msra.mxu0 %v516
        %1287 = vmatpush.msra.mxu0 %v514
        %1288 = vmatpush.msra.mxu0 %v512
        %1289 = vmatpush.msra.mxu0 %v510
        %1290 = vmatpush.msra.mxu0 %v508
        %1291 = vmatpush.msra.mxu0 %v506
        %1292 = vmatpush.msra.mxu0 %v504
        %1293 = vmatpush.msra.mxu0 %v502
        %1294 = vmatpush.msra.mxu0 %v500
        %1295 = vmatpush.msra.mxu0 %v498
        %1296 = vmatpush.msra.mxu0 %v496
        %1297 = vmatmul.f32.gmra.mxu0 %v1260
        %v1298 = vpop.f32.mrf.mxu0
        %v1299 = vadd.f32 %v647, %v1298
        %1300 = vdwg.mxu0
        %s1301 = scalar_lea.vmem %s426, 64 [#allocation4]
        %1302 = vst [vmem:[%s1301] sm:$0xff] %v1279
        %1303 = vst [vmem:[%s1301 + $0x8] sm:$0xff] %v1299
        %s1304 = scalar_lea.vmem %s396, 120 [#allocation3]
        %v1305 = vld [vmem:[%s1304] sm:$0xff]
        %v1306 = vld [vmem:[%s1304 + $0x8] sm:$0xff]
        %v1307 = vld [vmem:[%s1304 + $0x10] sm:$0xff]
        %1308 = vmatpush.msra.mxu0 %v491
        %1309 = vmatpush.msra.mxu0 %v488
        %1310 = vmatpush.msra.mxu0 %v485
        %1311 = vmatpush.msra.mxu0 %v482
        %1312 = vmatpush.msra.mxu0 %v479
        %1313 = vmatpush.msra.mxu0 %v476
        %1314 = vmatpush.msra.mxu0 %v473
        %1315 = vmatpush.msra.mxu0 %v470
        %1316 = vmatpush.msra.mxu0 %v467
        %1317 = vmatpush.msra.mxu0 %v464
        %1318 = vmatpush.msra.mxu0 %v461
        %1319 = vmatpush.msra.mxu0 %v458
        %1320 = vmatpush.msra.mxu0 %v455
        %1321 = vmatpush.msra.mxu0 %v452
        %1322 = vmatpush.msra.mxu0 %v449
        %1323 = vmatpush.msra.mxu0 %v446
        %1324 = vmatmul.f32.gmra.mxu0 %v1260
        %v1325 = vpop.f32.mrf.mxu0
        %v1326 = vadd.f32 %v533, %v1325
        %1327 = vdwg.mxu0
        %1328 = vmatpush.msra.mxu0 %v492
        %1329 = vmatpush.msra.mxu0 %v489
        %1330 = vmatpush.msra.mxu0 %v486
        %1331 = vmatpush.msra.mxu0 %v483
        %1332 = vmatpush.msra.mxu0 %v480
        %1333 = vmatpush.msra.mxu0 %v477
        %1334 = vmatpush.msra.mxu0 %v474
        %1335 = vmatpush.msra.mxu0 %v471
        %1336 = vmatpush.msra.mxu0 %v468
        %1337 = vmatpush.msra.mxu0 %v465
        %1338 = vmatpush.msra.mxu0 %v462
        %1339 = vmatpush.msra.mxu0 %v459
        %1340 = vmatpush.msra.mxu0 %v456
        %1341 = vmatpush.msra.mxu0 %v453
        %1342 = vmatpush.msra.mxu0 %v450
        %1343 = vmatpush.msra.mxu0 %v447
        %1344 = vmatmul.f32.gmra.mxu0 %v1260
        %v1345 = vpop.f32.mrf.mxu0
        %v1346 = vadd.f32 %v534, %v1345
        %1347 = vdwg.mxu0
        %1348 = vmatpush.msra.mxu0 %v493
        %1349 = vmatpush.msra.mxu0 %v490
        %1350 = vmatpush.msra.mxu0 %v487
        %1351 = vmatpush.msra.mxu0 %v484
        %1352 = vmatpush.msra.mxu0 %v481
        %1353 = vmatpush.msra.mxu0 %v478
        %1354 = vmatpush.msra.mxu0 %v475
        %1355 = vmatpush.msra.mxu0 %v472
        %1356 = vmatpush.msra.mxu0 %v469
        %1357 = vmatpush.msra.mxu0 %v466
        %1358 = vmatpush.msra.mxu0 %v463
        %1359 = vmatpush.msra.mxu0 %v460
        %1360 = vmatpush.msra.mxu0 %v457
        %1361 = vmatpush.msra.mxu0 %v454
        %1362 = vmatpush.msra.mxu0 %v451
        %1363 = vmatpush.msra.mxu0 %v448
        %1364 = vmatmul.f32.gmra.mxu0 %v1260
        %v1365 = vpop.f32.mrf.mxu0
        %v1366 = vadd.f32 %v535, %v1365
        %1367 = vdwg.mxu0
        %v1368 = vadd.f32 %v1305, %v1326
        %v1369 = vxor.u32 %v1368, 2147483648
        %v1370 = vmul.f32 %v1369, 1.442695
        %v1371 = vpow.pop %v1370
        %v1372 = vadd.f32 %v1371, 1.0
        %v1373 = vrcp.pop %v1372
        %v1374 = vmul.f32 %v1372, %v1373
        %v1375 = vsub.f32 1.0, %v1374
        %v1376 = vmul.f32 %v1373, %v1375
        %v1377 = vadd.f32 %v1373, %v1376
        %vm1378 = vweird.f32 %v1372
        %vm1379 = vweird.f32 %v1373
        %vm1380 = vmor %vm1378, %vm1379
        %v1381 = vsel %vm1380, %v1373, %v1377
        %v1382 = vand.u32 2147483647, %v1372
        %vm1383 = vcmp.eq.f32.partialorder %v1382, 8.507059e+37
        %v1384 = vand.u32 %v1372, 2147483648
        %v1385 = vor.u32 1.1754944e-38, %v1384
        %v1386 = vsel %vm1383, %v1385, %v1381
        %v1387 = vmul.f32 1.0, %v1386
        %v1388 = vadd.f32 %v1306, %v1346
        %v1389 = vxor.u32 %v1388, 2147483648
        %v1390 = vmul.f32 %v1389, 1.442695
        %v1391 = vpow.pop %v1390
        %v1392 = vadd.f32 %v1391, 1.0
        %v1393 = vrcp.pop %v1392
        %v1394 = vmul.f32 %v1392, %v1393
        %v1395 = vsub.f32 1.0, %v1394
        %v1396 = vmul.f32 %v1393, %v1395
        %v1397 = vadd.f32 %v1393, %v1396
        %vm1398 = vweird.f32 %v1392
        %vm1399 = vweird.f32 %v1393
        %vm1400 = vmor %vm1398, %vm1399
        %v1401 = vsel %vm1400, %v1393, %v1397
        %v1402 = vand.u32 2147483647, %v1392
        %vm1403 = vcmp.eq.f32.partialorder %v1402, 8.507059e+37
        %v1404 = vand.u32 %v1392, 2147483648
        %v1405 = vor.u32 1.1754944e-38, %v1404
        %v1406 = vsel %vm1403, %v1405, %v1401
        %v1407 = vmul.f32 1.0, %v1406
        %v1408 = vmul.f32 %v1387, %v1366
        %v1409 = vadd.f32 %v1307, %v1408
        %v1410 = vtanh.pop %v1409
        %v1411 = vsub.f32 %v1260, %v1410
        %v1412 = vmul.f32 %v1407, %v1411
        %v1413 = vadd.f32 %v1410, %v1412
        %1414 = vmatpush.msra.mxu0 %v525
        %1415 = vmatpush.msra.mxu0 %v523
        %1416 = vmatpush.msra.mxu0 %v521
        %1417 = vmatpush.msra.mxu0 %v519
        %1418 = vmatpush.msra.mxu0 %v517
        %1419 = vmatpush.msra.mxu0 %v515
        %1420 = vmatpush.msra.mxu0 %v513
        %1421 = vmatpush.msra.mxu0 %v511
        %1422 = vmatpush.msra.mxu0 %v509
        %1423 = vmatpush.msra.mxu0 %v507
        %1424 = vmatpush.msra.mxu0 %v505
        %1425 = vmatpush.msra.mxu0 %v503
        %1426 = vmatpush.msra.mxu0 %v501
        %1427 = vmatpush.msra.mxu0 %v499
        %1428 = vmatpush.msra.mxu0 %v497
        %1429 = vmatpush.msra.mxu0 %v495
        %1430 = vmatmul.f32.gmra.mxu0 %v1413
        %v1431 = vpop.f32.mrf.mxu0
        %v1432 = vadd.f32 %v646, %v1431
        %1433 = vdwg.mxu0
        %1434 = vmatpush.msra.mxu0 %v526
        %1435 = vmatpush.msra.mxu0 %v524
        %1436 = vmatpush.msra.mxu0 %v522
        %1437 = vmatpush.msra.mxu0 %v520
        %1438 = vmatpush.msra.mxu0 %v518
        %1439 = vmatpush.msra.mxu0 %v516
        %1440 = vmatpush.msra.mxu0 %v514
        %1441 = vmatpush.msra.mxu0 %v512
        %1442 = vmatpush.msra.mxu0 %v510
        %1443 = vmatpush.msra.mxu0 %v508
        %1444 = vmatpush.msra.mxu0 %v506
        %1445 = vmatpush.msra.mxu0 %v504
        %1446 = vmatpush.msra.mxu0 %v502
        %1447 = vmatpush.msra.mxu0 %v500
        %1448 = vmatpush.msra.mxu0 %v498
        %1449 = vmatpush.msra.mxu0 %v496
        %1450 = vmatmul.f32.gmra.mxu0 %v1413
        %v1451 = vpop.f32.mrf.mxu0
        %v1452 = vadd.f32 %v647, %v1451
        %1453 = vdwg.mxu0
        %s1454 = scalar_lea.vmem %s426, 80 [#allocation4]
        %1455 = vst [vmem:[%s1454] sm:$0xff] %v1432
        %1456 = vst [vmem:[%s1454 + $0x8] sm:$0xff] %v1452
        %s1457 = scalar_lea.vmem %s396, 144 [#allocation3]
        %v1458 = vld [vmem:[%s1457] sm:$0xff]
        %v1459 = vld [vmem:[%s1457 + $0x8] sm:$0xff]
        %v1460 = vld [vmem:[%s1457 + $0x10] sm:$0xff]
        %1461 = vmatpush.msra.mxu0 %v491
        %1462 = vmatpush.msra.mxu0 %v488
        %1463 = vmatpush.msra.mxu0 %v485
        %1464 = vmatpush.msra.mxu0 %v482
        %1465 = vmatpush.msra.mxu0 %v479
        %1466 = vmatpush.msra.mxu0 %v476
        %1467 = vmatpush.msra.mxu0 %v473
        %1468 = vmatpush.msra.mxu0 %v470
        %1469 = vmatpush.msra.mxu0 %v467
        %1470 = vmatpush.msra.mxu0 %v464
        %1471 = vmatpush.msra.mxu0 %v461
        %1472 = vmatpush.msra.mxu0 %v458
        %1473 = vmatpush.msra.mxu0 %v455
        %1474 = vmatpush.msra.mxu0 %v452
        %1475 = vmatpush.msra.mxu0 %v449
        %1476 = vmatpush.msra.mxu0 %v446
        %1477 = vmatmul.f32.gmra.mxu0 %v1413
        %v1478 = vpop.f32.mrf.mxu0
        %v1479 = vadd.f32 %v533, %v1478
        %1480 = vdwg.mxu0
        %1481 = vmatpush.msra.mxu0 %v492
        %1482 = vmatpush.msra.mxu0 %v489
        %1483 = vmatpush.msra.mxu0 %v486
        %1484 = vmatpush.msra.mxu0 %v483
        %1485 = vmatpush.msra.mxu0 %v480
        %1486 = vmatpush.msra.mxu0 %v477
        %1487 = vmatpush.msra.mxu0 %v474
        %1488 = vmatpush.msra.mxu0 %v471
        %1489 = vmatpush.msra.mxu0 %v468
        %1490 = vmatpush.msra.mxu0 %v465
        %1491 = vmatpush.msra.mxu0 %v462
        %1492 = vmatpush.msra.mxu0 %v459
        %1493 = vmatpush.msra.mxu0 %v456
        %1494 = vmatpush.msra.mxu0 %v453
        %1495 = vmatpush.msra.mxu0 %v450
        %1496 = vmatpush.msra.mxu0 %v447
        %1497 = vmatmul.f32.gmra.mxu0 %v1413
        %v1498 = vpop.f32.mrf.mxu0
        %v1499 = vadd.f32 %v534, %v1498
        %1500 = vdwg.mxu0
        %1501 = vmatpush.msra.mxu0 %v493
        %1502 = vmatpush.msra.mxu0 %v490
        %1503 = vmatpush.msra.mxu0 %v487
        %1504 = vmatpush.msra.mxu0 %v484
        %1505 = vmatpush.msra.mxu0 %v481
        %1506 = vmatpush.msra.mxu0 %v478
        %1507 = vmatpush.msra.mxu0 %v475
        %1508 = vmatpush.msra.mxu0 %v472
        %1509 = vmatpush.msra.mxu0 %v469
        %1510 = vmatpush.msra.mxu0 %v466
        %1511 = vmatpush.msra.mxu0 %v463
        %1512 = vmatpush.msra.mxu0 %v460
        %1513 = vmatpush.msra.mxu0 %v457
        %1514 = vmatpush.msra.mxu0 %v454
        %1515 = vmatpush.msra.mxu0 %v451
        %1516 = vmatpush.msra.mxu0 %v448
        %1517 = vmatmul.f32.gmra.mxu0 %v1413
        %v1518 = vpop.f32.mrf.mxu0
        %v1519 = vadd.f32 %v535, %v1518
        %1520 = vdwg.mxu0
        %v1521 = vadd.f32 %v1458, %v1479
        %v1522 = vxor.u32 %v1521, 2147483648
        %v1523 = vmul.f32 %v1522, 1.442695
        %v1524 = vpow.pop %v1523
        %v1525 = vadd.f32 %v1524, 1.0
        %v1526 = vrcp.pop %v1525
        %v1527 = vmul.f32 %v1525, %v1526
        %v1528 = vsub.f32 1.0, %v1527
        %v1529 = vmul.f32 %v1526, %v1528
        %v1530 = vadd.f32 %v1526, %v1529
        %vm1531 = vweird.f32 %v1525
        %vm1532 = vweird.f32 %v1526
        %vm1533 = vmor %vm1531, %vm1532
        %v1534 = vsel %vm1533, %v1526, %v1530
        %v1535 = vand.u32 2147483647, %v1525
        %vm1536 = vcmp.eq.f32.partialorder %v1535, 8.507059e+37
        %v1537 = vand.u32 %v1525, 2147483648
        %v1538 = vor.u32 1.1754944e-38, %v1537
        %v1539 = vsel %vm1536, %v1538, %v1534
        %v1540 = vmul.f32 1.0, %v1539
        %v1541 = vadd.f32 %v1459, %v1499
        %v1542 = vxor.u32 %v1541, 2147483648
        %v1543 = vmul.f32 %v1542, 1.442695
        %v1544 = vpow.pop %v1543
        %v1545 = vadd.f32 %v1544, 1.0
        %v1546 = vrcp.pop %v1545
        %v1547 = vmul.f32 %v1545, %v1546
        %v1548 = vsub.f32 1.0, %v1547
        %v1549 = vmul.f32 %v1546, %v1548
        %v1550 = vadd.f32 %v1546, %v1549
        %vm1551 = vweird.f32 %v1545
        %vm1552 = vweird.f32 %v1546
        %vm1553 = vmor %vm1551, %vm1552
        %v1554 = vsel %vm1553, %v1546, %v1550
        %v1555 = vand.u32 2147483647, %v1545
        %vm1556 = vcmp.eq.f32.partialorder %v1555, 8.507059e+37
        %v1557 = vand.u32 %v1545, 2147483648
        %v1558 = vor.u32 1.1754944e-38, %v1557
        %v1559 = vsel %vm1556, %v1558, %v1554
        %v1560 = vmul.f32 1.0, %v1559
        %v1561 = vmul.f32 %v1540, %v1519
        %v1562 = vadd.f32 %v1460, %v1561
        %v1563 = vtanh.pop %v1562
        %v1564 = vsub.f32 %v1413, %v1563
        %v1565 = vmul.f32 %v1560, %v1564
        %v1566 = vadd.f32 %v1563, %v1565
        %1567 = vmatpush.msra.mxu0 %v525
        %1568 = vmatpush.msra.mxu0 %v523
        %1569 = vmatpush.msra.mxu0 %v521
        %1570 = vmatpush.msra.mxu0 %v519
        %1571 = vmatpush.msra.mxu0 %v517
        %1572 = vmatpush.msra.mxu0 %v515
        %1573 = vmatpush.msra.mxu0 %v513
        %1574 = vmatpush.msra.mxu0 %v511
        %1575 = vmatpush.msra.mxu0 %v509
        %1576 = vmatpush.msra.mxu0 %v507
        %1577 = vmatpush.msra.mxu0 %v505
        %1578 = vmatpush.msra.mxu0 %v503
        %1579 = vmatpush.msra.mxu0 %v501
        %1580 = vmatpush.msra.mxu0 %v499
        %1581 = vmatpush.msra.mxu0 %v497
        %1582 = vmatpush.msra.mxu0 %v495
        %1583 = vmatmul.f32.gmra.mxu0 %v1566
        %v1584 = vpop.f32.mrf.mxu0
        %v1585 = vadd.f32 %v646, %v1584
        %1586 = vdwg.mxu0
        %1587 = vmatpush.msra.mxu0 %v526
        %1588 = vmatpush.msra.mxu0 %v524
        %1589 = vmatpush.msra.mxu0 %v522
        %1590 = vmatpush.msra.mxu0 %v520
        %1591 = vmatpush.msra.mxu0 %v518
        %1592 = vmatpush.msra.mxu0 %v516
        %1593 = vmatpush.msra.mxu0 %v514
        %1594 = vmatpush.msra.mxu0 %v512
        %1595 = vmatpush.msra.mxu0 %v510
        %1596 = vmatpush.msra.mxu0 %v508
        %1597 = vmatpush.msra.mxu0 %v506
        %1598 = vmatpush.msra.mxu0 %v504
        %1599 = vmatpush.msra.mxu0 %v502
        %1600 = vmatpush.msra.mxu0 %v500
        %1601 = vmatpush.msra.mxu0 %v498
        %1602 = vmatpush.msra.mxu0 %v496
        %1603 = vmatmul.f32.gmra.mxu0 %v1566
        %v1604 = vpop.f32.mrf.mxu0
        %v1605 = vadd.f32 %v647, %v1604
        %1606 = vdwg.mxu0
        %s1607 = scalar_lea.vmem %s426, 96 [#allocation4]
        %1608 = vst [vmem:[%s1607] sm:$0xff] %v1585
        %1609 = vst [vmem:[%s1607 + $0x8] sm:$0xff] %v1605
        %s1610 = scalar_lea.vmem %s396, 168 [#allocation3]
        %v1611 = vld [vmem:[%s1610] sm:$0xff]
        %v1612 = vld [vmem:[%s1610 + $0x8] sm:$0xff]
        %v1613 = vld [vmem:[%s1610 + $0x10] sm:$0xff]
        %1614 = vmatpush.msra.mxu0 %v491
        %1615 = vmatpush.msra.mxu0 %v488
        %1616 = vmatpush.msra.mxu0 %v485
        %1617 = vmatpush.msra.mxu0 %v482
        %1618 = vmatpush.msra.mxu0 %v479
        %1619 = vmatpush.msra.mxu0 %v476
        %1620 = vmatpush.msra.mxu0 %v473
        %1621 = vmatpush.msra.mxu0 %v470
        %1622 = vmatpush.msra.mxu0 %v467
        %1623 = vmatpush.msra.mxu0 %v464
        %1624 = vmatpush.msra.mxu0 %v461
        %1625 = vmatpush.msra.mxu0 %v458
        %1626 = vmatpush.msra.mxu0 %v455
        %1627 = vmatpush.msra.mxu0 %v452
        %1628 = vmatpush.msra.mxu0 %v449
        %1629 = vmatpush.msra.mxu0 %v446
        %1630 = vmatmul.f32.gmra.mxu0 %v1566
        %v1631 = vpop.f32.mrf.mxu0
        %v1632 = vadd.f32 %v533, %v1631
        %1633 = vdwg.mxu0
        %1634 = vmatpush.msra.mxu0 %v492
        %1635 = vmatpush.msra.mxu0 %v489
        %1636 = vmatpush.msra.mxu0 %v486
        %1637 = vmatpush.msra.mxu0 %v483
        %1638 = vmatpush.msra.mxu0 %v480
        %1639 = vmatpush.msra.mxu0 %v477
        %1640 = vmatpush.msra.mxu0 %v474
        %1641 = vmatpush.msra.mxu0 %v471
        %1642 = vmatpush.msra.mxu0 %v468
        %1643 = vmatpush.msra.mxu0 %v465
        %1644 = vmatpush.msra.mxu0 %v462
        %1645 = vmatpush.msra.mxu0 %v459
        %1646 = vmatpush.msra.mxu0 %v456
        %1647 = vmatpush.msra.mxu0 %v453
        %1648 = vmatpush.msra.mxu0 %v450
        %1649 = vmatpush.msra.mxu0 %v447
        %1650 = vmatmul.f32.gmra.mxu0 %v1566
        %v1651 = vpop.f32.mrf.mxu0
        %v1652 = vadd.f32 %v534, %v1651
        %1653 = vdwg.mxu0
        %1654 = vmatpush.msra.mxu0 %v493
        %1655 = vmatpush.msra.mxu0 %v490
        %1656 = vmatpush.msra.mxu0 %v487
        %1657 = vmatpush.msra.mxu0 %v484
        %1658 = vmatpush.msra.mxu0 %v481
        %1659 = vmatpush.msra.mxu0 %v478
        %1660 = vmatpush.msra.mxu0 %v475
        %1661 = vmatpush.msra.mxu0 %v472
        %1662 = vmatpush.msra.mxu0 %v469
        %1663 = vmatpush.msra.mxu0 %v466
        %1664 = vmatpush.msra.mxu0 %v463
        %1665 = vmatpush.msra.mxu0 %v460
        %1666 = vmatpush.msra.mxu0 %v457
        %1667 = vmatpush.msra.mxu0 %v454
        %1668 = vmatpush.msra.mxu0 %v451
        %1669 = vmatpush.msra.mxu0 %v448
        %1670 = vmatmul.f32.gmra.mxu0 %v1566
        %v1671 = vpop.f32.mrf.mxu0
        %v1672 = vadd.f32 %v535, %v1671
        %1673 = vdwg.mxu0
        %v1674 = vadd.f32 %v1611, %v1632
        %v1675 = vxor.u32 %v1674, 2147483648
        %v1676 = vmul.f32 %v1675, 1.442695
        %v1677 = vpow.pop %v1676
        %v1678 = vadd.f32 %v1677, 1.0
        %v1679 = vrcp.pop %v1678
        %v1680 = vmul.f32 %v1678, %v1679
        %v1681 = vsub.f32 1.0, %v1680
        %v1682 = vmul.f32 %v1679, %v1681
        %v1683 = vadd.f32 %v1679, %v1682
        %vm1684 = vweird.f32 %v1678
        %vm1685 = vweird.f32 %v1679
        %vm1686 = vmor %vm1684, %vm1685
        %v1687 = vsel %vm1686, %v1679, %v1683
        %v1688 = vand.u32 2147483647, %v1678
        %vm1689 = vcmp.eq.f32.partialorder %v1688, 8.507059e+37
        %v1690 = vand.u32 %v1678, 2147483648
        %v1691 = vor.u32 1.1754944e-38, %v1690
        %v1692 = vsel %vm1689, %v1691, %v1687
        %v1693 = vmul.f32 1.0, %v1692
        %v1694 = vadd.f32 %v1612, %v1652
        %v1695 = vxor.u32 %v1694, 2147483648
        %v1696 = vmul.f32 %v1695, 1.442695
        %v1697 = vpow.pop %v1696
        %v1698 = vadd.f32 %v1697, 1.0
        %v1699 = vrcp.pop %v1698
        %v1700 = vmul.f32 %v1698, %v1699
        %v1701 = vsub.f32 1.0, %v1700
        %v1702 = vmul.f32 %v1699, %v1701
        %v1703 = vadd.f32 %v1699, %v1702
        %vm1704 = vweird.f32 %v1698
        %vm1705 = vweird.f32 %v1699
        %vm1706 = vmor %vm1704, %vm1705
        %v1707 = vsel %vm1706, %v1699, %v1703
        %v1708 = vand.u32 2147483647, %v1698
        %vm1709 = vcmp.eq.f32.partialorder %v1708, 8.507059e+37
        %v1710 = vand.u32 %v1698, 2147483648
        %v1711 = vor.u32 1.1754944e-38, %v1710
        %v1712 = vsel %vm1709, %v1711, %v1707
        %v1713 = vmul.f32 1.0, %v1712
        %v1714 = vmul.f32 %v1693, %v1672
        %v1715 = vadd.f32 %v1613, %v1714
        %v1716 = vtanh.pop %v1715
        %v1717 = vsub.f32 %v1566, %v1716
        %v1718 = vmul.f32 %v1713, %v1717
        %v1719 = vadd.f32 %v1716, %v1718
        %1720 = vmatpush.msra.mxu0 %v525
        %1721 = vmatpush.msra.mxu0 %v523
        %1722 = vmatpush.msra.mxu0 %v521
        %1723 = vmatpush.msra.mxu0 %v519
        %1724 = vmatpush.msra.mxu0 %v517
        %1725 = vmatpush.msra.mxu0 %v515
        %1726 = vmatpush.msra.mxu0 %v513
        %1727 = vmatpush.msra.mxu0 %v511
        %1728 = vmatpush.msra.mxu0 %v509
        %1729 = vmatpush.msra.mxu0 %v507
        %1730 = vmatpush.msra.mxu0 %v505
        %1731 = vmatpush.msra.mxu0 %v503
        %1732 = vmatpush.msra.mxu0 %v501
        %1733 = vmatpush.msra.mxu0 %v499
        %1734 = vmatpush.msra.mxu0 %v497
        %1735 = vmatpush.msra.mxu0 %v495
        %1736 = vmatmul.f32.gmra.mxu0 %v1719
        %v1737 = vpop.f32.mrf.mxu0
        %v1738 = vadd.f32 %v646, %v1737
        %1739 = vdwg.mxu0
        %1740 = vmatpush.msra.mxu0 %v526
        %1741 = vmatpush.msra.mxu0 %v524
        %1742 = vmatpush.msra.mxu0 %v522
        %1743 = vmatpush.msra.mxu0 %v520
        %1744 = vmatpush.msra.mxu0 %v518
        %1745 = vmatpush.msra.mxu0 %v516
        %1746 = vmatpush.msra.mxu0 %v514
        %1747 = vmatpush.msra.mxu0 %v512
        %1748 = vmatpush.msra.mxu0 %v510
        %1749 = vmatpush.msra.mxu0 %v508
        %1750 = vmatpush.msra.mxu0 %v506
        %1751 = vmatpush.msra.mxu0 %v504
        %1752 = vmatpush.msra.mxu0 %v502
        %1753 = vmatpush.msra.mxu0 %v500
        %1754 = vmatpush.msra.mxu0 %v498
        %1755 = vmatpush.msra.mxu0 %v496
        %1756 = vmatmul.f32.gmra.mxu0 %v1719
        %v1757 = vpop.f32.mrf.mxu0
        %v1758 = vadd.f32 %v647, %v1757
        %1759 = vdwg.mxu0
        %s1760 = scalar_lea.vmem %s426, 112 [#allocation4]
        %1761 = vst [vmem:[%s1760] sm:$0xff] %v1738
        %1762 = vst [vmem:[%s1760 + $0x8] sm:$0xff] %v1758
        %s1763 = scalar_lea.vmem %s396, 192 [#allocation3]
        %v1764 = vld [vmem:[%s1763] sm:$0xff]
        %v1765 = vld [vmem:[%s1763 + $0x8] sm:$0xff]
        %v1766 = vld [vmem:[%s1763 + $0x10] sm:$0xff]
        %1767 = vmatpush.msra.mxu0 %v491
        %1768 = vmatpush.msra.mxu0 %v488
        %1769 = vmatpush.msra.mxu0 %v485
        %1770 = vmatpush.msra.mxu0 %v482
        %1771 = vmatpush.msra.mxu0 %v479
        %1772 = vmatpush.msra.mxu0 %v476
        %1773 = vmatpush.msra.mxu0 %v473
        %1774 = vmatpush.msra.mxu0 %v470
        %1775 = vmatpush.msra.mxu0 %v467
        %1776 = vmatpush.msra.mxu0 %v464
        %1777 = vmatpush.msra.mxu0 %v461
        %1778 = vmatpush.msra.mxu0 %v458
        %1779 = vmatpush.msra.mxu0 %v455
        %1780 = vmatpush.msra.mxu0 %v452
        %1781 = vmatpush.msra.mxu0 %v449
        %1782 = vmatpush.msra.mxu0 %v446
        %1783 = vmatmul.f32.gmra.mxu0 %v1719
        %v1784 = vpop.f32.mrf.mxu0
        %v1785 = vadd.f32 %v533, %v1784
        %1786 = vdwg.mxu0
        %1787 = vmatpush.msra.mxu0 %v492
        %1788 = vmatpush.msra.mxu0 %v489
        %1789 = vmatpush.msra.mxu0 %v486
        %1790 = vmatpush.msra.mxu0 %v483
        %1791 = vmatpush.msra.mxu0 %v480
        %1792 = vmatpush.msra.mxu0 %v477
        %1793 = vmatpush.msra.mxu0 %v474
        %1794 = vmatpush.msra.mxu0 %v471
        %1795 = vmatpush.msra.mxu0 %v468
        %1796 = vmatpush.msra.mxu0 %v465
        %1797 = vmatpush.msra.mxu0 %v462
        %1798 = vmatpush.msra.mxu0 %v459
        %1799 = vmatpush.msra.mxu0 %v456
        %1800 = vmatpush.msra.mxu0 %v453
        %1801 = vmatpush.msra.mxu0 %v450
        %1802 = vmatpush.msra.mxu0 %v447
        %1803 = vmatmul.f32.gmra.mxu0 %v1719
        %v1804 = vpop.f32.mrf.mxu0
        %v1805 = vadd.f32 %v534, %v1804
        %1806 = vdwg.mxu0
        %1807 = vmatpush.msra.mxu0 %v493
        %1808 = vmatpush.msra.mxu0 %v490
        %1809 = vmatpush.msra.mxu0 %v487
        %1810 = vmatpush.msra.mxu0 %v484
        %1811 = vmatpush.msra.mxu0 %v481
        %1812 = vmatpush.msra.mxu0 %v478
        %1813 = vmatpush.msra.mxu0 %v475
        %1814 = vmatpush.msra.mxu0 %v472
        %1815 = vmatpush.msra.mxu0 %v469
        %1816 = vmatpush.msra.mxu0 %v466
        %1817 = vmatpush.msra.mxu0 %v463
        %1818 = vmatpush.msra.mxu0 %v460
        %1819 = vmatpush.msra.mxu0 %v457
        %1820 = vmatpush.msra.mxu0 %v454
        %1821 = vmatpush.msra.mxu0 %v451
        %1822 = vmatpush.msra.mxu0 %v448
        %1823 = vmatmul.f32.gmra.mxu0 %v1719
        %v1824 = vpop.f32.mrf.mxu0
        %v1825 = vadd.f32 %v535, %v1824
        %1826 = vdwg.mxu0
        %v1827 = vadd.f32 %v1764, %v1785
        %v1828 = vxor.u32 %v1827, 2147483648
        %v1829 = vmul.f32 %v1828, 1.442695
        %v1830 = vpow.pop %v1829
        %v1831 = vadd.f32 %v1830, 1.0
        %v1832 = vrcp.pop %v1831
        %v1833 = vmul.f32 %v1831, %v1832
        %v1834 = vsub.f32 1.0, %v1833
        %v1835 = vmul.f32 %v1832, %v1834
        %v1836 = vadd.f32 %v1832, %v1835
        %vm1837 = vweird.f32 %v1831
        %vm1838 = vweird.f32 %v1832
        %vm1839 = vmor %vm1837, %vm1838
        %v1840 = vsel %vm1839, %v1832, %v1836
        %v1841 = vand.u32 2147483647, %v1831
        %vm1842 = vcmp.eq.f32.partialorder %v1841, 8.507059e+37
        %v1843 = vand.u32 %v1831, 2147483648
        %v1844 = vor.u32 1.1754944e-38, %v1843
        %v1845 = vsel %vm1842, %v1844, %v1840
        %v1846 = vmul.f32 1.0, %v1845
        %v1847 = vadd.f32 %v1765, %v1805
        %v1848 = vxor.u32 %v1847, 2147483648
        %v1849 = vmul.f32 %v1848, 1.442695
        %v1850 = vpow.pop %v1849
        %v1851 = vadd.f32 %v1850, 1.0
        %v1852 = vrcp.pop %v1851
        %v1853 = vmul.f32 %v1851, %v1852
        %v1854 = vsub.f32 1.0, %v1853
        %v1855 = vmul.f32 %v1852, %v1854
        %v1856 = vadd.f32 %v1852, %v1855
        %vm1857 = vweird.f32 %v1851
        %vm1858 = vweird.f32 %v1852
        %vm1859 = vmor %vm1857, %vm1858
        %v1860 = vsel %vm1859, %v1852, %v1856
        %v1861 = vand.u32 2147483647, %v1851
        %vm1862 = vcmp.eq.f32.partialorder %v1861, 8.507059e+37
        %v1863 = vand.u32 %v1851, 2147483648
        %v1864 = vor.u32 1.1754944e-38, %v1863
        %v1865 = vsel %vm1862, %v1864, %v1860
        %v1866 = vmul.f32 1.0, %v1865
        %v1867 = vmul.f32 %v1846, %v1825
        %v1868 = vadd.f32 %v1766, %v1867
        %v1869 = vtanh.pop %v1868
        %v1870 = vsub.f32 %v1719, %v1869
        %v1871 = vmul.f32 %v1866, %v1870
        %v1872 = vadd.f32 %v1869, %v1871
        %1873 = vmatpush.msra.mxu0 %v525
        %1874 = vmatpush.msra.mxu0 %v523
        %1875 = vmatpush.msra.mxu0 %v521
        %1876 = vmatpush.msra.mxu0 %v519
        %1877 = vmatpush.msra.mxu0 %v517
        %1878 = vmatpush.msra.mxu0 %v515
        %1879 = vmatpush.msra.mxu0 %v513
        %1880 = vmatpush.msra.mxu0 %v511
        %1881 = vmatpush.msra.mxu0 %v509
        %1882 = vmatpush.msra.mxu0 %v507
        %1883 = vmatpush.msra.mxu0 %v505
        %1884 = vmatpush.msra.mxu0 %v503
        %1885 = vmatpush.msra.mxu0 %v501
        %1886 = vmatpush.msra.mxu0 %v499
        %1887 = vmatpush.msra.mxu0 %v497
        %1888 = vmatpush.msra.mxu0 %v495
        %1889 = vmatmul.f32.gmra.mxu0 %v1872
        %v1890 = vpop.f32.mrf.mxu0
        %v1891 = vadd.f32 %v646, %v1890
        %1892 = vdwg.mxu0
        %1893 = vmatpush.msra.mxu0 %v526
        %1894 = vmatpush.msra.mxu0 %v524
        %1895 = vmatpush.msra.mxu0 %v522
        %1896 = vmatpush.msra.mxu0 %v520
        %1897 = vmatpush.msra.mxu0 %v518
        %1898 = vmatpush.msra.mxu0 %v516
        %1899 = vmatpush.msra.mxu0 %v514
        %1900 = vmatpush.msra.mxu0 %v512
        %1901 = vmatpush.msra.mxu0 %v510
        %1902 = vmatpush.msra.mxu0 %v508
        %1903 = vmatpush.msra.mxu0 %v506
        %1904 = vmatpush.msra.mxu0 %v504
        %1905 = vmatpush.msra.mxu0 %v502
        %1906 = vmatpush.msra.mxu0 %v500
        %1907 = vmatpush.msra.mxu0 %v498
        %1908 = vmatpush.msra.mxu0 %v496
        %1909 = vmatmul.f32.gmra.mxu0 %v1872
        %v1910 = vpop.f32.mrf.mxu0
        %v1911 = vadd.f32 %v647, %v1910
        %1912 = vdwg.mxu0
        %s1913 = scalar_lea.vmem %s426, 128 [#allocation4]
        %1914 = vst [vmem:[%s1913] sm:$0xff] %v1891
        %1915 = vst [vmem:[%s1913 + $0x8] sm:$0xff] %v1911
        %s1916 = scalar_lea.vmem %s396, 216 [#allocation3]
        %v1917 = vld [vmem:[%s1916] sm:$0xff]
        %v1918 = vld [vmem:[%s1916 + $0x8] sm:$0xff]
        %v1919 = vld [vmem:[%s1916 + $0x10] sm:$0xff]
        %1920 = vmatpush.msra.mxu0 %v491
        %1921 = vmatpush.msra.mxu0 %v488
        %1922 = vmatpush.msra.mxu0 %v485
        %1923 = vmatpush.msra.mxu0 %v482
        %1924 = vmatpush.msra.mxu0 %v479
        %1925 = vmatpush.msra.mxu0 %v476
        %1926 = vmatpush.msra.mxu0 %v473
        %1927 = vmatpush.msra.mxu0 %v470
        %1928 = vmatpush.msra.mxu0 %v467
        %1929 = vmatpush.msra.mxu0 %v464
        %1930 = vmatpush.msra.mxu0 %v461
        %1931 = vmatpush.msra.mxu0 %v458
        %1932 = vmatpush.msra.mxu0 %v455
        %1933 = vmatpush.msra.mxu0 %v452
        %1934 = vmatpush.msra.mxu0 %v449
        %1935 = vmatpush.msra.mxu0 %v446
        %1936 = vmatmul.f32.gmra.mxu0 %v1872
        %v1937 = vpop.f32.mrf.mxu0
        %v1938 = vadd.f32 %v533, %v1937
        %1939 = vdwg.mxu0
        %1940 = vmatpush.msra.mxu0 %v492
        %1941 = vmatpush.msra.mxu0 %v489
        %1942 = vmatpush.msra.mxu0 %v486
        %1943 = vmatpush.msra.mxu0 %v483
        %1944 = vmatpush.msra.mxu0 %v480
        %1945 = vmatpush.msra.mxu0 %v477
        %1946 = vmatpush.msra.mxu0 %v474
        %1947 = vmatpush.msra.mxu0 %v471
        %1948 = vmatpush.msra.mxu0 %v468
        %1949 = vmatpush.msra.mxu0 %v465
        %1950 = vmatpush.msra.mxu0 %v462
        %1951 = vmatpush.msra.mxu0 %v459
        %1952 = vmatpush.msra.mxu0 %v456
        %1953 = vmatpush.msra.mxu0 %v453
        %1954 = vmatpush.msra.mxu0 %v450
        %1955 = vmatpush.msra.mxu0 %v447
        %1956 = vmatmul.f32.gmra.mxu0 %v1872
        %v1957 = vpop.f32.mrf.mxu0
        %v1958 = vadd.f32 %v534, %v1957
        %1959 = vdwg.mxu0
        %1960 = vmatpush.msra.mxu0 %v493
        %1961 = vmatpush.msra.mxu0 %v490
        %1962 = vmatpush.msra.mxu0 %v487
        %1963 = vmatpush.msra.mxu0 %v484
        %1964 = vmatpush.msra.mxu0 %v481
        %1965 = vmatpush.msra.mxu0 %v478
        %1966 = vmatpush.msra.mxu0 %v475
        %1967 = vmatpush.msra.mxu0 %v472
        %1968 = vmatpush.msra.mxu0 %v469
        %1969 = vmatpush.msra.mxu0 %v466
        %1970 = vmatpush.msra.mxu0 %v463
        %1971 = vmatpush.msra.mxu0 %v460
        %1972 = vmatpush.msra.mxu0 %v457
        %1973 = vmatpush.msra.mxu0 %v454
        %1974 = vmatpush.msra.mxu0 %v451
        %1975 = vmatpush.msra.mxu0 %v448
        %1976 = vmatmul.f32.gmra.mxu0 %v1872
        %v1977 = vpop.f32.mrf.mxu0
        %v1978 = vadd.f32 %v535, %v1977
        %1979 = vdwg.mxu0
        %v1980 = vadd.f32 %v1917, %v1938
        %v1981 = vxor.u32 %v1980, 2147483648
        %v1982 = vmul.f32 %v1981, 1.442695
        %v1983 = vpow.pop %v1982
        %v1984 = vadd.f32 %v1983, 1.0
        %v1985 = vrcp.pop %v1984
        %v1986 = vmul.f32 %v1984, %v1985
        %v1987 = vsub.f32 1.0, %v1986
        %v1988 = vmul.f32 %v1985, %v1987
        %v1989 = vadd.f32 %v1985, %v1988
        %vm1990 = vweird.f32 %v1984
        %vm1991 = vweird.f32 %v1985
        %vm1992 = vmor %vm1990, %vm1991
        %v1993 = vsel %vm1992, %v1985, %v1989
        %v1994 = vand.u32 2147483647, %v1984
        %vm1995 = vcmp.eq.f32.partialorder %v1994, 8.507059e+37
        %v1996 = vand.u32 %v1984, 2147483648
        %v1997 = vor.u32 1.1754944e-38, %v1996
        %v1998 = vsel %vm1995, %v1997, %v1993
        %v1999 = vmul.f32 1.0, %v1998
        %v2000 = vadd.f32 %v1918, %v1958
        %v2001 = vxor.u32 %v2000, 2147483648
        %v2002 = vmul.f32 %v2001, 1.442695
        %v2003 = vpow.pop %v2002
        %v2004 = vadd.f32 %v2003, 1.0
        %v2005 = vrcp.pop %v2004
        %v2006 = vmul.f32 %v2004, %v2005
        %v2007 = vsub.f32 1.0, %v2006
        %v2008 = vmul.f32 %v2005, %v2007
        %v2009 = vadd.f32 %v2005, %v2008
        %vm2010 = vweird.f32 %v2004
        %vm2011 = vweird.f32 %v2005
        %vm2012 = vmor %vm2010, %vm2011
        %v2013 = vsel %vm2012, %v2005, %v2009
        %v2014 = vand.u32 2147483647, %v2004
        %vm2015 = vcmp.eq.f32.partialorder %v2014, 8.507059e+37
        %v2016 = vand.u32 %v2004, 2147483648
        %v2017 = vor.u32 1.1754944e-38, %v2016
        %v2018 = vsel %vm2015, %v2017, %v2013
        %v2019 = vmul.f32 1.0, %v2018
        %v2020 = vmul.f32 %v1999, %v1978
        %v2021 = vadd.f32 %v1919, %v2020
        %v2022 = vtanh.pop %v2021
        %v2023 = vsub.f32 %v1872, %v2022
        %v2024 = vmul.f32 %v2019, %v2023
        %v2025 = vadd.f32 %v2022, %v2024
        %2026 = vmatpush.msra.mxu0 %v525
        %2027 = vmatpush.msra.mxu0 %v523
        %2028 = vmatpush.msra.mxu0 %v521
        %2029 = vmatpush.msra.mxu0 %v519
        %2030 = vmatpush.msra.mxu0 %v517
        %2031 = vmatpush.msra.mxu0 %v515
        %2032 = vmatpush.msra.mxu0 %v513
        %2033 = vmatpush.msra.mxu0 %v511
        %2034 = vmatpush.msra.mxu0 %v509
        %2035 = vmatpush.msra.mxu0 %v507
        %2036 = vmatpush.msra.mxu0 %v505
        %2037 = vmatpush.msra.mxu0 %v503
        %2038 = vmatpush.msra.mxu0 %v501
        %2039 = vmatpush.msra.mxu0 %v499
        %2040 = vmatpush.msra.mxu0 %v497
        %2041 = vmatpush.msra.mxu0 %v495
        %2042 = vmatmul.f32.gmra.mxu0 %v2025
        %v2043 = vpop.f32.mrf.mxu0
        %v2044 = vadd.f32 %v646, %v2043
        %2045 = vdwg.mxu0
        %2046 = vmatpush.msra.mxu0 %v526
        %2047 = vmatpush.msra.mxu0 %v524
        %2048 = vmatpush.msra.mxu0 %v522
        %2049 = vmatpush.msra.mxu0 %v520
        %2050 = vmatpush.msra.mxu0 %v518
        %2051 = vmatpush.msra.mxu0 %v516
        %2052 = vmatpush.msra.mxu0 %v514
        %2053 = vmatpush.msra.mxu0 %v512
        %2054 = vmatpush.msra.mxu0 %v510
        %2055 = vmatpush.msra.mxu0 %v508
        %2056 = vmatpush.msra.mxu0 %v506
        %2057 = vmatpush.msra.mxu0 %v504
        %2058 = vmatpush.msra.mxu0 %v502
        %2059 = vmatpush.msra.mxu0 %v500
        %2060 = vmatpush.msra.mxu0 %v498
        %2061 = vmatpush.msra.mxu0 %v496
        %2062 = vmatmul.f32.gmra.mxu0 %v2025
        %v2063 = vpop.f32.mrf.mxu0
        %v2064 = vadd.f32 %v647, %v2063
        %2065 = vdwg.mxu0
        %s2066 = scalar_lea.vmem %s426, 144 [#allocation4]
        %2067 = vst [vmem:[%s2066] sm:$0xff] %v2044
        %2068 = vst [vmem:[%s2066 + $0x8] sm:$0xff] %v2064
        %s2069 = scalar_lea.vmem %s396, 240 [#allocation3]
        %v2070 = vld [vmem:[%s2069] sm:$0xff]
        %v2071 = vld [vmem:[%s2069 + $0x8] sm:$0xff]
        %v2072 = vld [vmem:[%s2069 + $0x10] sm:$0xff]
        %2073 = vmatpush.msra.mxu0 %v491
        %2074 = vmatpush.msra.mxu0 %v488
        %2075 = vmatpush.msra.mxu0 %v485
        %2076 = vmatpush.msra.mxu0 %v482
        %2077 = vmatpush.msra.mxu0 %v479
        %2078 = vmatpush.msra.mxu0 %v476
        %2079 = vmatpush.msra.mxu0 %v473
        %2080 = vmatpush.msra.mxu0 %v470
        %2081 = vmatpush.msra.mxu0 %v467
        %2082 = vmatpush.msra.mxu0 %v464
        %2083 = vmatpush.msra.mxu0 %v461
        %2084 = vmatpush.msra.mxu0 %v458
        %2085 = vmatpush.msra.mxu0 %v455
        %2086 = vmatpush.msra.mxu0 %v452
        %2087 = vmatpush.msra.mxu0 %v449
        %2088 = vmatpush.msra.mxu0 %v446
        %2089 = vmatmul.f32.gmra.mxu0 %v2025
        %v2090 = vpop.f32.mrf.mxu0
        %v2091 = vadd.f32 %v533, %v2090
        %2092 = vdwg.mxu0
        %2093 = vmatpush.msra.mxu0 %v492
        %2094 = vmatpush.msra.mxu0 %v489
        %2095 = vmatpush.msra.mxu0 %v486
        %2096 = vmatpush.msra.mxu0 %v483
        %2097 = vmatpush.msra.mxu0 %v480
        %2098 = vmatpush.msra.mxu0 %v477
        %2099 = vmatpush.msra.mxu0 %v474
        %2100 = vmatpush.msra.mxu0 %v471
        %2101 = vmatpush.msra.mxu0 %v468
        %2102 = vmatpush.msra.mxu0 %v465
        %2103 = vmatpush.msra.mxu0 %v462
        %2104 = vmatpush.msra.mxu0 %v459
        %2105 = vmatpush.msra.mxu0 %v456
        %2106 = vmatpush.msra.mxu0 %v453
        %2107 = vmatpush.msra.mxu0 %v450
        %2108 = vmatpush.msra.mxu0 %v447
        %2109 = vmatmul.f32.gmra.mxu0 %v2025
        %v2110 = vpop.f32.mrf.mxu0
        %v2111 = vadd.f32 %v534, %v2110
        %2112 = vdwg.mxu0
        %2113 = vmatpush.msra.mxu0 %v493
        %2114 = vmatpush.msra.mxu0 %v490
        %2115 = vmatpush.msra.mxu0 %v487
        %2116 = vmatpush.msra.mxu0 %v484
        %2117 = vmatpush.msra.mxu0 %v481
        %2118 = vmatpush.msra.mxu0 %v478
        %2119 = vmatpush.msra.mxu0 %v475
        %2120 = vmatpush.msra.mxu0 %v472
        %2121 = vmatpush.msra.mxu0 %v469
        %2122 = vmatpush.msra.mxu0 %v466
        %2123 = vmatpush.msra.mxu0 %v463
        %2124 = vmatpush.msra.mxu0 %v460
        %2125 = vmatpush.msra.mxu0 %v457
        %2126 = vmatpush.msra.mxu0 %v454
        %2127 = vmatpush.msra.mxu0 %v451
        %2128 = vmatpush.msra.mxu0 %v448
        %2129 = vmatmul.f32.gmra.mxu0 %v2025
        %v2130 = vpop.f32.mrf.mxu0
        %v2131 = vadd.f32 %v535, %v2130
        %2132 = vdwg.mxu0
        %v2133 = vadd.f32 %v2070, %v2091
        %v2134 = vxor.u32 %v2133, 2147483648
        %v2135 = vmul.f32 %v2134, 1.442695
        %v2136 = vpow.pop %v2135
        %v2137 = vadd.f32 %v2136, 1.0
        %v2138 = vrcp.pop %v2137
        %v2139 = vmul.f32 %v2137, %v2138
        %v2140 = vsub.f32 1.0, %v2139
        %v2141 = vmul.f32 %v2138, %v2140
        %v2142 = vadd.f32 %v2138, %v2141
        %vm2143 = vweird.f32 %v2137
        %vm2144 = vweird.f32 %v2138
        %vm2145 = vmor %vm2143, %vm2144
        %v2146 = vsel %vm2145, %v2138, %v2142
        %v2147 = vand.u32 2147483647, %v2137
        %vm2148 = vcmp.eq.f32.partialorder %v2147, 8.507059e+37
        %v2149 = vand.u32 %v2137, 2147483648
        %v2150 = vor.u32 1.1754944e-38, %v2149
        %v2151 = vsel %vm2148, %v2150, %v2146
        %v2152 = vmul.f32 1.0, %v2151
        %v2153 = vadd.f32 %v2071, %v2111
        %v2154 = vxor.u32 %v2153, 2147483648
        %v2155 = vmul.f32 %v2154, 1.442695
        %v2156 = vpow.pop %v2155
        %v2157 = vadd.f32 %v2156, 1.0
        %v2158 = vrcp.pop %v2157
        %v2159 = vmul.f32 %v2157, %v2158
        %v2160 = vsub.f32 1.0, %v2159
        %v2161 = vmul.f32 %v2158, %v2160
        %v2162 = vadd.f32 %v2158, %v2161
        %vm2163 = vweird.f32 %v2157
        %vm2164 = vweird.f32 %v2158
        %vm2165 = vmor %vm2163, %vm2164
        %v2166 = vsel %vm2165, %v2158, %v2162
        %v2167 = vand.u32 2147483647, %v2157
        %vm2168 = vcmp.eq.f32.partialorder %v2167, 8.507059e+37
        %v2169 = vand.u32 %v2157, 2147483648
        %v2170 = vor.u32 1.1754944e-38, %v2169
        %v2171 = vsel %vm2168, %v2170, %v2166
        %v2172 = vmul.f32 1.0, %v2171
        %v2173 = vmul.f32 %v2152, %v2131
        %v2174 = vadd.f32 %v2072, %v2173
        %v2175 = vtanh.pop %v2174
        %v2176 = vsub.f32 %v2025, %v2175
        %v2177 = vmul.f32 %v2172, %v2176
        %v2178 = vadd.f32 %v2175, %v2177
        %2179 = vmatpush.msra.mxu0 %v525
        %2180 = vmatpush.msra.mxu0 %v523
        %2181 = vmatpush.msra.mxu0 %v521
        %2182 = vmatpush.msra.mxu0 %v519
        %2183 = vmatpush.msra.mxu0 %v517
        %2184 = vmatpush.msra.mxu0 %v515
        %2185 = vmatpush.msra.mxu0 %v513
        %2186 = vmatpush.msra.mxu0 %v511
        %2187 = vmatpush.msra.mxu0 %v509
        %2188 = vmatpush.msra.mxu0 %v507
        %2189 = vmatpush.msra.mxu0 %v505
        %2190 = vmatpush.msra.mxu0 %v503
        %2191 = vmatpush.msra.mxu0 %v501
        %2192 = vmatpush.msra.mxu0 %v499
        %2193 = vmatpush.msra.mxu0 %v497
        %2194 = vmatpush.msra.mxu0 %v495
        %2195 = vmatmul.f32.gmra.mxu0 %v2178
        %v2196 = vpop.f32.mrf.mxu0
        %v2197 = vadd.f32 %v646, %v2196
        %2198 = vdwg.mxu0
        %2199 = vmatpush.msra.mxu0 %v526
        %2200 = vmatpush.msra.mxu0 %v524
        %2201 = vmatpush.msra.mxu0 %v522
        %2202 = vmatpush.msra.mxu0 %v520
        %2203 = vmatpush.msra.mxu0 %v518
        %2204 = vmatpush.msra.mxu0 %v516
        %2205 = vmatpush.msra.mxu0 %v514
        %2206 = vmatpush.msra.mxu0 %v512
        %2207 = vmatpush.msra.mxu0 %v510
        %2208 = vmatpush.msra.mxu0 %v508
        %2209 = vmatpush.msra.mxu0 %v506
        %2210 = vmatpush.msra.mxu0 %v504
        %2211 = vmatpush.msra.mxu0 %v502
        %2212 = vmatpush.msra.mxu0 %v500
        %2213 = vmatpush.msra.mxu0 %v498
        %2214 = vmatpush.msra.mxu0 %v496
        %2215 = vmatmul.f32.gmra.mxu0 %v2178
        %v2216 = vpop.f32.mrf.mxu0
        %v2217 = vadd.f32 %v647, %v2216
        %2218 = vdwg.mxu0
        %s2219 = scalar_lea.vmem %s426, 160 [#allocation4]
        %2220 = vst [vmem:[%s2219] sm:$0xff] %v2197
        %2221 = vst [vmem:[%s2219 + $0x8] sm:$0xff] %v2217
        %s2222 = scalar_lea.vmem %s396, 264 [#allocation3]
        %v2223 = vld [vmem:[%s2222] sm:$0xff]
        %v2224 = vld [vmem:[%s2222 + $0x8] sm:$0xff]
        %v2225 = vld [vmem:[%s2222 + $0x10] sm:$0xff]
        %2226 = vmatpush.msra.mxu0 %v491
        %2227 = vmatpush.msra.mxu0 %v488
        %2228 = vmatpush.msra.mxu0 %v485
        %2229 = vmatpush.msra.mxu0 %v482
        %2230 = vmatpush.msra.mxu0 %v479
        %2231 = vmatpush.msra.mxu0 %v476
        %2232 = vmatpush.msra.mxu0 %v473
        %2233 = vmatpush.msra.mxu0 %v470
        %2234 = vmatpush.msra.mxu0 %v467
        %2235 = vmatpush.msra.mxu0 %v464
        %2236 = vmatpush.msra.mxu0 %v461
        %2237 = vmatpush.msra.mxu0 %v458
        %2238 = vmatpush.msra.mxu0 %v455
        %2239 = vmatpush.msra.mxu0 %v452
        %2240 = vmatpush.msra.mxu0 %v449
        %2241 = vmatpush.msra.mxu0 %v446
        %2242 = vmatmul.f32.gmra.mxu0 %v2178
        %v2243 = vpop.f32.mrf.mxu0
        %v2244 = vadd.f32 %v533, %v2243
        %2245 = vdwg.mxu0
        %2246 = vmatpush.msra.mxu0 %v492
        %2247 = vmatpush.msra.mxu0 %v489
        %2248 = vmatpush.msra.mxu0 %v486
        %2249 = vmatpush.msra.mxu0 %v483
        %2250 = vmatpush.msra.mxu0 %v480
        %2251 = vmatpush.msra.mxu0 %v477
        %2252 = vmatpush.msra.mxu0 %v474
        %2253 = vmatpush.msra.mxu0 %v471
        %2254 = vmatpush.msra.mxu0 %v468
        %2255 = vmatpush.msra.mxu0 %v465
        %2256 = vmatpush.msra.mxu0 %v462
        %2257 = vmatpush.msra.mxu0 %v459
        %2258 = vmatpush.msra.mxu0 %v456
        %2259 = vmatpush.msra.mxu0 %v453
        %2260 = vmatpush.msra.mxu0 %v450
        %2261 = vmatpush.msra.mxu0 %v447
        %2262 = vmatmul.f32.gmra.mxu0 %v2178
        %v2263 = vpop.f32.mrf.mxu0
        %v2264 = vadd.f32 %v534, %v2263
        %2265 = vdwg.mxu0
        %2266 = vmatpush.msra.mxu0 %v493
        %2267 = vmatpush.msra.mxu0 %v490
        %2268 = vmatpush.msra.mxu0 %v487
        %2269 = vmatpush.msra.mxu0 %v484
        %2270 = vmatpush.msra.mxu0 %v481
        %2271 = vmatpush.msra.mxu0 %v478
        %2272 = vmatpush.msra.mxu0 %v475
        %2273 = vmatpush.msra.mxu0 %v472
        %2274 = vmatpush.msra.mxu0 %v469
        %2275 = vmatpush.msra.mxu0 %v466
        %2276 = vmatpush.msra.mxu0 %v463
        %2277 = vmatpush.msra.mxu0 %v460
        %2278 = vmatpush.msra.mxu0 %v457
        %2279 = vmatpush.msra.mxu0 %v454
        %2280 = vmatpush.msra.mxu0 %v451
        %2281 = vmatpush.msra.mxu0 %v448
        %2282 = vmatmul.f32.gmra.mxu0 %v2178
        %v2283 = vpop.f32.mrf.mxu0
        %v2284 = vadd.f32 %v535, %v2283
        %2285 = vdwg.mxu0
        %v2286 = vadd.f32 %v2223, %v2244
        %v2287 = vxor.u32 %v2286, 2147483648
        %v2288 = vmul.f32 %v2287, 1.442695
        %v2289 = vpow.pop %v2288
        %v2290 = vadd.f32 %v2289, 1.0
        %v2291 = vrcp.pop %v2290
        %v2292 = vmul.f32 %v2290, %v2291
        %v2293 = vsub.f32 1.0, %v2292
        %v2294 = vmul.f32 %v2291, %v2293
        %v2295 = vadd.f32 %v2291, %v2294
        %vm2296 = vweird.f32 %v2290
        %vm2297 = vweird.f32 %v2291
        %vm2298 = vmor %vm2296, %vm2297
        %v2299 = vsel %vm2298, %v2291, %v2295
        %v2300 = vand.u32 2147483647, %v2290
        %vm2301 = vcmp.eq.f32.partialorder %v2300, 8.507059e+37
        %v2302 = vand.u32 %v2290, 2147483648
        %v2303 = vor.u32 1.1754944e-38, %v2302
        %v2304 = vsel %vm2301, %v2303, %v2299
        %v2305 = vmul.f32 1.0, %v2304
        %v2306 = vadd.f32 %v2224, %v2264
        %v2307 = vxor.u32 %v2306, 2147483648
        %v2308 = vmul.f32 %v2307, 1.442695
        %v2309 = vpow.pop %v2308
        %v2310 = vadd.f32 %v2309, 1.0
        %v2311 = vrcp.pop %v2310
        %v2312 = vmul.f32 %v2310, %v2311
        %v2313 = vsub.f32 1.0, %v2312
        %v2314 = vmul.f32 %v2311, %v2313
        %v2315 = vadd.f32 %v2311, %v2314
        %vm2316 = vweird.f32 %v2310
        %vm2317 = vweird.f32 %v2311
        %vm2318 = vmor %vm2316, %vm2317
        %v2319 = vsel %vm2318, %v2311, %v2315
        %v2320 = vand.u32 2147483647, %v2310
        %vm2321 = vcmp.eq.f32.partialorder %v2320, 8.507059e+37
        %v2322 = vand.u32 %v2310, 2147483648
        %v2323 = vor.u32 1.1754944e-38, %v2322
        %v2324 = vsel %vm2321, %v2323, %v2319
        %v2325 = vmul.f32 1.0, %v2324
        %v2326 = vmul.f32 %v2305, %v2284
        %v2327 = vadd.f32 %v2225, %v2326
        %v2328 = vtanh.pop %v2327
        %v2329 = vsub.f32 %v2178, %v2328
        %v2330 = vmul.f32 %v2325, %v2329
        %v2331 = vadd.f32 %v2328, %v2330
        %2332 = vmatpush.msra.mxu0 %v525
        %2333 = vmatpush.msra.mxu0 %v523
        %2334 = vmatpush.msra.mxu0 %v521
        %2335 = vmatpush.msra.mxu0 %v519
        %2336 = vmatpush.msra.mxu0 %v517
        %2337 = vmatpush.msra.mxu0 %v515
        %2338 = vmatpush.msra.mxu0 %v513
        %2339 = vmatpush.msra.mxu0 %v511
        %2340 = vmatpush.msra.mxu0 %v509
        %2341 = vmatpush.msra.mxu0 %v507
        %2342 = vmatpush.msra.mxu0 %v505
        %2343 = vmatpush.msra.mxu0 %v503
        %2344 = vmatpush.msra.mxu0 %v501
        %2345 = vmatpush.msra.mxu0 %v499
        %2346 = vmatpush.msra.mxu0 %v497
        %2347 = vmatpush.msra.mxu0 %v495
        %2348 = vmatmul.f32.gmra.mxu0 %v2331
        %v2349 = vpop.f32.mrf.mxu0
        %v2350 = vadd.f32 %v646, %v2349
        %2351 = vdwg.mxu0
        %2352 = vmatpush.msra.mxu0 %v526
        %2353 = vmatpush.msra.mxu0 %v524
        %2354 = vmatpush.msra.mxu0 %v522
        %2355 = vmatpush.msra.mxu0 %v520
        %2356 = vmatpush.msra.mxu0 %v518
        %2357 = vmatpush.msra.mxu0 %v516
        %2358 = vmatpush.msra.mxu0 %v514
        %2359 = vmatpush.msra.mxu0 %v512
        %2360 = vmatpush.msra.mxu0 %v510
        %2361 = vmatpush.msra.mxu0 %v508
        %2362 = vmatpush.msra.mxu0 %v506
        %2363 = vmatpush.msra.mxu0 %v504
        %2364 = vmatpush.msra.mxu0 %v502
        %2365 = vmatpush.msra.mxu0 %v500
        %2366 = vmatpush.msra.mxu0 %v498
        %2367 = vmatpush.msra.mxu0 %v496
        %2368 = vmatmul.f32.gmra.mxu0 %v2331
        %v2369 = vpop.f32.mrf.mxu0
        %v2370 = vadd.f32 %v647, %v2369
        %2371 = vdwg.mxu0
        %s2372 = scalar_lea.vmem %s426, 176 [#allocation4]
        %2373 = vst [vmem:[%s2372] sm:$0xff] %v2350
        %2374 = vst [vmem:[%s2372 + $0x8] sm:$0xff] %v2370
        %s2375 = scalar_lea.vmem %s396, 288 [#allocation3]
        %v2376 = vld [vmem:[%s2375] sm:$0xff]
        %v2377 = vld [vmem:[%s2375 + $0x8] sm:$0xff]
        %v2378 = vld [vmem:[%s2375 + $0x10] sm:$0xff]
        %2379 = vmatpush.msra.mxu0 %v491
        %2380 = vmatpush.msra.mxu0 %v488
        %2381 = vmatpush.msra.mxu0 %v485
        %2382 = vmatpush.msra.mxu0 %v482
        %2383 = vmatpush.msra.mxu0 %v479
        %2384 = vmatpush.msra.mxu0 %v476
        %2385 = vmatpush.msra.mxu0 %v473
        %2386 = vmatpush.msra.mxu0 %v470
        %2387 = vmatpush.msra.mxu0 %v467
        %2388 = vmatpush.msra.mxu0 %v464
        %2389 = vmatpush.msra.mxu0 %v461
        %2390 = vmatpush.msra.mxu0 %v458
        %2391 = vmatpush.msra.mxu0 %v455
        %2392 = vmatpush.msra.mxu0 %v452
        %2393 = vmatpush.msra.mxu0 %v449
        %2394 = vmatpush.msra.mxu0 %v446
        %2395 = vmatmul.f32.gmra.mxu0 %v2331
        %v2396 = vpop.f32.mrf.mxu0
        %v2397 = vadd.f32 %v533, %v2396
        %2398 = vdwg.mxu0
        %2399 = vmatpush.msra.mxu0 %v492
        %2400 = vmatpush.msra.mxu0 %v489
        %2401 = vmatpush.msra.mxu0 %v486
        %2402 = vmatpush.msra.mxu0 %v483
        %2403 = vmatpush.msra.mxu0 %v480
        %2404 = vmatpush.msra.mxu0 %v477
        %2405 = vmatpush.msra.mxu0 %v474
        %2406 = vmatpush.msra.mxu0 %v471
        %2407 = vmatpush.msra.mxu0 %v468
        %2408 = vmatpush.msra.mxu0 %v465
        %2409 = vmatpush.msra.mxu0 %v462
        %2410 = vmatpush.msra.mxu0 %v459
        %2411 = vmatpush.msra.mxu0 %v456
        %2412 = vmatpush.msra.mxu0 %v453
        %2413 = vmatpush.msra.mxu0 %v450
        %2414 = vmatpush.msra.mxu0 %v447
        %2415 = vmatmul.f32.gmra.mxu0 %v2331
        %v2416 = vpop.f32.mrf.mxu0
        %v2417 = vadd.f32 %v534, %v2416
        %2418 = vdwg.mxu0
        %2419 = vmatpush.msra.mxu0 %v493
        %2420 = vmatpush.msra.mxu0 %v490
        %2421 = vmatpush.msra.mxu0 %v487
        %2422 = vmatpush.msra.mxu0 %v484
        %2423 = vmatpush.msra.mxu0 %v481
        %2424 = vmatpush.msra.mxu0 %v478
        %2425 = vmatpush.msra.mxu0 %v475
        %2426 = vmatpush.msra.mxu0 %v472
        %2427 = vmatpush.msra.mxu0 %v469
        %2428 = vmatpush.msra.mxu0 %v466
        %2429 = vmatpush.msra.mxu0 %v463
        %2430 = vmatpush.msra.mxu0 %v460
        %2431 = vmatpush.msra.mxu0 %v457
        %2432 = vmatpush.msra.mxu0 %v454
        %2433 = vmatpush.msra.mxu0 %v451
        %2434 = vmatpush.msra.mxu0 %v448
        %2435 = vmatmul.f32.gmra.mxu0 %v2331
        %v2436 = vpop.f32.mrf.mxu0
        %v2437 = vadd.f32 %v535, %v2436
        %2438 = vdwg.mxu0
        %v2439 = vadd.f32 %v2376, %v2397
        %v2440 = vxor.u32 %v2439, 2147483648
        %v2441 = vmul.f32 %v2440, 1.442695
        %v2442 = vpow.pop %v2441
        %v2443 = vadd.f32 %v2442, 1.0
        %v2444 = vrcp.pop %v2443
        %v2445 = vmul.f32 %v2443, %v2444
        %v2446 = vsub.f32 1.0, %v2445
        %v2447 = vmul.f32 %v2444, %v2446
        %v2448 = vadd.f32 %v2444, %v2447
        %vm2449 = vweird.f32 %v2443
        %vm2450 = vweird.f32 %v2444
        %vm2451 = vmor %vm2449, %vm2450
        %v2452 = vsel %vm2451, %v2444, %v2448
        %v2453 = vand.u32 2147483647, %v2443
        %vm2454 = vcmp.eq.f32.partialorder %v2453, 8.507059e+37
        %v2455 = vand.u32 %v2443, 2147483648
        %v2456 = vor.u32 1.1754944e-38, %v2455
        %v2457 = vsel %vm2454, %v2456, %v2452
        %v2458 = vmul.f32 1.0, %v2457
        %v2459 = vadd.f32 %v2377, %v2417
        %v2460 = vxor.u32 %v2459, 2147483648
        %v2461 = vmul.f32 %v2460, 1.442695
        %v2462 = vpow.pop %v2461
        %v2463 = vadd.f32 %v2462, 1.0
        %v2464 = vrcp.pop %v2463
        %v2465 = vmul.f32 %v2463, %v2464
        %v2466 = vsub.f32 1.0, %v2465
        %v2467 = vmul.f32 %v2464, %v2466
        %v2468 = vadd.f32 %v2464, %v2467
        %vm2469 = vweird.f32 %v2463
        %vm2470 = vweird.f32 %v2464
        %vm2471 = vmor %vm2469, %vm2470
        %v2472 = vsel %vm2471, %v2464, %v2468
        %v2473 = vand.u32 2147483647, %v2463
        %vm2474 = vcmp.eq.f32.partialorder %v2473, 8.507059e+37
        %v2475 = vand.u32 %v2463, 2147483648
        %v2476 = vor.u32 1.1754944e-38, %v2475
        %v2477 = vsel %vm2474, %v2476, %v2472
        %v2478 = vmul.f32 1.0, %v2477
        %v2479 = vmul.f32 %v2458, %v2437
        %v2480 = vadd.f32 %v2378, %v2479
        %v2481 = vtanh.pop %v2480
        %v2482 = vsub.f32 %v2331, %v2481
        %v2483 = vmul.f32 %v2478, %v2482
        %v2484 = vadd.f32 %v2481, %v2483
        %2485 = vmatpush.msra.mxu0 %v525
        %2486 = vmatpush.msra.mxu0 %v523
        %2487 = vmatpush.msra.mxu0 %v521
        %2488 = vmatpush.msra.mxu0 %v519
        %2489 = vmatpush.msra.mxu0 %v517
        %2490 = vmatpush.msra.mxu0 %v515
        %2491 = vmatpush.msra.mxu0 %v513
        %2492 = vmatpush.msra.mxu0 %v511
        %2493 = vmatpush.msra.mxu0 %v509
        %2494 = vmatpush.msra.mxu0 %v507
        %2495 = vmatpush.msra.mxu0 %v505
        %2496 = vmatpush.msra.mxu0 %v503
        %2497 = vmatpush.msra.mxu0 %v501
        %2498 = vmatpush.msra.mxu0 %v499
        %2499 = vmatpush.msra.mxu0 %v497
        %2500 = vmatpush.msra.mxu0 %v495
        %2501 = vmatmul.f32.gmra.mxu0 %v2484
        %v2502 = vpop.f32.mrf.mxu0
        %v2503 = vadd.f32 %v646, %v2502
        %2504 = vdwg.mxu0
        %2505 = vmatpush.msra.mxu0 %v526
        %2506 = vmatpush.msra.mxu0 %v524
        %2507 = vmatpush.msra.mxu0 %v522
        %2508 = vmatpush.msra.mxu0 %v520
        %2509 = vmatpush.msra.mxu0 %v518
        %2510 = vmatpush.msra.mxu0 %v516
        %2511 = vmatpush.msra.mxu0 %v514
        %2512 = vmatpush.msra.mxu0 %v512
        %2513 = vmatpush.msra.mxu0 %v510
        %2514 = vmatpush.msra.mxu0 %v508
        %2515 = vmatpush.msra.mxu0 %v506
        %2516 = vmatpush.msra.mxu0 %v504
        %2517 = vmatpush.msra.mxu0 %v502
        %2518 = vmatpush.msra.mxu0 %v500
        %2519 = vmatpush.msra.mxu0 %v498
        %2520 = vmatpush.msra.mxu0 %v496
        %2521 = vmatmul.f32.gmra.mxu0 %v2484
        %v2522 = vpop.f32.mrf.mxu0
        %v2523 = vadd.f32 %v647, %v2522
        %2524 = vdwg.mxu0
        %s2525 = scalar_lea.vmem %s426, 192 [#allocation4]
        %2526 = vst [vmem:[%s2525] sm:$0xff] %v2503
        %2527 = vst [vmem:[%s2525 + $0x8] sm:$0xff] %v2523
        %s2528 = scalar_lea.vmem %s396, 312 [#allocation3]
        %v2529 = vld [vmem:[%s2528] sm:$0xff]
        %v2530 = vld [vmem:[%s2528 + $0x8] sm:$0xff]
        %v2531 = vld [vmem:[%s2528 + $0x10] sm:$0xff]
        %2532 = vmatpush.msra.mxu0 %v491
        %2533 = vmatpush.msra.mxu0 %v488
        %2534 = vmatpush.msra.mxu0 %v485
        %2535 = vmatpush.msra.mxu0 %v482
        %2536 = vmatpush.msra.mxu0 %v479
        %2537 = vmatpush.msra.mxu0 %v476
        %2538 = vmatpush.msra.mxu0 %v473
        %2539 = vmatpush.msra.mxu0 %v470
        %2540 = vmatpush.msra.mxu0 %v467
        %2541 = vmatpush.msra.mxu0 %v464
        %2542 = vmatpush.msra.mxu0 %v461
        %2543 = vmatpush.msra.mxu0 %v458
        %2544 = vmatpush.msra.mxu0 %v455
        %2545 = vmatpush.msra.mxu0 %v452
        %2546 = vmatpush.msra.mxu0 %v449
        %2547 = vmatpush.msra.mxu0 %v446
        %2548 = vmatmul.f32.gmra.mxu0 %v2484
        %v2549 = vpop.f32.mrf.mxu0
        %v2550 = vadd.f32 %v533, %v2549
        %2551 = vdwg.mxu0
        %2552 = vmatpush.msra.mxu0 %v492
        %2553 = vmatpush.msra.mxu0 %v489
        %2554 = vmatpush.msra.mxu0 %v486
        %2555 = vmatpush.msra.mxu0 %v483
        %2556 = vmatpush.msra.mxu0 %v480
        %2557 = vmatpush.msra.mxu0 %v477
        %2558 = vmatpush.msra.mxu0 %v474
        %2559 = vmatpush.msra.mxu0 %v471
        %2560 = vmatpush.msra.mxu0 %v468
        %2561 = vmatpush.msra.mxu0 %v465
        %2562 = vmatpush.msra.mxu0 %v462
        %2563 = vmatpush.msra.mxu0 %v459
        %2564 = vmatpush.msra.mxu0 %v456
        %2565 = vmatpush.msra.mxu0 %v453
        %2566 = vmatpush.msra.mxu0 %v450
        %2567 = vmatpush.msra.mxu0 %v447
        %2568 = vmatmul.f32.gmra.mxu0 %v2484
        %v2569 = vpop.f32.mrf.mxu0
        %v2570 = vadd.f32 %v534, %v2569
        %2571 = vdwg.mxu0
        %2572 = vmatpush.msra.mxu0 %v493
        %2573 = vmatpush.msra.mxu0 %v490
        %2574 = vmatpush.msra.mxu0 %v487
        %2575 = vmatpush.msra.mxu0 %v484
        %2576 = vmatpush.msra.mxu0 %v481
        %2577 = vmatpush.msra.mxu0 %v478
        %2578 = vmatpush.msra.mxu0 %v475
        %2579 = vmatpush.msra.mxu0 %v472
        %2580 = vmatpush.msra.mxu0 %v469
        %2581 = vmatpush.msra.mxu0 %v466
        %2582 = vmatpush.msra.mxu0 %v463
        %2583 = vmatpush.msra.mxu0 %v460
        %2584 = vmatpush.msra.mxu0 %v457
        %2585 = vmatpush.msra.mxu0 %v454
        %2586 = vmatpush.msra.mxu0 %v451
        %2587 = vmatpush.msra.mxu0 %v448
        %2588 = vmatmul.f32.gmra.mxu0 %v2484
        %v2589 = vpop.f32.mrf.mxu0
        %v2590 = vadd.f32 %v535, %v2589
        %2591 = vdwg.mxu0
        %v2592 = vadd.f32 %v2529, %v2550
        %v2593 = vxor.u32 %v2592, 2147483648
        %v2594 = vmul.f32 %v2593, 1.442695
        %v2595 = vpow.pop %v2594
        %v2596 = vadd.f32 %v2595, 1.0
        %v2597 = vrcp.pop %v2596
        %v2598 = vmul.f32 %v2596, %v2597
        %v2599 = vsub.f32 1.0, %v2598
        %v2600 = vmul.f32 %v2597, %v2599
        %v2601 = vadd.f32 %v2597, %v2600
        %vm2602 = vweird.f32 %v2596
        %vm2603 = vweird.f32 %v2597
        %vm2604 = vmor %vm2602, %vm2603
        %v2605 = vsel %vm2604, %v2597, %v2601
        %v2606 = vand.u32 2147483647, %v2596
        %vm2607 = vcmp.eq.f32.partialorder %v2606, 8.507059e+37
        %v2608 = vand.u32 %v2596, 2147483648
        %v2609 = vor.u32 1.1754944e-38, %v2608
        %v2610 = vsel %vm2607, %v2609, %v2605
        %v2611 = vmul.f32 1.0, %v2610
        %v2612 = vadd.f32 %v2530, %v2570
        %v2613 = vxor.u32 %v2612, 2147483648
        %v2614 = vmul.f32 %v2613, 1.442695
        %v2615 = vpow.pop %v2614
        %v2616 = vadd.f32 %v2615, 1.0
        %v2617 = vrcp.pop %v2616
        %v2618 = vmul.f32 %v2616, %v2617
        %v2619 = vsub.f32 1.0, %v2618
        %v2620 = vmul.f32 %v2617, %v2619
        %v2621 = vadd.f32 %v2617, %v2620
        %vm2622 = vweird.f32 %v2616
        %vm2623 = vweird.f32 %v2617
        %vm2624 = vmor %vm2622, %vm2623
        %v2625 = vsel %vm2624, %v2617, %v2621
        %v2626 = vand.u32 2147483647, %v2616
        %vm2627 = vcmp.eq.f32.partialorder %v2626, 8.507059e+37
        %v2628 = vand.u32 %v2616, 2147483648
        %v2629 = vor.u32 1.1754944e-38, %v2628
        %v2630 = vsel %vm2627, %v2629, %v2625
        %v2631 = vmul.f32 1.0, %v2630
        %v2632 = vmul.f32 %v2611, %v2590
        %v2633 = vadd.f32 %v2531, %v2632
        %v2634 = vtanh.pop %v2633
        %v2635 = vsub.f32 %v2484, %v2634
        %v2636 = vmul.f32 %v2631, %v2635
        %v2637 = vadd.f32 %v2634, %v2636
        %2638 = vmatpush.msra.mxu0 %v525
        %2639 = vmatpush.msra.mxu0 %v523
        %2640 = vmatpush.msra.mxu0 %v521
        %2641 = vmatpush.msra.mxu0 %v519
        %2642 = vmatpush.msra.mxu0 %v517
        %2643 = vmatpush.msra.mxu0 %v515
        %2644 = vmatpush.msra.mxu0 %v513
        %2645 = vmatpush.msra.mxu0 %v511
        %2646 = vmatpush.msra.mxu0 %v509
        %2647 = vmatpush.msra.mxu0 %v507
        %2648 = vmatpush.msra.mxu0 %v505
        %2649 = vmatpush.msra.mxu0 %v503
        %2650 = vmatpush.msra.mxu0 %v501
        %2651 = vmatpush.msra.mxu0 %v499
        %2652 = vmatpush.msra.mxu0 %v497
        %2653 = vmatpush.msra.mxu0 %v495
        %2654 = vmatmul.f32.gmra.mxu0 %v2637
        %v2655 = vpop.f32.mrf.mxu0
        %v2656 = vadd.f32 %v646, %v2655
        %2657 = vdwg.mxu0
        %2658 = vmatpush.msra.mxu0 %v526
        %2659 = vmatpush.msra.mxu0 %v524
        %2660 = vmatpush.msra.mxu0 %v522
        %2661 = vmatpush.msra.mxu0 %v520
        %2662 = vmatpush.msra.mxu0 %v518
        %2663 = vmatpush.msra.mxu0 %v516
        %2664 = vmatpush.msra.mxu0 %v514
        %2665 = vmatpush.msra.mxu0 %v512
        %2666 = vmatpush.msra.mxu0 %v510
        %2667 = vmatpush.msra.mxu0 %v508
        %2668 = vmatpush.msra.mxu0 %v506
        %2669 = vmatpush.msra.mxu0 %v504
        %2670 = vmatpush.msra.mxu0 %v502
        %2671 = vmatpush.msra.mxu0 %v500
        %2672 = vmatpush.msra.mxu0 %v498
        %2673 = vmatpush.msra.mxu0 %v496
        %2674 = vmatmul.f32.gmra.mxu0 %v2637
        %v2675 = vpop.f32.mrf.mxu0
        %v2676 = vadd.f32 %v647, %v2675
        %2677 = vdwg.mxu0
        %s2678 = scalar_lea.vmem %s426, 208 [#allocation4]
        %2679 = vst [vmem:[%s2678] sm:$0xff] %v2656
        %2680 = vst [vmem:[%s2678 + $0x8] sm:$0xff] %v2676
        %s2681 = scalar_lea.vmem %s396, 336 [#allocation3]
        %v2682 = vld [vmem:[%s2681] sm:$0xff]
        %v2683 = vld [vmem:[%s2681 + $0x8] sm:$0xff]
        %v2684 = vld [vmem:[%s2681 + $0x10] sm:$0xff]
        %2685 = vmatpush.msra.mxu0 %v491
        %2686 = vmatpush.msra.mxu0 %v488
        %2687 = vmatpush.msra.mxu0 %v485
        %2688 = vmatpush.msra.mxu0 %v482
        %2689 = vmatpush.msra.mxu0 %v479
        %2690 = vmatpush.msra.mxu0 %v476
        %2691 = vmatpush.msra.mxu0 %v473
        %2692 = vmatpush.msra.mxu0 %v470
        %2693 = vmatpush.msra.mxu0 %v467
        %2694 = vmatpush.msra.mxu0 %v464
        %2695 = vmatpush.msra.mxu0 %v461
        %2696 = vmatpush.msra.mxu0 %v458
        %2697 = vmatpush.msra.mxu0 %v455
        %2698 = vmatpush.msra.mxu0 %v452
        %2699 = vmatpush.msra.mxu0 %v449
        %2700 = vmatpush.msra.mxu0 %v446
        %2701 = vmatmul.f32.gmra.mxu0 %v2637
        %v2702 = vpop.f32.mrf.mxu0
        %v2703 = vadd.f32 %v533, %v2702
        %2704 = vdwg.mxu0
        %2705 = vmatpush.msra.mxu0 %v492
        %2706 = vmatpush.msra.mxu0 %v489
        %2707 = vmatpush.msra.mxu0 %v486
        %2708 = vmatpush.msra.mxu0 %v483
        %2709 = vmatpush.msra.mxu0 %v480
        %2710 = vmatpush.msra.mxu0 %v477
        %2711 = vmatpush.msra.mxu0 %v474
        %2712 = vmatpush.msra.mxu0 %v471
        %2713 = vmatpush.msra.mxu0 %v468
        %2714 = vmatpush.msra.mxu0 %v465
        %2715 = vmatpush.msra.mxu0 %v462
        %2716 = vmatpush.msra.mxu0 %v459
        %2717 = vmatpush.msra.mxu0 %v456
        %2718 = vmatpush.msra.mxu0 %v453
        %2719 = vmatpush.msra.mxu0 %v450
        %2720 = vmatpush.msra.mxu0 %v447
        %2721 = vmatmul.f32.gmra.mxu0 %v2637
        %v2722 = vpop.f32.mrf.mxu0
        %v2723 = vadd.f32 %v534, %v2722
        %2724 = vdwg.mxu0
        %2725 = vmatpush.msra.mxu0 %v493
        %2726 = vmatpush.msra.mxu0 %v490
        %2727 = vmatpush.msra.mxu0 %v487
        %2728 = vmatpush.msra.mxu0 %v484
        %2729 = vmatpush.msra.mxu0 %v481
        %2730 = vmatpush.msra.mxu0 %v478
        %2731 = vmatpush.msra.mxu0 %v475
        %2732 = vmatpush.msra.mxu0 %v472
        %2733 = vmatpush.msra.mxu0 %v469
        %2734 = vmatpush.msra.mxu0 %v466
        %2735 = vmatpush.msra.mxu0 %v463
        %2736 = vmatpush.msra.mxu0 %v460
        %2737 = vmatpush.msra.mxu0 %v457
        %2738 = vmatpush.msra.mxu0 %v454
        %2739 = vmatpush.msra.mxu0 %v451
        %2740 = vmatpush.msra.mxu0 %v448
        %2741 = vmatmul.f32.gmra.mxu0 %v2637
        %v2742 = vpop.f32.mrf.mxu0
        %v2743 = vadd.f32 %v535, %v2742
        %2744 = vdwg.mxu0
        %v2745 = vadd.f32 %v2682, %v2703
        %v2746 = vxor.u32 %v2745, 2147483648
        %v2747 = vmul.f32 %v2746, 1.442695
        %v2748 = vpow.pop %v2747
        %v2749 = vadd.f32 %v2748, 1.0
        %v2750 = vrcp.pop %v2749
        %v2751 = vmul.f32 %v2749, %v2750
        %v2752 = vsub.f32 1.0, %v2751
        %v2753 = vmul.f32 %v2750, %v2752
        %v2754 = vadd.f32 %v2750, %v2753
        %vm2755 = vweird.f32 %v2749
        %vm2756 = vweird.f32 %v2750
        %vm2757 = vmor %vm2755, %vm2756
        %v2758 = vsel %vm2757, %v2750, %v2754
        %v2759 = vand.u32 2147483647, %v2749
        %vm2760 = vcmp.eq.f32.partialorder %v2759, 8.507059e+37
        %v2761 = vand.u32 %v2749, 2147483648
        %v2762 = vor.u32 1.1754944e-38, %v2761
        %v2763 = vsel %vm2760, %v2762, %v2758
        %v2764 = vmul.f32 1.0, %v2763
        %v2765 = vadd.f32 %v2683, %v2723
        %v2766 = vxor.u32 %v2765, 2147483648
        %v2767 = vmul.f32 %v2766, 1.442695
        %v2768 = vpow.pop %v2767
        %v2769 = vadd.f32 %v2768, 1.0
        %v2770 = vrcp.pop %v2769
        %v2771 = vmul.f32 %v2769, %v2770
        %v2772 = vsub.f32 1.0, %v2771
        %v2773 = vmul.f32 %v2770, %v2772
        %v2774 = vadd.f32 %v2770, %v2773
        %vm2775 = vweird.f32 %v2769
        %vm2776 = vweird.f32 %v2770
        %vm2777 = vmor %vm2775, %vm2776
        %v2778 = vsel %vm2777, %v2770, %v2774
        %v2779 = vand.u32 2147483647, %v2769
        %vm2780 = vcmp.eq.f32.partialorder %v2779, 8.507059e+37
        %v2781 = vand.u32 %v2769, 2147483648
        %v2782 = vor.u32 1.1754944e-38, %v2781
        %v2783 = vsel %vm2780, %v2782, %v2778
        %v2784 = vmul.f32 1.0, %v2783
        %v2785 = vmul.f32 %v2764, %v2743
        %v2786 = vadd.f32 %v2684, %v2785
        %v2787 = vtanh.pop %v2786
        %v2788 = vsub.f32 %v2637, %v2787
        %v2789 = vmul.f32 %v2784, %v2788
        %v2790 = vadd.f32 %v2787, %v2789
        %2791 = vmatpush.msra.mxu0 %v525
        %2792 = vmatpush.msra.mxu0 %v523
        %2793 = vmatpush.msra.mxu0 %v521
        %2794 = vmatpush.msra.mxu0 %v519
        %2795 = vmatpush.msra.mxu0 %v517
        %2796 = vmatpush.msra.mxu0 %v515
        %2797 = vmatpush.msra.mxu0 %v513
        %2798 = vmatpush.msra.mxu0 %v511
        %2799 = vmatpush.msra.mxu0 %v509
        %2800 = vmatpush.msra.mxu0 %v507
        %2801 = vmatpush.msra.mxu0 %v505
        %2802 = vmatpush.msra.mxu0 %v503
        %2803 = vmatpush.msra.mxu0 %v501
        %2804 = vmatpush.msra.mxu0 %v499
        %2805 = vmatpush.msra.mxu0 %v497
        %2806 = vmatpush.msra.mxu0 %v495
        %2807 = vmatmul.f32.gmra.mxu0 %v2790
        %v2808 = vpop.f32.mrf.mxu0
        %v2809 = vadd.f32 %v646, %v2808
        %2810 = vdwg.mxu0
        %2811 = vmatpush.msra.mxu0 %v526
        %2812 = vmatpush.msra.mxu0 %v524
        %2813 = vmatpush.msra.mxu0 %v522
        %2814 = vmatpush.msra.mxu0 %v520
        %2815 = vmatpush.msra.mxu0 %v518
        %2816 = vmatpush.msra.mxu0 %v516
        %2817 = vmatpush.msra.mxu0 %v514
        %2818 = vmatpush.msra.mxu0 %v512
        %2819 = vmatpush.msra.mxu0 %v510
        %2820 = vmatpush.msra.mxu0 %v508
        %2821 = vmatpush.msra.mxu0 %v506
        %2822 = vmatpush.msra.mxu0 %v504
        %2823 = vmatpush.msra.mxu0 %v502
        %2824 = vmatpush.msra.mxu0 %v500
        %2825 = vmatpush.msra.mxu0 %v498
        %2826 = vmatpush.msra.mxu0 %v496
        %2827 = vmatmul.f32.gmra.mxu0 %v2790
        %v2828 = vpop.f32.mrf.mxu0
        %v2829 = vadd.f32 %v647, %v2828
        %2830 = vdwg.mxu0
        %s2831 = scalar_lea.vmem %s426, 224 [#allocation4]
        %2832 = vst [vmem:[%s2831] sm:$0xff] %v2809
        %2833 = vst [vmem:[%s2831 + $0x8] sm:$0xff] %v2829
        %s2834 = scalar_lea.vmem %s396, 360 [#allocation3]
        %v2835 = vld [vmem:[%s2834] sm:$0xff]
        %v2836 = vld [vmem:[%s2834 + $0x8] sm:$0xff]
        %v2837 = vld [vmem:[%s2834 + $0x10] sm:$0xff]
        %2838 = vmatpush.msra.mxu0 %v491
        %2839 = vmatpush.msra.mxu0 %v488
        %2840 = vmatpush.msra.mxu0 %v485
        %2841 = vmatpush.msra.mxu0 %v482
        %2842 = vmatpush.msra.mxu0 %v479
        %2843 = vmatpush.msra.mxu0 %v476
        %2844 = vmatpush.msra.mxu0 %v473
        %2845 = vmatpush.msra.mxu0 %v470
        %2846 = vmatpush.msra.mxu0 %v467
        %2847 = vmatpush.msra.mxu0 %v464
        %2848 = vmatpush.msra.mxu0 %v461
        %2849 = vmatpush.msra.mxu0 %v458
        %2850 = vmatpush.msra.mxu0 %v455
        %2851 = vmatpush.msra.mxu0 %v452
        %2852 = vmatpush.msra.mxu0 %v449
        %2853 = vmatpush.msra.mxu0 %v446
        %2854 = vmatmul.f32.gmra.mxu0 %v2790
        %v2855 = vpop.f32.mrf.mxu0
        %v2856 = vadd.f32 %v533, %v2855
        %2857 = vdwg.mxu0
        %2858 = vmatpush.msra.mxu0 %v492
        %2859 = vmatpush.msra.mxu0 %v489
        %2860 = vmatpush.msra.mxu0 %v486
        %2861 = vmatpush.msra.mxu0 %v483
        %2862 = vmatpush.msra.mxu0 %v480
        %2863 = vmatpush.msra.mxu0 %v477
        %2864 = vmatpush.msra.mxu0 %v474
        %2865 = vmatpush.msra.mxu0 %v471
        %2866 = vmatpush.msra.mxu0 %v468
        %2867 = vmatpush.msra.mxu0 %v465
        %2868 = vmatpush.msra.mxu0 %v462
        %2869 = vmatpush.msra.mxu0 %v459
        %2870 = vmatpush.msra.mxu0 %v456
        %2871 = vmatpush.msra.mxu0 %v453
        %2872 = vmatpush.msra.mxu0 %v450
        %2873 = vmatpush.msra.mxu0 %v447
        %2874 = vmatmul.f32.gmra.mxu0 %v2790
        %v2875 = vpop.f32.mrf.mxu0
        %v2876 = vadd.f32 %v534, %v2875
        %2877 = vdwg.mxu0
        %2878 = vmatpush.msra.mxu0 %v493
        %2879 = vmatpush.msra.mxu0 %v490
        %2880 = vmatpush.msra.mxu0 %v487
        %2881 = vmatpush.msra.mxu0 %v484
        %2882 = vmatpush.msra.mxu0 %v481
        %2883 = vmatpush.msra.mxu0 %v478
        %2884 = vmatpush.msra.mxu0 %v475
        %2885 = vmatpush.msra.mxu0 %v472
        %2886 = vmatpush.msra.mxu0 %v469
        %2887 = vmatpush.msra.mxu0 %v466
        %2888 = vmatpush.msra.mxu0 %v463
        %2889 = vmatpush.msra.mxu0 %v460
        %2890 = vmatpush.msra.mxu0 %v457
        %2891 = vmatpush.msra.mxu0 %v454
        %2892 = vmatpush.msra.mxu0 %v451
        %2893 = vmatpush.msra.mxu0 %v448
        %2894 = vmatmul.f32.gmra.mxu0 %v2790
        %v2895 = vpop.f32.mrf.mxu0
        %v2896 = vadd.f32 %v535, %v2895
        %2897 = vdwg.mxu0
        %v2898 = vadd.f32 %v2835, %v2856
        %v2899 = vxor.u32 %v2898, 2147483648
        %v2900 = vmul.f32 %v2899, 1.442695
        %v2901 = vpow.pop %v2900
        %v2902 = vadd.f32 %v2901, 1.0
        %v2903 = vrcp.pop %v2902
        %v2904 = vmul.f32 %v2902, %v2903
        %v2905 = vsub.f32 1.0, %v2904
        %v2906 = vmul.f32 %v2903, %v2905
        %v2907 = vadd.f32 %v2903, %v2906
        %vm2908 = vweird.f32 %v2902
        %vm2909 = vweird.f32 %v2903
        %vm2910 = vmor %vm2908, %vm2909
        %v2911 = vsel %vm2910, %v2903, %v2907
        %v2912 = vand.u32 2147483647, %v2902
        %vm2913 = vcmp.eq.f32.partialorder %v2912, 8.507059e+37
        %v2914 = vand.u32 %v2902, 2147483648
        %v2915 = vor.u32 1.1754944e-38, %v2914
        %v2916 = vsel %vm2913, %v2915, %v2911
        %v2917 = vmul.f32 1.0, %v2916
        %v2918 = vadd.f32 %v2836, %v2876
        %v2919 = vxor.u32 %v2918, 2147483648
        %v2920 = vmul.f32 %v2919, 1.442695
        %v2921 = vpow.pop %v2920
        %v2922 = vadd.f32 %v2921, 1.0
        %v2923 = vrcp.pop %v2922
        %v2924 = vmul.f32 %v2922, %v2923
        %v2925 = vsub.f32 1.0, %v2924
        %v2926 = vmul.f32 %v2923, %v2925
        %v2927 = vadd.f32 %v2923, %v2926
        %vm2928 = vweird.f32 %v2922
        %vm2929 = vweird.f32 %v2923
        %vm2930 = vmor %vm2928, %vm2929
        %v2931 = vsel %vm2930, %v2923, %v2927
        %v2932 = vand.u32 2147483647, %v2922
        %vm2933 = vcmp.eq.f32.partialorder %v2932, 8.507059e+37
        %v2934 = vand.u32 %v2922, 2147483648
        %v2935 = vor.u32 1.1754944e-38, %v2934
        %v2936 = vsel %vm2933, %v2935, %v2931
        %v2937 = vmul.f32 1.0, %v2936
        %v2938 = vmul.f32 %v2917, %v2896
        %v2939 = vadd.f32 %v2837, %v2938
        %v2940 = vtanh.pop %v2939
        %v2941 = vsub.f32 %v2790, %v2940
        %v2942 = vmul.f32 %v2937, %v2941
        %v2943 = vadd.f32 %v2940, %v2942
        %2944 = vmatpush.msra.mxu0 %v525
        %2945 = vmatpush.msra.mxu0 %v523
        %2946 = vmatpush.msra.mxu0 %v521
        %2947 = vmatpush.msra.mxu0 %v519
        %2948 = vmatpush.msra.mxu0 %v517
        %2949 = vmatpush.msra.mxu0 %v515
        %2950 = vmatpush.msra.mxu0 %v513
        %2951 = vmatpush.msra.mxu0 %v511
        %2952 = vmatpush.msra.mxu0 %v509
        %2953 = vmatpush.msra.mxu0 %v507
        %2954 = vmatpush.msra.mxu0 %v505
        %2955 = vmatpush.msra.mxu0 %v503
        %2956 = vmatpush.msra.mxu0 %v501
        %2957 = vmatpush.msra.mxu0 %v499
        %2958 = vmatpush.msra.mxu0 %v497
        %2959 = vmatpush.msra.mxu0 %v495
        %2960 = vmatmul.f32.gmra.mxu0 %v2943
        %v2961 = vpop.f32.mrf.mxu0
        %v2962 = vadd.f32 %v646, %v2961
        %2963 = vdwg.mxu0
        %2964 = vmatpush.msra.mxu0 %v526
        %2965 = vmatpush.msra.mxu0 %v524
        %2966 = vmatpush.msra.mxu0 %v522
        %2967 = vmatpush.msra.mxu0 %v520
        %2968 = vmatpush.msra.mxu0 %v518
        %2969 = vmatpush.msra.mxu0 %v516
        %2970 = vmatpush.msra.mxu0 %v514
        %2971 = vmatpush.msra.mxu0 %v512
        %2972 = vmatpush.msra.mxu0 %v510
        %2973 = vmatpush.msra.mxu0 %v508
        %2974 = vmatpush.msra.mxu0 %v506
        %2975 = vmatpush.msra.mxu0 %v504
        %2976 = vmatpush.msra.mxu0 %v502
        %2977 = vmatpush.msra.mxu0 %v500
        %2978 = vmatpush.msra.mxu0 %v498
        %2979 = vmatpush.msra.mxu0 %v496
        %2980 = vmatmul.f32.gmra.mxu0 %v2943
        %v2981 = vpop.f32.mrf.mxu0
        %v2982 = vadd.f32 %v647, %v2981
        %2983 = vdwg.mxu0
        %s2984 = scalar_lea.vmem %s426, 240 [#allocation4]
        %2985 = vst [vmem:[%s2984] sm:$0xff] %v2962
        %2986 = vst [vmem:[%s2984 + $0x8] sm:$0xff] %v2982
        %2987 = vst [vmem:[#allocation2] sm:$0xff] %v2943
        // Predicated region
        $region72: #{_lambda_.1} parent=62 // pred_check
          %p2988 = pneg %p440
        $region73: #{_lambda_.1} parent=62 // pred_check_branch
          %2990 = sbr.rel (%p2988) target = $region75
        $region74: #{_lambda_.1} parent=62 // pred_region
          %2991 = vst [vmem:[%s433] sm:$0xff] %v2943
        $region75: #{_lambda_.1} parent=62 // pred_fallthru
          _
        %s2992 = sand.u32 %s185, 1
        %s2993 = scalar_lea.sflag [#allocation5], %s2992
        %s2994 = sand.u32 %s185, 1
        %s2995 = smul.addr %s2994, 256
        %s2996 = scalar_lea.vmem [#allocation4], %s2995
        %s2997 = sand.u32 %s211, 1
        %s2998 = scalar_lea.sflag [#allocation7], %s2997
        %s2999 = sand.u32 %s211, 1
        %s3000 = smul.addr %s2999, 8
        %s3001 = scalar_lea.vmem [#allocation6], %s3000
        // Predicated region
        $region76: #{_lambda_.1} parent=62 // pred_check
          %p3002 = pneg %p195
        $region77: #{_lambda_.1} parent=62 // pred_check_branch
          %3004 = sbr.rel (%p3002) target = $region79
        $region78: #{_lambda_.1} parent=62 // pred_region
          %s3005 = smul.u32 16, %s30
          %3007 = vsyncadd %s2993, 0
          %s3008 = smul.addr %s29, 2
          %s3009 = smul.addr %s3005, 4
          %s3010 = sadd.s32 %s3008, %s3009
          %s3011 = smul.addr %s3010, 8
          %s3012 = scalar_lea.hbm %s6, %s3011
          %s3013 = sshll.u32 %s2996, 4
          %s3014 = int_to_ptr.vmem [resolvable:$true] %s3013
          %s3015 = sshll.u32 %s3012, 4
          %s3016 = int_to_ptr.hbm [resolvable:$true] %s3015
          %3021 = dma.vmem_to_hbm [thread:$0]  %s3014, 4096, %s3016, %s2993, 256, 512, 16
        $region79: #{_lambda_.1} parent=62 // pred_fallthru
          _
        // Predicated region
        $region80: #{_lambda_.1} parent=62 // pred_check
          %p3022 = pneg %p221
        $region81: #{_lambda_.1} parent=62 // pred_check_branch
          %3024 = sbr.rel (%p3022) target = $region83
        $region82: #{_lambda_.1} parent=62 // pred_region
          %3026 = vsyncadd %s2998, 0
          %s3027 = smul.addr %s29, 8
          %s3028 = scalar_lea.hbm %s7, %s3027
          %s3030 = sshll.u32 %s3001, 4
          %s3031 = int_to_ptr.vmem [resolvable:$true] %s3030
          %s3032 = sshll.u32 %s3028, 4
          %s3033 = int_to_ptr.hbm [resolvable:$true] %s3032
          %3035 = dma.vmem_to_hbm [thread:$0]  %s3031, 128, %s3033, %s2998
        $region83: #{_lambda_.1} parent=62 // pred_fallthru
          _
      $region63: #{_lambda_.1} parent=5 // pred_fallthru
        _
      %p3036 = scmp.le.s32.totalorder 2, %s20
      // Predicated region
      $region84: #{_lambda_.1} parent=5 // pred_check
        %p3037 = pneg %p3036
      $region85: #{_lambda_.1} parent=5 // pred_check_branch
        %3039 = sbr.rel (%p3037) target = $region87
      $region86: #{_lambda_.1} parent=5 // pred_region
        %s3040 = ssub.s32 %s20, 2
        // Predicated region
        $region88: #{_lambda_.1} parent=86 // pred_check
          %p3041 = pneg %p201
        $region89: #{_lambda_.1} parent=86 // pred_check_branch
          %3043 = sbr.rel (%p3041) target = $region91
        $region90: #{_lambda_.1} parent=86 // pred_region
          %s3044 = sand.u32 %s186, 1
          %s3045 = scalar_lea.sflag [#allocation5], %s3044
          %s3046 = sand.u32 %s186, 1
          %s3047 = smul.addr %s3046, 256
          %s3048 = scalar_lea.vmem [#allocation4], %s3047
          %3050 = dma.done %s3045, 4096
        $region91: #{_lambda_.1} parent=86 // pred_fallthru
          _
        // Predicated region
        $region92: #{_lambda_.1} parent=86 // pred_check
          %p3051 = pneg %p227
        $region93: #{_lambda_.1} parent=86 // pred_check_branch
          %3053 = sbr.rel (%p3051) target = $region95
        $region94: #{_lambda_.1} parent=86 // pred_region
          %s3054 = sand.u32 %s212, 1
          %s3055 = scalar_lea.sflag [#allocation7], %s3054
          %s3056 = sand.u32 %s212, 1
          %s3057 = smul.addr %s3056, 8
          %s3058 = scalar_lea.vmem [#allocation6], %s3057
          %3060 = dma.done %s3055, 128
        $region95: #{_lambda_.1} parent=86 // pred_fallthru
          _
      $region87: #{_lambda_.1} parent=5 // pred_fallthru
        _
    $region6: #{_lambda_.1} parent=1 // loop_footer
      %s24 = sadd.s32 1, %s20
    $region7: #{_lambda_.1} parent=1 // loop_footer_branch
      %19 = sbr.rel target = $region3
    $region8: #{_lambda_.1} parent=1 // loop_exit
      _
    %3061 = vsyncpa [#allocation5], 1
    %s3062 = scalar_lea.sflag [#allocation5], 1
    %3063 = vsyncpa %s3062, 1
    %3064 = vsyncpa [#allocation7], 1
    %s3065 = scalar_lea.sflag [#allocation7], 1
    %3066 = vsyncpa %s3065, 1

</llo_original>
